<compile_context>
chip_gen: v6e
topology: v6e:2x2x1
jax: 0.10.0
libtpu: 0.0.40
codegen_flags: <defaults>
</compile_context>

<pallas_src>
from functools import partial

import jax
import jax.numpy as jnp
from jax.experimental import pallas as pl
from jax.experimental.pallas import tpu as pltpu


# --------------------------------------------------------------------------- #
# Kernel
# --------------------------------------------------------------------------- #
def _nonlocal_kernel(xo_ref, xt_ref, wq_ref, bq_ref, wkv_ref, bkv_ref,
                     hmask_ref, gather_ref, scatter_ref, wz_ref, bz_ref,
                     z_ref, *attn_refs,
                     batch_tile, num_heads, seq_len, inter_channels,
                     approx_recip, compute_dtype):
    n = seq_len                      # tokens per image (H*W)
    ci = inter_channels              # Ci = num_heads * head_dim

    xo = xo_ref[...]                 # (Bt*N, C)  queries' source (other branch)
    xt = xt_ref[...]                 # (Bt*N, C)  keys/values' source (this branch)

    # Projections as two full-M matmuls (f32 accumulation).  The 1/sqrt(d)
    # score scale is folded into Wq / bq; k and v come out of one fused matmul.
    q_all = jnp.dot(xo, wq_ref[...],
                    preferred_element_type=jnp.float32) + bq_ref[...]      # (Bt*N, Ci)
    kv_all = jnp.dot(xt, wkv_ref[...],
                     preferred_element_type=jnp.float32) + bkv_ref[...]    # (Bt*N, 2Ci)

    hmask = hmask_ref[...]           # (nh*N, Ci)  0/1 block-diag head mask
    gather = gather_ref[...]         # (nh*N, nh)  0/1, per-head column sums
    scatter = scatter_ref[...]       # (nh, nh*N)  0/1, broadcast back to wide
    nt_dims = (((1,), (1,)), ((), ()))   # contract channel dim of both (NT matmul)

    ctx_tiles = []
    for b in range(batch_tile):      # static unroll: attention is per-image
        r0, r1 = b * n, (b + 1) * n
        q = q_all[r0:r1, :].astype(compute_dtype)                          # (N, Ci)
        k = kv_all[r0:r1, :ci].astype(compute_dtype)                       # (N, Ci)
        v = kv_all[r0:r1, ci:].astype(compute_dtype)                       # (N, Ci)

        # Block-diagonal per-head expansion (replicate + mask).  The same mask
        # serves both K (scores) and V (context); no transpose is needed.
        k_bd = jnp.concatenate([k] * num_heads, axis=0) * hmask            # (nh*N, Ci)
        v_bd = jnp.concatenate([v] * num_heads, axis=0) * hmask            # (nh*N, Ci)

        # Scores of ALL heads from one matmul, lane-dense (N, nh*N).
        s = jax.lax.dot_general(q, k_bd, nt_dims,
                                preferred_element_type=jnp.float32)

        # Segmented (per-head) softmax.  Per-head max for numerical robustness;
        # per-head sums / broadcasts use 0/1 indicator matmuls (MXU slot), the
        # divide uses pl.reciprocal (EUP slot, off the VPU).
        m_wide = jnp.concatenate(
            [jnp.broadcast_to(
                jnp.max(s[:, h * n:(h + 1) * n], axis=-1, keepdims=True),
                (n, n))
             for h in range(num_heads)], axis=-1)                          # (N, nh*N)
        e = jnp.exp(s - m_wide)
        denom = jnp.dot(e, gather, preferred_element_type=jnp.float32)     # (N, nh)
        rinv = pl.reciprocal(denom, approx=approx_recip)
        p = e * jnp.dot(rinv, scatter, preferred_element_type=jnp.float32) # (N, nh*N)

        if attn_refs:                # lane-dense store; wrapper handles layout
            attn_refs[0][r0:r1, :] = p.astype(attn_refs[0].dtype)

        # Context of ALL heads from one matmul.
        ctx_tiles.append(jnp.dot(p.astype(compute_dtype), v_bd,
                                 preferred_element_type=jnp.float32))      # (N, Ci)

    ctx = ctx_tiles[0] if batch_tile == 1 else jnp.concatenate(ctx_tiles, axis=0)

    # W_z 1x1 conv with eval-mode BatchNorm folded in (scale in wz, shift bias),
    # one matmul over all Bt*N tokens.
    z = jnp.dot(ctx.astype(compute_dtype), wz_ref[...],
                preferred_element_type=jnp.float32) + bz_ref[...]          # (Bt*N, C)
    z_ref[...] = z.astype(z_ref.dtype)


# --------------------------------------------------------------------------- #
# Wrapper
# --------------------------------------------------------------------------- #
def _auto_batch_tile(B, N):
    divs = [d for d in range(1, B + 1) if B % d == 0]
    # Largest batch tile with a modest (<= ~512 row) token block per grid step.
    bt = max(d for d in divs if d * N <= max(512, N))
    # v7x dual-TC: prefer >= 2 parallel grid steps if each keeps >= 128 rows.
    for d in sorted(divs, reverse=True):
        if d <= bt and B // d >= 2 and d * N >= 128:
            return d
    return bt


def _const_spec(arr):
    return pl.BlockSpec(arr.shape, lambda i: (0,) * arr.ndim)


def prepare_params(params, *, num_heads, seq_len, compute_dtype=jnp.float32,
                   eps=1e-5):
    """One-time weight prep: pre-transpose, fold 1/sqrt(d) into Wq/bq, fold
    eval-mode BatchNorm into Wz, and build the constant 0/1 structure matrices
    used by the block-diagonal per-head matmuls and the segmented softmax."""
    Ci, C = params["wq"].shape
    d = Ci // num_heads
    scale = 1.0 / (d ** 0.5)
    bn_scale = params["gamma"] * jax.lax.rsqrt(params["rvar"] + eps)       # (1, C)

    N = seq_len
    head_of_row = jnp.repeat(jnp.arange(num_heads), N)                     # (nh*N,)
    chan_head = jnp.arange(Ci) // d                                        # (Ci,)
    gather = (head_of_row[:, None]
              == jnp.arange(num_heads)[None, :]).astype(jnp.float32)       # (nh*N, nh)

    return {
        "wq": (params["wq"].T * scale).astype(compute_dtype),              # (C, Ci)
        "bq": (params["bq"] * scale).astype(jnp.float32),                  # (1, Ci)
        "wkv": jnp.concatenate([params["wk"].T, params["wv"].T],
                               axis=1).astype(compute_dtype),              # (C, 2Ci)
        "bkv": jnp.concatenate([params["bk"], params["bv"]],
                               axis=1).astype(jnp.float32),                # (1, 2Ci)
        "wz": (params["wz"].T * bn_scale).astype(compute_dtype),           # (Ci, C)
        "bz": (params["beta"] - params["rmean"] * bn_scale).astype(jnp.float32),
        "hmask": (head_of_row[:, None]
                  == chan_head[None, :]).astype(compute_dtype),            # (nh*N, Ci)
        "gather": gather,                                                  # (nh*N, nh)
        "scatter": gather.T,                                               # (nh, nh*N)
    }


def nonlocal_block(x_this, x_other, prep, *, num_heads,
                   compute_dtype=jnp.float32, approx_recip=True,
                   return_attn=True, attn_dtype=jnp.float32,
                   attn_layout="bhnm", batch_tile=None):
    """Forward pass of NonLocalBlock: returns (z, attention_weights) like the
    PyTorch module, or just z when return_attn=False."""
    B, C, H, W = x_this.shape
    N = H * W
    Ci = prep["wz"].shape[0]
    assert Ci % num_heads == 0

    if batch_tile is None:
        batch_tile = _auto_batch_tile(B, N)
    assert B % batch_tile == 0
    steps = B // batch_tile
    rows = batch_tile * N

    # NCHW -> (B*N, C) channels-last tokens (XLA fuses the cast into the copy).
    def tokens(x):
        return (x.reshape(B, C, N).transpose(0, 2, 1)
                 .reshape(B * N, C).astype(compute_dtype))

    xo = tokens(x_other)       # queries come from the *other* branch
    xt = tokens(x_this)        # keys / values from *this* branch

    kernel = partial(_nonlocal_kernel, batch_tile=batch_tile,
                     num_heads=num_heads, seq_len=N, inter_channels=Ci,
                     approx_recip=approx_recip, compute_dtype=compute_dtype)

    operands = (xo, xt, prep["wq"], prep["bq"], prep["wkv"], prep["bkv"],
                prep["hmask"], prep["gather"], prep["scatter"],
                prep["wz"], prep["bz"])
    tok_spec = pl.BlockSpec((rows, C), lambda i: (i, 0))
    in_specs = [tok_spec, tok_spec] + [_const_spec(a) for a in operands[2:]]
    z_spec = pl.BlockSpec((rows, C), lambda i: (i, 0))
    z_shape = jax.ShapeDtypeStruct((B * N, C), jnp.float32)
    compiler_params = pltpu.CompilerParams(dimension_semantics=("parallel",))

    if return_attn:
        attn_spec = pl.BlockSpec((rows, num_heads * N), lambda i: (i, 0))
        attn_shape = jax.ShapeDtypeStruct((B * N, num_heads * N), attn_dtype)
        z_flat, attn_flat = pl.pallas_call(
            kernel, out_shape=(z_shape, attn_shape), grid=(steps,),
            in_specs=in_specs, out_specs=(z_spec, attn_spec),
            compiler_params=compiler_params)(*operands)
    else:
        z_flat = pl.pallas_call(
            kernel, out_shape=z_shape, grid=(steps,),
            in_specs=in_specs, out_specs=z_spec,
            compiler_params=compiler_params)(*operands)

    z = z_flat.reshape(B, N, C).transpose(0, 2, 1).reshape(B, C, H, W)
    if not return_attn:
        return z
    attn = attn_flat.reshape(B, N, num_heads, N)
    if attn_layout == "bhnm":          # PyTorch layout (B, nh, N, N)
        attn = attn.transpose(0, 2, 1, 3)
    return z, attn


# --------------------------------------------------------------------------- #
# Pure-JAX reference and parameter init (for validation)
# --------------------------------------------------------------------------- #
def reference(x_this, x_other, p, *, num_heads, eps=1e-5):
    B, C, H, W = x_this.shape
    N = H * W
    Ci = p["wq"].shape[0]
    d = Ci // num_heads
    hp = jax.lax.Precision.HIGHEST

    def proj(x, w, b):
        return jnp.einsum("bchw,oc->bohw", x, w, precision=hp) + b.reshape(1, -1, 1, 1)

    q = proj(x_other, p["wq"], p["bq"][0])
    k = proj(x_this, p["wk"], p["bk"][0])
    v = proj(x_this, p["wv"], p["bv"][0])

    def heads(t):  # (B, Ci, H, W) -> (B, nh, N, d)
        return t.reshape(B, num_heads, d, N).transpose(0, 1, 3, 2)

    q, k, v = heads(q), heads(k), heads(v)
    scores = jnp.einsum("bhnd,bhmd->bhnm", q, k, precision=hp) / (d ** 0.5)
    attn = jax.nn.softmax(scores, axis=-1)
    out = jnp.einsum("bhnm,bhmd->bhnd", attn, v, precision=hp)
    out = out.transpose(0, 1, 3, 2).reshape(B, Ci, H, W)
    z = jnp.einsum("bchw,oc->bohw", out, p["wz"], precision=hp)
    inv = jax.lax.rsqrt(p["rvar"][0] + eps).reshape(1, -1, 1, 1)
    z = (z - p["rmean"][0].reshape(1, -1, 1, 1)) * inv \
        * p["gamma"][0].reshape(1, -1, 1, 1) + p["beta"][0].reshape(1, -1, 1, 1)
    return z, attn


def init_params(key, in_channels, inter_channels):
    ks = jax.random.split(key, 7)
    s_in = 1.0 / (in_channels ** 0.5)
    s_int = 1.0 / (inter_channels ** 0.5)
    return {
        "wq": jax.random.uniform(ks[0], (inter_channels, in_channels), jnp.float32, -s_in, s_in),
        "bq": jax.random.uniform(ks[1], (1, inter_channels), jnp.float32, -s_in, s_in),
        "wk": jax.random.uniform(ks[2], (inter_channels, in_channels), jnp.float32, -s_in, s_in),
        "bk": jax.random.uniform(ks[3], (1, inter_channels), jnp.float32, -s_in, s_in),
        "wv": jax.random.uniform(ks[4], (inter_channels, in_channels), jnp.float32, -s_in, s_in),
        "bv": jax.random.uniform(ks[5], (1, inter_channels), jnp.float32, -s_in, s_in),
        "wz": jax.random.uniform(ks[6], (in_channels, inter_channels), jnp.float32, -s_int, s_int),
        # Module __init__: BN gamma = 0, beta = 0, running stats 0/1.
        "gamma": jnp.zeros((1, in_channels), jnp.float32),
        "beta": jnp.zeros((1, in_channels), jnp.float32),
        "rmean": jnp.zeros((1, in_channels), jnp.float32),
        "rvar": jnp.ones((1, in_channels), jnp.float32),
    }


if __name__ == "__main__":
    B, C, H, W = 2, 64, 8, 8          # in_channels=64
    num_heads = 8
    inter_channels = C // 2           # 32 -> head_dim = 4
    N = H * W

    key = jax.random.PRNGKey(0)
    kx, ko, kp, kb = jax.random.split(key, 4)
    x_this = jax.random.normal(kx, (B, C, H, W), jnp.float32)
    x_other = jax.random.normal(ko, (B, C, H, W), jnp.float32)
    params = init_params(kp, C, inter_channels)

    # The module init sets BN gamma=beta=0, which makes z identically zero; use
    # non-trivial BN parameters so the W_z + BatchNorm path is actually checked.
    kb1, kb2, kb3, kb4 = jax.random.split(kb, 4)
    params["gamma"] = 1.0 + 0.5 * jax.random.normal(kb1, (1, C), jnp.float32)
    params["beta"] = 0.1 * jax.random.normal(kb2, (1, C), jnp.float32)
    params["rmean"] = 0.1 * jax.random.normal(kb3, (1, C), jnp.float32)
    params["rvar"] = jax.random.uniform(kb4, (1, C), jnp.float32, 0.5, 1.5)

    z_want, attn_want = reference(x_this, x_other, params, num_heads=num_heads)

    # 1) exact config: f32 MXU operands, exact reciprocal.
    prep32 = prepare_params(params, num_heads=num_heads, seq_len=N,
                            compute_dtype=jnp.float32)
    z, attn = nonlocal_block(x_this, x_other, prep32, num_heads=num_heads,
                             compute_dtype=jnp.float32, approx_recip=False)
    z, attn = jax.block_until_ready((z, attn))
    assert z.shape == (B, C, H, W)
    assert attn.shape == (B, num_heads, N, N)
    assert jnp.allclose(z, z_want, atol=2e-3, rtol=2e-3)
    assert jnp.allclose(attn, attn_want, atol=2e-3, rtol=2e-3)

    # 2) perf config (all generations): bf16 MXU operands (f32 accumulation,
    #    f32 softmax math), EUP approximate reciprocal, bf16 attention output.
    prep16 = prepare_params(params, num_heads=num_heads, seq_len=N,
                            compute_dtype=jnp.bfloat16)
    z16, attn16 = nonlocal_block(x_this, x_other, prep16, num_heads=num_heads,
                                 compute_dtype=jnp.bfloat16, approx_recip=True,
                                 attn_dtype=jnp.bfloat16)
    z16, attn16 = jax.block_until_ready((z16, attn16))
    assert jnp.allclose(z16, z_want, atol=5e-2, rtol=5e-2)
    assert jnp.allclose(attn16.astype(jnp.float32), attn_want, atol=5e-2, rtol=5e-2)

    # 3) attention map not needed: drop the O(N^2) output entirely.
    z_only = nonlocal_block(x_this, x_other, prep16, num_heads=num_heads,
                            compute_dtype=jnp.bfloat16, return_attn=False)
    z_only = jax.block_until_ready(z_only)
    assert jnp.allclose(z_only, z_want, atol=5e-2, rtol=5e-2)

    print("KERNEL_OK")
</pallas_src>

<mosaic_0001>
module attributes {stable_mosaic.version = 11 : i64} {
  func.func @_nonlocal_kernel(%arg0: i32, %arg1: memref<128x64xf32, #tpu.memory_space<vmem>>, %arg2: memref<128x64xf32, #tpu.memory_space<vmem>>, %arg3: memref<64x32xf32, #tpu.memory_space<vmem>>, %arg4: memref<1x32xf32, #tpu.memory_space<vmem>>, %arg5: memref<64x64xf32, #tpu.memory_space<vmem>>, %arg6: memref<1x64xf32, #tpu.memory_space<vmem>>, %arg7: memref<512x32xf32, #tpu.memory_space<vmem>>, %arg8: memref<512x8xf32, #tpu.memory_space<vmem>>, %arg9: memref<8x512xf32, #tpu.memory_space<vmem>>, %arg10: memref<32x64xf32, #tpu.memory_space<vmem>>, %arg11: memref<1x64xf32, #tpu.memory_space<vmem>>, %arg12: memref<128x64xf32, #tpu.memory_space<vmem>>, %arg13: memref<128x512xf32, #tpu.memory_space<vmem>>) attributes {dimension_semantics = [#tpu.dimension_semantics<parallel>], iteration_bounds = array<i64: 1>, scalar_prefetch = 0 : i64, scratch_operands = 0 : i64, tpu.core_type = #tpu.core_type<tc>, window_params = [{transform_indices = @transform_0, window_bounds = array<i64: 128, 64>}, {transform_indices = @transform_1, window_bounds = array<i64: 128, 64>}, {pipeline_mode = #tpu.pipeline_mode<synchronous>, transform_indices = @transform_2, window_bounds = array<i64: 64, 32>}, {pipeline_mode = #tpu.pipeline_mode<synchronous>, transform_indices = @transform_3, window_bounds = array<i64: 1, 32>}, {pipeline_mode = #tpu.pipeline_mode<synchronous>, transform_indices = @transform_4, window_bounds = array<i64: 64, 64>}, {pipeline_mode = #tpu.pipeline_mode<synchronous>, transform_indices = @transform_5, window_bounds = array<i64: 1, 64>}, {pipeline_mode = #tpu.pipeline_mode<synchronous>, transform_indices = @transform_6, window_bounds = array<i64: 512, 32>}, {pipeline_mode = #tpu.pipeline_mode<synchronous>, transform_indices = @transform_7, window_bounds = array<i64: 512, 8>}, {pipeline_mode = #tpu.pipeline_mode<synchronous>, transform_indices = @transform_8, window_bounds = array<i64: 8, 512>}, {pipeline_mode = #tpu.pipeline_mode<synchronous>, transform_indices = @transform_9, window_bounds = array<i64: 32, 64>}, {pipeline_mode = #tpu.pipeline_mode<synchronous>, transform_indices = @transform_10, window_bounds = array<i64: 1, 64>}, {transform_indices = @transform_11, window_bounds = array<i64: 128, 64>}, {transform_indices = @transform_12, window_bounds = array<i64: 128, 512>}]} {
    %c0 = arith.constant 0 : index
    %c0_0 = arith.constant 0 : index
    %0 = vector.load %arg1[%c0, %c0_0] : memref<128x64xf32, #tpu.memory_space<vmem>>, vector<128x64xf32>
    %c0_1 = arith.constant 0 : index
    %c0_2 = arith.constant 0 : index
    %1 = vector.load %arg2[%c0_1, %c0_2] : memref<128x64xf32, #tpu.memory_space<vmem>>, vector<128x64xf32>
    %c0_3 = arith.constant 0 : index
    %c0_4 = arith.constant 0 : index
    %2 = vector.load %arg3[%c0_3, %c0_4] : memref<64x32xf32, #tpu.memory_space<vmem>>, vector<64x32xf32>
    %cst = arith.constant dense<0.000000e+00> : vector<128x32xf32>
    %3 = tpu.matmul %0, %2, %cst {dimension_numbers = #tpu.dot_dimension_numbers<[1], [0], [0], [1], [0, 0, 1, 1], [], []>} : vector<128x64xf32>, vector<64x32xf32>, vector<128x32xf32> -> vector<128x32xf32>
    %c0_5 = arith.constant 0 : index
    %c0_6 = arith.constant 0 : index
    %4 = vector.load %arg4[%c0_5, %c0_6] : memref<1x32xf32, #tpu.memory_space<vmem>>, vector<1x32xf32>
    %5 = vector.broadcast %4 : vector<1x32xf32> to vector<128x32xf32>
    %6 = arith.addf %3, %5 : vector<128x32xf32>
    %c0_7 = arith.constant 0 : index
    %c0_8 = arith.constant 0 : index
    %7 = vector.load %arg5[%c0_7, %c0_8] : memref<64x64xf32, #tpu.memory_space<vmem>>, vector<64x64xf32>
    %cst_9 = arith.constant dense<0.000000e+00> : vector<128x64xf32>
    %8 = tpu.matmul %1, %7, %cst_9 {dimension_numbers = #tpu.dot_dimension_numbers<[1], [0], [0], [1], [0, 0, 1, 1], [], []>} : vector<128x64xf32>, vector<64x64xf32>, vector<128x64xf32> -> vector<128x64xf32>
    %c0_10 = arith.constant 0 : index
    %c0_11 = arith.constant 0 : index
    %9 = vector.load %arg6[%c0_10, %c0_11] : memref<1x64xf32, #tpu.memory_space<vmem>>, vector<1x64xf32>
    %10 = vector.broadcast %9 : vector<1x64xf32> to vector<128x64xf32>
    %11 = arith.addf %8, %10 : vector<128x64xf32>
    %c0_12 = arith.constant 0 : index
    %c0_13 = arith.constant 0 : index
    %12 = vector.load %arg7[%c0_12, %c0_13] : memref<512x32xf32, #tpu.memory_space<vmem>>, vector<512x32xf32>
    %c0_14 = arith.constant 0 : index
    %c0_15 = arith.constant 0 : index
    %13 = vector.load %arg8[%c0_14, %c0_15] : memref<512x8xf32, #tpu.memory_space<vmem>>, vector<512x8xf32>
    %c0_16 = arith.constant 0 : index
    %c0_17 = arith.constant 0 : index
    %14 = vector.load %arg9[%c0_16, %c0_17] : memref<8x512xf32, #tpu.memory_space<vmem>>, vector<8x512xf32>
    %15 = vector.extract_strided_slice %6 {offsets = [0, 0], sizes = [64, 32], strides = [1, 1]} : vector<128x32xf32> to vector<64x32xf32>
    %16 = vector.extract_strided_slice %11 {offsets = [0, 0], sizes = [64, 32], strides = [1, 1]} : vector<128x64xf32> to vector<64x32xf32>
    %17 = vector.extract_strided_slice %11 {offsets = [0, 32], sizes = [64, 32], strides = [1, 1]} : vector<128x64xf32> to vector<64x32xf32>
    %18 = tpu.concatenate %16, %16, %16, %16, %16, %16, %16, %16 in 0 : vector<64x32xf32>, vector<64x32xf32>, vector<64x32xf32>, vector<64x32xf32>, vector<64x32xf32>, vector<64x32xf32>, vector<64x32xf32>, vector<64x32xf32> -> vector<512x32xf32>
    %19 = arith.mulf %18, %12 : vector<512x32xf32>
    %20 = tpu.concatenate %17, %17, %17, %17, %17, %17, %17, %17 in 0 : vector<64x32xf32>, vector<64x32xf32>, vector<64x32xf32>, vector<64x32xf32>, vector<64x32xf32>, vector<64x32xf32>, vector<64x32xf32>, vector<64x32xf32> -> vector<512x32xf32>
    %21 = arith.mulf %20, %12 : vector<512x32xf32>
    %cst_18 = arith.constant dense<0.000000e+00> : vector<64x512xf32>
    %22 = tpu.matmul %15, %19, %cst_18 {dimension_numbers = #tpu.dot_dimension_numbers<[1], [1], [0], [0], [0, 0, 1, 0], [], []>} : vector<64x32xf32>, vector<512x32xf32>, vector<64x512xf32> -> vector<64x512xf32>
    %23 = vector.extract_strided_slice %22 {offsets = [0, 0], sizes = [64, 64], strides = [1, 1]} : vector<64x512xf32> to vector<64x64xf32>
    %cst_19 = arith.constant dense<0xFF800000> : vector<64xf32>
    %24 = vector.multi_reduction <maximumf>, %23, %cst_19 [1] : vector<64x64xf32> to vector<64xf32>
    %25 = vector.shape_cast %24 : vector<64xf32> to vector<64x1xf32>
    %26 = vector.shape_cast %25 : vector<64x1xf32> to vector<64x1xf32>
    %27 = vector.broadcast %26 : vector<64x1xf32> to vector<64x64xf32>
    %28 = vector.extract_strided_slice %22 {offsets = [0, 64], sizes = [64, 64], strides = [1, 1]} : vector<64x512xf32> to vector<64x64xf32>
    %cst_20 = arith.constant dense<0xFF800000> : vector<64xf32>
    %29 = vector.multi_reduction <maximumf>, %28, %cst_20 [1] : vector<64x64xf32> to vector<64xf32>
    %30 = vector.shape_cast %29 : vector<64xf32> to vector<64x1xf32>
    %31 = vector.shape_cast %30 : vector<64x1xf32> to vector<64x1xf32>
    %32 = vector.broadcast %31 : vector<64x1xf32> to vector<64x64xf32>
    %33 = vector.extract_strided_slice %22 {offsets = [0, 128], sizes = [64, 64], strides = [1, 1]} : vector<64x512xf32> to vector<64x64xf32>
    %cst_21 = arith.constant dense<0xFF800000> : vector<64xf32>
    %34 = vector.multi_reduction <maximumf>, %33, %cst_21 [1] : vector<64x64xf32> to vector<64xf32>
    %35 = vector.shape_cast %34 : vector<64xf32> to vector<64x1xf32>
    %36 = vector.shape_cast %35 : vector<64x1xf32> to vector<64x1xf32>
    %37 = vector.broadcast %36 : vector<64x1xf32> to vector<64x64xf32>
    %38 = vector.extract_strided_slice %22 {offsets = [0, 192], sizes = [64, 64], strides = [1, 1]} : vector<64x512xf32> to vector<64x64xf32>
    %cst_22 = arith.constant dense<0xFF800000> : vector<64xf32>
    %39 = vector.multi_reduction <maximumf>, %38, %cst_22 [1] : vector<64x64xf32> to vector<64xf32>
    %40 = vector.shape_cast %39 : vector<64xf32> to vector<64x1xf32>
    %41 = vector.shape_cast %40 : vector<64x1xf32> to vector<64x1xf32>
    %42 = vector.broadcast %41 : vector<64x1xf32> to vector<64x64xf32>
    %43 = vector.extract_strided_slice %22 {offsets = [0, 256], sizes = [64, 64], strides = [1, 1]} : vector<64x512xf32> to vector<64x64xf32>
    %cst_23 = arith.constant dense<0xFF800000> : vector<64xf32>
    %44 = vector.multi_reduction <maximumf>, %43, %cst_23 [1] : vector<64x64xf32> to vector<64xf32>
    %45 = vector.shape_cast %44 : vector<64xf32> to vector<64x1xf32>
    %46 = vector.shape_cast %45 : vector<64x1xf32> to vector<64x1xf32>
    %47 = vector.broadcast %46 : vector<64x1xf32> to vector<64x64xf32>
    %48 = vector.extract_strided_slice %22 {offsets = [0, 320], sizes = [64, 64], strides = [1, 1]} : vector<64x512xf32> to vector<64x64xf32>
    %cst_24 = arith.constant dense<0xFF800000> : vector<64xf32>
    %49 = vector.multi_reduction <maximumf>, %48, %cst_24 [1] : vector<64x64xf32> to vector<64xf32>
    %50 = vector.shape_cast %49 : vector<64xf32> to vector<64x1xf32>
    %51 = vector.shape_cast %50 : vector<64x1xf32> to vector<64x1xf32>
    %52 = vector.broadcast %51 : vector<64x1xf32> to vector<64x64xf32>
    %53 = vector.extract_strided_slice %22 {offsets = [0, 384], sizes = [64, 64], strides = [1, 1]} : vector<64x512xf32> to vector<64x64xf32>
    %cst_25 = arith.constant dense<0xFF800000> : vector<64xf32>
    %54 = vector.multi_reduction <maximumf>, %53, %cst_25 [1] : vector<64x64xf32> to vector<64xf32>
    %55 = vector.shape_cast %54 : vector<64xf32> to vector<64x1xf32>
    %56 = vector.shape_cast %55 : vector<64x1xf32> to vector<64x1xf32>
    %57 = vector.broadcast %56 : vector<64x1xf32> to vector<64x64xf32>
    %58 = vector.extract_strided_slice %22 {offsets = [0, 448], sizes = [64, 64], strides = [1, 1]} : vector<64x512xf32> to vector<64x64xf32>
    %cst_26 = arith.constant dense<0xFF800000> : vector<64xf32>
    %59 = vector.multi_reduction <maximumf>, %58, %cst_26 [1] : vector<64x64xf32> to vector<64xf32>
    %60 = vector.shape_cast %59 : vector<64xf32> to vector<64x1xf32>
    %61 = vector.shape_cast %60 : vector<64x1xf32> to vector<64x1xf32>
    %62 = vector.broadcast %61 : vector<64x1xf32> to vector<64x64xf32>
    %63 = tpu.concatenate %27, %32, %37, %42, %47, %52, %57, %62 in 1 : vector<64x64xf32>, vector<64x64xf32>, vector<64x64xf32>, vector<64x64xf32>, vector<64x64xf32>, vector<64x64xf32>, vector<64x64xf32>, vector<64x64xf32> -> vector<64x512xf32>
    %64 = arith.subf %22, %63 : vector<64x512xf32>
    %65 = math.exp %64 : vector<64x512xf32>
    %cst_27 = arith.constant dense<0.000000e+00> : vector<64x8xf32>
    %66 = tpu.matmul %65, %13, %cst_27 {dimension_numbers = #tpu.dot_dimension_numbers<[1], [0], [0], [1], [0, 0, 1, 1], [], []>} : vector<64x512xf32>, vector<512x8xf32>, vector<64x8xf32> -> vector<64x8xf32>
    %67 = tpu.reciprocal %66 : vector<64x8xf32> -> vector<64x8xf32>
    %cst_28 = arith.constant dense<0.000000e+00> : vector<64x512xf32>
    %68 = tpu.matmul %67, %14, %cst_28 {dimension_numbers = #tpu.dot_dimension_numbers<[1], [0], [0], [1], [0, 0, 1, 1], [], []>} : vector<64x8xf32>, vector<8x512xf32>, vector<64x512xf32> -> vector<64x512xf32>
    %69 = arith.mulf %65, %68 : vector<64x512xf32>
    %c0_29 = arith.constant 0 : index
    %c0_30 = arith.constant 0 : index
    %70 = vector.load %arg13[%c0_29, %c0_30] : memref<128x512xf32, #tpu.memory_space<vmem>>, vector<64x512xf32>
    tpu.vector_store %arg13[%c0_29, %c0_30], %69 {strides = array<i32>} : memref<128x512xf32, #tpu.memory_space<vmem>>, vector<64x512xf32>,
    %cst_31 = arith.constant dense<0.000000e+00> : vector<64x32xf32>
    %71 = tpu.matmul %69, %21, %cst_31 {dimension_numbers = #tpu.dot_dimension_numbers<[1], [0], [0], [1], [0, 0, 1, 1], [], []>} : vector<64x512xf32>, vector<512x32xf32>, vector<64x32xf32> -> vector<64x32xf32>
    %72 = vector.extract_strided_slice %6 {offsets = [64, 0], sizes = [64, 32], strides = [1, 1]} : vector<128x32xf32> to vector<64x32xf32>
    %73 = vector.extract_strided_slice %11 {offsets = [64, 0], sizes = [64, 32], strides = [1, 1]} : vector<128x64xf32> to vector<64x32xf32>
    %74 = vector.extract_strided_slice %11 {offsets = [64, 32], sizes = [64, 32], strides = [1, 1]} : vector<128x64xf32> to vector<64x32xf32>
    %75 = tpu.concatenate %73, %73, %73, %73, %73, %73, %73, %73 in 0 : vector<64x32xf32>, vector<64x32xf32>, vector<64x32xf32>, vector<64x32xf32>, vector<64x32xf32>, vector<64x32xf32>, vector<64x32xf32>, vector<64x32xf32> -> vector<512x32xf32>
    %76 = arith.mulf %75, %12 : vector<512x32xf32>
    %77 = tpu.concatenate %74, %74, %74, %74, %74, %74, %74, %74 in 0 : vector<64x32xf32>, vector<64x32xf32>, vector<64x32xf32>, vector<64x32xf32>, vector<64x32xf32>, vector<64x32xf32>, vector<64x32xf32>, vector<64x32xf32> -> vector<512x32xf32>
    %78 = arith.mulf %77, %12 : vector<512x32xf32>
    %cst_32 = arith.constant dense<0.000000e+00> : vector<64x512xf32>
    %79 = tpu.matmul %72, %76, %cst_32 {dimension_numbers = #tpu.dot_dimension_numbers<[1], [1], [0], [0], [0, 0, 1, 0], [], []>} : vector<64x32xf32>, vector<512x32xf32>, vector<64x512xf32> -> vector<64x512xf32>
    %80 = vector.extract_strided_slice %79 {offsets = [0, 0], sizes = [64, 64], strides = [1, 1]} : vector<64x512xf32> to vector<64x64xf32>
    %cst_33 = arith.constant dense<0xFF800000> : vector<64xf32>
    %81 = vector.multi_reduction <maximumf>, %80, %cst_33 [1] : vector<64x64xf32> to vector<64xf32>
    %82 = vector.shape_cast %81 : vector<64xf32> to vector<64x1xf32>
    %83 = vector.shape_cast %82 : vector<64x1xf32> to vector<64x1xf32>
    %84 = vector.broadcast %83 : vector<64x1xf32> to vector<64x64xf32>
    %85 = vector.extract_strided_slice %79 {offsets = [0, 64], sizes = [64, 64], strides = [1, 1]} : vector<64x512xf32> to vector<64x64xf32>
    %cst_34 = arith.constant dense<0xFF800000> : vector<64xf32>
    %86 = vector.multi_reduction <maximumf>, %85, %cst_34 [1] : vector<64x64xf32> to vector<64xf32>
    %87 = vector.shape_cast %86 : vector<64xf32> to vector<64x1xf32>
    %88 = vector.shape_cast %87 : vector<64x1xf32> to vector<64x1xf32>
    %89 = vector.broadcast %88 : vector<64x1xf32> to vector<64x64xf32>
    %90 = vector.extract_strided_slice %79 {offsets = [0, 128], sizes = [64, 64], strides = [1, 1]} : vector<64x512xf32> to vector<64x64xf32>
    %cst_35 = arith.constant dense<0xFF800000> : vector<64xf32>
    %91 = vector.multi_reduction <maximumf>, %90, %cst_35 [1] : vector<64x64xf32> to vector<64xf32>
    %92 = vector.shape_cast %91 : vector<64xf32> to vector<64x1xf32>
    %93 = vector.shape_cast %92 : vector<64x1xf32> to vector<64x1xf32>
    %94 = vector.broadcast %93 : vector<64x1xf32> to vector<64x64xf32>
    %95 = vector.extract_strided_slice %79 {offsets = [0, 192], sizes = [64, 64], strides = [1, 1]} : vector<64x512xf32> to vector<64x64xf32>
    %cst_36 = arith.constant dense<0xFF800000> : vector<64xf32>
    %96 = vector.multi_reduction <maximumf>, %95, %cst_36 [1] : vector<64x64xf32> to vector<64xf32>
    %97 = vector.shape_cast %96 : vector<64xf32> to vector<64x1xf32>
    %98 = vector.shape_cast %97 : vector<64x1xf32> to vector<64x1xf32>
    %99 = vector.broadcast %98 : vector<64x1xf32> to vector<64x64xf32>
    %100 = vector.extract_strided_slice %79 {offsets = [0, 256], sizes = [64, 64], strides = [1, 1]} : vector<64x512xf32> to vector<64x64xf32>
    %cst_37 = arith.constant dense<0xFF800000> : vector<64xf32>
    %101 = vector.multi_reduction <maximumf>, %100, %cst_37 [1] : vector<64x64xf32> to vector<64xf32>
    %102 = vector.shape_cast %101 : vector<64xf32> to vector<64x1xf32>
    %103 = vector.shape_cast %102 : vector<64x1xf32> to vector<64x1xf32>
    %104 = vector.broadcast %103 : vector<64x1xf32> to vector<64x64xf32>
    %105 = vector.extract_strided_slice %79 {offsets = [0, 320], sizes = [64, 64], strides = [1, 1]} : vector<64x512xf32> to vector<64x64xf32>
    %cst_38 = arith.constant dense<0xFF800000> : vector<64xf32>
    %106 = vector.multi_reduction <maximumf>, %105, %cst_38 [1] : vector<64x64xf32> to vector<64xf32>
    %107 = vector.shape_cast %106 : vector<64xf32> to vector<64x1xf32>
    %108 = vector.shape_cast %107 : vector<64x1xf32> to vector<64x1xf32>
    %109 = vector.broadcast %108 : vector<64x1xf32> to vector<64x64xf32>
    %110 = vector.extract_strided_slice %79 {offsets = [0, 384], sizes = [64, 64], strides = [1, 1]} : vector<64x512xf32> to vector<64x64xf32>
    %cst_39 = arith.constant dense<0xFF800000> : vector<64xf32>
    %111 = vector.multi_reduction <maximumf>, %110, %cst_39 [1] : vector<64x64xf32> to vector<64xf32>
    %112 = vector.shape_cast %111 : vector<64xf32> to vector<64x1xf32>
    %113 = vector.shape_cast %112 : vector<64x1xf32> to vector<64x1xf32>
    %114 = vector.broadcast %113 : vector<64x1xf32> to vector<64x64xf32>
    %115 = vector.extract_strided_slice %79 {offsets = [0, 448], sizes = [64, 64], strides = [1, 1]} : vector<64x512xf32> to vector<64x64xf32>
    %cst_40 = arith.constant dense<0xFF800000> : vector<64xf32>
    %116 = vector.multi_reduction <maximumf>, %115, %cst_40 [1] : vector<64x64xf32> to vector<64xf32>
    %117 = vector.shape_cast %116 : vector<64xf32> to vector<64x1xf32>
    %118 = vector.shape_cast %117 : vector<64x1xf32> to vector<64x1xf32>
    %119 = vector.broadcast %118 : vector<64x1xf32> to vector<64x64xf32>
    %120 = tpu.concatenate %84, %89, %94, %99, %104, %109, %114, %119 in 1 : vector<64x64xf32>, vector<64x64xf32>, vector<64x64xf32>, vector<64x64xf32>, vector<64x64xf32>, vector<64x64xf32>, vector<64x64xf32>, vector<64x64xf32> -> vector<64x512xf32>
    %121 = arith.subf %79, %120 : vector<64x512xf32>
    %122 = math.exp %121 : vector<64x512xf32>
    %cst_41 = arith.constant dense<0.000000e+00> : vector<64x8xf32>
    %123 = tpu.matmul %122, %13, %cst_41 {dimension_numbers = #tpu.dot_dimension_numbers<[1], [0], [0], [1], [0, 0, 1, 1], [], []>} : vector<64x512xf32>, vector<512x8xf32>, vector<64x8xf32> -> vector<64x8xf32>
    %124 = tpu.reciprocal %123 : vector<64x8xf32> -> vector<64x8xf32>
    %cst_42 = arith.constant dense<0.000000e+00> : vector<64x512xf32>
    %125 = tpu.matmul %124, %14, %cst_42 {dimension_numbers = #tpu.dot_dimension_numbers<[1], [0], [0], [1], [0, 0, 1, 1], [], []>} : vector<64x8xf32>, vector<8x512xf32>, vector<64x512xf32> -> vector<64x512xf32>
    %126 = arith.mulf %122, %125 : vector<64x512xf32>
    %c64 = arith.constant 64 : index
    %c0_43 = arith.constant 0 : index
    %127 = vector.load %arg13[%c64, %c0_43] : memref<128x512xf32, #tpu.memory_space<vmem>>, vector<64x512xf32>
    tpu.vector_store %arg13[%c64, %c0_43], %126 {strides = array<i32>} : memref<128x512xf32, #tpu.memory_space<vmem>>, vector<64x512xf32>,
    %cst_44 = arith.constant dense<0.000000e+00> : vector<64x32xf32>
    %128 = tpu.matmul %126, %78, %cst_44 {dimension_numbers = #tpu.dot_dimension_numbers<[1], [0], [0], [1], [0, 0, 1, 1], [], []>} : vector<64x512xf32>, vector<512x32xf32>, vector<64x32xf32> -> vector<64x32xf32>
    %129 = tpu.concatenate %71, %128 in 0 : vector<64x32xf32>, vector<64x32xf32> -> vector<128x32xf32>
    %c0_45 = arith.constant 0 : index
    %c0_46 = arith.constant 0 : index
    %130 = vector.load %arg10[%c0_45, %c0_46] : memref<32x64xf32, #tpu.memory_space<vmem>>, vector<32x64xf32>
    %cst_47 = arith.constant dense<0.000000e+00> : vector<128x64xf32>
    %131 = tpu.matmul %129, %130, %cst_47 {dimension_numbers = #tpu.dot_dimension_numbers<[1], [0], [0], [1], [0, 0, 1, 1], [], []>} : vector<128x32xf32>, vector<32x64xf32>, vector<128x64xf32> -> vector<128x64xf32>
    %c0_48 = arith.constant 0 : index
    %c0_49 = arith.constant 0 : index
    %132 = vector.load %arg11[%c0_48, %c0_49] : memref<1x64xf32, #tpu.memory_space<vmem>>, vector<1x64xf32>
    %133 = vector.broadcast %132 : vector<1x64xf32> to vector<128x64xf32>
    %134 = arith.addf %131, %133 : vector<128x64xf32>
    %c0_50 = arith.constant 0 : index
    %c0_51 = arith.constant 0 : index
    %135 = vector.load %arg12[%c0_50, %c0_51] : memref<128x64xf32, #tpu.memory_space<vmem>>, vector<128x64xf32>
    tpu.vector_store %arg12[%c0_50, %c0_51], %134 {strides = array<i32>} : memref<128x64xf32, #tpu.memory_space<vmem>>, vector<128x64xf32>,
    return
  }
  func.func @transform_0(%arg0: i32) -> (i32, i32) {
    %c0_i32 = arith.constant 0 : i32
    %c0_i32_0 = arith.constant 0 : i32
    return %arg0, %c0_i32 : i32, i32
  }
  func.func @transform_1(%arg0: i32) -> (i32, i32) {
    %c0_i32 = arith.constant 0 : i32
    %c0_i32_0 = arith.constant 0 : i32
    return %arg0, %c0_i32 : i32, i32
  }
  func.func @transform_2(%arg0: i32) -> (i32, i32) {
    %c0_i32 = arith.constant 0 : i32
    %c0_i32_0 = arith.constant 0 : i32
    %c0_i32_1 = arith.constant 0 : i32
    return %c0_i32, %c0_i32_0 : i32, i32
  }
  func.func @transform_3(%arg0: i32) -> (i32, i32) {
    %c0_i32 = arith.constant 0 : i32
    %c0_i32_0 = arith.constant 0 : i32
    %c0_i32_1 = arith.constant 0 : i32
    return %c0_i32, %c0_i32_0 : i32, i32
  }
  func.func @transform_4(%arg0: i32) -> (i32, i32) {
    %c0_i32 = arith.constant 0 : i32
    %c0_i32_0 = arith.constant 0 : i32
    %c0_i32_1 = arith.constant 0 : i32
    return %c0_i32, %c0_i32_0 : i32, i32
  }
  func.func @transform_5(%arg0: i32) -> (i32, i32) {
    %c0_i32 = arith.constant 0 : i32
    %c0_i32_0 = arith.constant 0 : i32
    %c0_i32_1 = arith.constant 0 : i32
    return %c0_i32, %c0_i32_0 : i32, i32
  }
  func.func @transform_6(%arg0: i32) -> (i32, i32) {
    %c0_i32 = arith.constant 0 : i32
    %c0_i32_0 = arith.constant 0 : i32
    %c0_i32_1 = arith.constant 0 : i32
    return %c0_i32, %c0_i32_0 : i32, i32
  }
  func.func @transform_7(%arg0: i32) -> (i32, i32) {
    %c0_i32 = arith.constant 0 : i32
    %c0_i32_0 = arith.constant 0 : i32
    %c0_i32_1 = arith.constant 0 : i32
    return %c0_i32, %c0_i32_0 : i32, i32
  }
  func.func @transform_8(%arg0: i32) -> (i32, i32) {
    %c0_i32 = arith.constant 0 : i32
    %c0_i32_0 = arith.constant 0 : i32
    %c0_i32_1 = arith.constant 0 : i32
    return %c0_i32, %c0_i32_0 : i32, i32
  }
  func.func @transform_9(%arg0: i32) -> (i32, i32) {
    %c0_i32 = arith.constant 0 : i32
    %c0_i32_0 = arith.constant 0 : i32
    %c0_i32_1 = arith.constant 0 : i32
    return %c0_i32, %c0_i32_0 : i32, i32
  }
  func.func @transform_10(%arg0: i32) -> (i32, i32) {
    %c0_i32 = arith.constant 0 : i32
    %c0_i32_0 = arith.constant 0 : i32
    %c0_i32_1 = arith.constant 0 : i32
    return %c0_i32, %c0_i32_0 : i32, i32
  }
  func.func @transform_11(%arg0: i32) -> (i32, i32) {
    %c0_i32 = arith.constant 0 : i32
    %c0_i32_0 = arith.constant 0 : i32
    return %arg0, %c0_i32 : i32, i32
  }
  func.func @transform_12(%arg0: i32) -> (i32, i32) {
    %c0_i32 = arith.constant 0 : i32
    %c0_i32_0 = arith.constant 0 : i32
    return %arg0, %c0_i32 : i32, i32
  }
}

</mosaic_0001>

<llo_original>
// kernel: tpu_custom_call.1
$region0: #{tpu_custom_call.1}
  #allocation0 [shape = 'u32[]', space=smem, size = 0x4, offset = 0x4, fixed_abs, tag = 'smem constant byte address 0x4 - core index']
  #allocation1 [shape = 'u32[144,128]{1,0:T(1,128)}', space=vmem, size = 0x12000, scoped, tag = 'internal scratch']
  %s0 = inlined_call_operand.vmem [shape: f32[128,64], index: 0, kind: input, shape index: {}]
  %s1 = inlined_call_operand.vmem [shape: f32[128,64], index: 1, kind: input, shape index: {}]
  %s2 = inlined_call_operand.vmem [shape: f32[64,32], index: 2, kind: input, shape index: {}]
  %s3 = inlined_call_operand.vmem [shape: f32[1,32], index: 3, kind: input, shape index: {}]
  %s4 = inlined_call_operand.vmem [shape: f32[64,64], index: 4, kind: input, shape index: {}]
  %s5 = inlined_call_operand.vmem [shape: f32[1,64], index: 5, kind: input, shape index: {}]
  %s6 = inlined_call_operand.vmem [shape: f32[512,32], index: 6, kind: input, shape index: {}]
  %s7 = inlined_call_operand.vmem [shape: f32[512,8], index: 7, kind: input, shape index: {}]
  %s8 = inlined_call_operand.vmem [shape: f32[8,512], index: 8, kind: input, shape index: {}]
  %s9 = inlined_call_operand.vmem [shape: f32[32,64], index: 9, kind: input, shape index: {}]
  %s10 = inlined_call_operand.vmem [shape: f32[1,64], index: 10, kind: input, shape index: {}]
  %s11 = inlined_call_operand.vmem [shape: f32[128,64], index: 11, kind: output, shape index: {0}]
  %s12 = inlined_call_operand.hbm [shape: f32[128,512], index: 12, kind: output, shape index: {1}]
  %13 = xla_tuple %s11, %s12
  %s14 = sld [smem:[#allocation0]]
  $region62: #{tpu_custom_call.1} parent=0
    _
  %s16 = ssub.s32 1, %s14
  %s17 = scalar_select 0, %s16, %s14
  $region1: #{tpu_custom_call.1} parent=0
    #allocation2 [shape = 'u8[262144]{0}', space=vmem, size = 0x40000, scoped, tag = 'output window, operand 1, single buffered']
    #allocation3 [shape = 's32[1]{0}', space=sflag, size = 0x4, scoped, tag = 'scoped memory for tpu_custom_call.1']
    %18 = vsyncpa [#allocation3], 0
    // Predicated region
    $region2: #{tpu_custom_call.1} parent=1 // pred_check
      _
    $region3: #{tpu_custom_call.1} parent=1 // pred_check_branch
      %20 = sbr.rel (0) target = $region5
    $region4: #{tpu_custom_call.1} parent=1 // pred_region
      _
    $region5: #{tpu_custom_call.1} parent=1 // pred_fallthru
      _
    // Predicated region
    $region6: #{tpu_custom_call.1} parent=1 // pred_check
      _
    $region7: #{tpu_custom_call.1} parent=1 // pred_check_branch
      %22 = sbr.rel (0) target = $region9
    $region8: #{tpu_custom_call.1} parent=1 // pred_region
      _
    $region9: #{tpu_custom_call.1} parent=1 // pred_fallthru
      _
    // Predicated region
    $region10: #{tpu_custom_call.1} parent=1 // pred_check
      _
    $region11: #{tpu_custom_call.1} parent=1 // pred_check_branch
      %24 = sbr.rel (0) target = $region13
    $region12: #{tpu_custom_call.1} parent=1 // pred_region
      _
    $region13: #{tpu_custom_call.1} parent=1 // pred_fallthru
      _
    // Predicated region
    $region14: #{tpu_custom_call.1} parent=1 // pred_check
      _
    $region15: #{tpu_custom_call.1} parent=1 // pred_check_branch
      %26 = sbr.rel (0) target = $region17
    $region16: #{tpu_custom_call.1} parent=1 // pred_region
      _
    $region17: #{tpu_custom_call.1} parent=1 // pred_fallthru
      _
    // Predicated region
    $region18: #{tpu_custom_call.1} parent=1 // pred_check
      _
    $region19: #{tpu_custom_call.1} parent=1 // pred_check_branch
      %28 = sbr.rel (0) target = $region21
    $region20: #{tpu_custom_call.1} parent=1 // pred_region
      _
    $region21: #{tpu_custom_call.1} parent=1 // pred_fallthru
      _
    // Predicated region
    $region22: #{tpu_custom_call.1} parent=1 // pred_check
      _
    $region23: #{tpu_custom_call.1} parent=1 // pred_check_branch
      %30 = sbr.rel (0) target = $region25
    $region24: #{tpu_custom_call.1} parent=1 // pred_region
      _
    $region25: #{tpu_custom_call.1} parent=1 // pred_fallthru
      _
    // Predicated region
    $region26: #{tpu_custom_call.1} parent=1 // pred_check
      _
    $region27: #{tpu_custom_call.1} parent=1 // pred_check_branch
      %32 = sbr.rel (0) target = $region29
    $region28: #{tpu_custom_call.1} parent=1 // pred_region
      _
    $region29: #{tpu_custom_call.1} parent=1 // pred_fallthru
      _
    // Predicated region
    $region30: #{tpu_custom_call.1} parent=1 // pred_check
      _
    $region31: #{tpu_custom_call.1} parent=1 // pred_check_branch
      %34 = sbr.rel (0) target = $region33
    $region32: #{tpu_custom_call.1} parent=1 // pred_region
      _
    $region33: #{tpu_custom_call.1} parent=1 // pred_fallthru
      _
    // Predicated region
    $region34: #{tpu_custom_call.1} parent=1 // pred_check
      _
    $region35: #{tpu_custom_call.1} parent=1 // pred_check_branch
      %36 = sbr.rel (0) target = $region37
    $region36: #{tpu_custom_call.1} parent=1 // pred_region
      _
    $region37: #{tpu_custom_call.1} parent=1 // pred_fallthru
      _
    // Predicated region
    $region38: #{tpu_custom_call.1} parent=1 // pred_check
      _
    $region39: #{tpu_custom_call.1} parent=1 // pred_check_branch
      %38 = sbr.rel (0) target = $region41
    $region40: #{tpu_custom_call.1} parent=1 // pred_region
      _
    $region41: #{tpu_custom_call.1} parent=1 // pred_fallthru
      _
    // Predicated region
    $region42: #{tpu_custom_call.1} parent=1 // pred_check
      _
    $region43: #{tpu_custom_call.1} parent=1 // pred_check_branch
      %40 = sbr.rel (0) target = $region45
    $region44: #{tpu_custom_call.1} parent=1 // pred_region
      _
    $region45: #{tpu_custom_call.1} parent=1 // pred_fallthru
      _
    %v41 = vld [vmem:[%s0] sm:$0xff]
    %v42 = vld [vmem:[%s0 + $0x8] sm:$0xff]
    %v43 = vld [vmem:[%s0 + $0x10] sm:$0xff]
    %v44 = vld [vmem:[%s0 + $0x18] sm:$0xff]
    %v45 = vld [vmem:[%s0 + $0x20] sm:$0xff]
    %v46 = vld [vmem:[%s0 + $0x28] sm:$0xff]
    %v47 = vld [vmem:[%s0 + $0x30] sm:$0xff]
    %v48 = vld [vmem:[%s0 + $0x38] sm:$0xff]
    %v49 = vld [vmem:[%s0 + $0x40] sm:$0xff]
    %v50 = vld [vmem:[%s0 + $0x48] sm:$0xff]
    %v51 = vld [vmem:[%s0 + $0x50] sm:$0xff]
    %v52 = vld [vmem:[%s0 + $0x58] sm:$0xff]
    %v53 = vld [vmem:[%s0 + $0x60] sm:$0xff]
    %v54 = vld [vmem:[%s0 + $0x68] sm:$0xff]
    %v55 = vld [vmem:[%s0 + $0x70] sm:$0xff]
    %v56 = vld [vmem:[%s0 + $0x78] sm:$0xff]
    %v57 = vld [vmem:[%s1] sm:$0xff]
    %v58 = vld [vmem:[%s1 + $0x8] sm:$0xff]
    %v59 = vld [vmem:[%s1 + $0x10] sm:$0xff]
    %v60 = vld [vmem:[%s1 + $0x18] sm:$0xff]
    %v61 = vld [vmem:[%s1 + $0x20] sm:$0xff]
    %v62 = vld [vmem:[%s1 + $0x28] sm:$0xff]
    %v63 = vld [vmem:[%s1 + $0x30] sm:$0xff]
    %v64 = vld [vmem:[%s1 + $0x38] sm:$0xff]
    %v65 = vld [vmem:[%s1 + $0x40] sm:$0xff]
    %v66 = vld [vmem:[%s1 + $0x48] sm:$0xff]
    %v67 = vld [vmem:[%s1 + $0x50] sm:$0xff]
    %v68 = vld [vmem:[%s1 + $0x58] sm:$0xff]
    %v69 = vld [vmem:[%s1 + $0x60] sm:$0xff]
    %v70 = vld [vmem:[%s1 + $0x68] sm:$0xff]
    %v71 = vld [vmem:[%s1 + $0x70] sm:$0xff]
    %v72 = vld [vmem:[%s1 + $0x78] sm:$0xff]
    %v73 = vld [vmem:[%s2] sm:$0xff]
    %v74 = vld [vmem:[%s2 + $0x8] sm:$0xff]
    %v75 = vld [vmem:[%s2 + $0x10] sm:$0xff]
    %v76 = vld [vmem:[%s2 + $0x18] sm:$0xff]
    %v77 = vld [vmem:[%s2 + $0x20] sm:$0xff]
    %v78 = vld [vmem:[%s2 + $0x28] sm:$0xff]
    %v79 = vld [vmem:[%s2 + $0x30] sm:$0xff]
    %v80 = vld [vmem:[%s2 + $0x38] sm:$0xff]
    %v81 = vld [vmem:[%s3] sm:$0x1]
    %v83 = vlaneseq
    %v84 = vshrl.u32 %v83, 7
    %v85 = vsub.s32 0, %v84
    %v86 = vrot.slane %v81, %v85
    %vm88 = vcmask 523264
    %v90 = vsel %vm88, %v41, 0
    %v93 = vsel %vm88, %v42, 0
    %v96 = vsel %vm88, %v43, 0
    %v99 = vsel %vm88, %v44, 0
    %v102 = vsel %vm88, %v45, 0
    %v105 = vsel %vm88, %v46, 0
    %v108 = vsel %vm88, %v47, 0
    %v111 = vsel %vm88, %v48, 0
    %v114 = vsel %vm88, %v49, 0
    %v117 = vsel %vm88, %v50, 0
    %v120 = vsel %vm88, %v51, 0
    %v123 = vsel %vm88, %v52, 0
    %v126 = vsel %vm88, %v53, 0
    %v129 = vsel %vm88, %v54, 0
    %v132 = vsel %vm88, %v55, 0
    %v135 = vsel %vm88, %v56, 0
    %137 = vmatprep.subr.mxu0 0.0
    %138 = vmatpush1.msra.mxu0 0.0
    %139 = vmatprep.subr.mxu0 0.0
    %140 = vmatpush1.msra.mxu0 0.0
    %141 = vmatprep.subr.mxu0 0.0
    %142 = vmatpush1.msra.mxu0 0.0
    %143 = vmatprep.subr.mxu0 0.0
    %144 = vmatpush1.msra.mxu0 0.0
    %145 = vmatprep.subr.mxu0 0.0
    %146 = vmatpush1.msra.mxu0 0.0
    %147 = vmatprep.subr.mxu0 0.0
    %148 = vmatpush1.msra.mxu0 0.0
    %149 = vmatprep.subr.mxu0 0.0
    %150 = vmatpush1.msra.mxu0 0.0
    %151 = vmatprep.subr.mxu0 0.0
    %152 = vmatpush1.msra.mxu0 0.0
    %153 = vmatprep.subr.mxu0 0.0
    %154 = vmatpush1.msra.mxu0 %v80
    %155 = vmatprep.subr.mxu0 0.0
    %156 = vmatpush1.msra.mxu0 %v79
    %157 = vmatprep.subr.mxu0 0.0
    %158 = vmatpush1.msra.mxu0 %v78
    %159 = vmatprep.subr.mxu0 0.0
    %160 = vmatpush1.msra.mxu0 %v77
    %161 = vmatprep.subr.mxu0 0.0
    %162 = vmatpush1.msra.mxu0 %v76
    %163 = vmatprep.subr.mxu0 0.0
    %164 = vmatpush1.msra.mxu0 %v75
    %165 = vmatprep.subr.mxu0 0.0
    %166 = vmatpush1.msra.mxu0 %v74
    %167 = vmatprep.subr.mxu0 0.0
    %168 = vmatpush1.msra.mxu0 %v73
    %169 = vmatprep.subr.mxu0 0.0
    %170 = vmatpush2.msra.mxu0 0.0
    %171 = vmatprep.subr.mxu0 0.0
    %172 = vmatpush2.msra.mxu0 0.0
    %173 = vmatprep.subr.mxu0 0.0
    %174 = vmatpush2.msra.mxu0 0.0
    %175 = vmatprep.subr.mxu0 0.0
    %176 = vmatpush2.msra.mxu0 0.0
    %177 = vmatprep.subr.mxu0 0.0
    %178 = vmatpush2.msra.mxu0 0.0
    %179 = vmatprep.subr.mxu0 0.0
    %180 = vmatpush2.msra.mxu0 0.0
    %181 = vmatprep.subr.mxu0 0.0
    %182 = vmatpush2.msra.mxu0 0.0
    %183 = vmatprep.subr.mxu0 0.0
    %184 = vmatpush2.msra.mxu0 0.0
    %185 = vmatprep.subr.mxu0 0.0
    %186 = vmatpush2.msra.mxu0 0.0
    %187 = vmatprep.subr.mxu0 0.0
    %188 = vmatpush2.msra.mxu0 0.0
    %189 = vmatprep.subr.mxu0 0.0
    %190 = vmatpush2.msra.mxu0 0.0
    %191 = vmatprep.subr.mxu0 0.0
    %192 = vmatpush2.msra.mxu0 0.0
    %193 = vmatprep.subr.mxu0 0.0
    %194 = vmatpush2.msra.mxu0 0.0
    %195 = vmatprep.subr.mxu0 0.0
    %196 = vmatpush2.msra.mxu0 0.0
    %197 = vmatprep.subr.mxu0 0.0
    %198 = vmatpush2.msra.mxu0 0.0
    %199 = vmatprep.subr.mxu0 0.0
    %200 = vmatpush2.msra.mxu0 0.0
    %201 = vmatprep.mubr.f32.mxu0 0.0
    %202 = vmatmul.mubr.f32.gmra.mxu0 %v90
    %v203 = vpop.f32.mrf.mxu0
    %v204 = vadd.f32 %v86, %v203
    %v205 = vpop.f32.mrf.mxu0
    %206 = vmatprep.mubr.f32.mxu0 0.0
    %207 = vmatmul.mubr.f32.gmra.mxu0 %v93
    %v208 = vpop.f32.mrf.mxu0
    %v209 = vadd.f32 %v86, %v208
    %v210 = vpop.f32.mrf.mxu0
    %211 = vmatprep.mubr.f32.mxu0 0.0
    %212 = vmatmul.mubr.f32.gmra.mxu0 %v96
    %v213 = vpop.f32.mrf.mxu0
    %v214 = vadd.f32 %v86, %v213
    %v215 = vpop.f32.mrf.mxu0
    %216 = vmatprep.mubr.f32.mxu0 0.0
    %217 = vmatmul.mubr.f32.gmra.mxu0 %v99
    %v218 = vpop.f32.mrf.mxu0
    %v219 = vadd.f32 %v86, %v218
    %v220 = vpop.f32.mrf.mxu0
    %221 = vmatprep.mubr.f32.mxu0 0.0
    %222 = vmatmul.mubr.f32.gmra.mxu0 %v102
    %v223 = vpop.f32.mrf.mxu0
    %v224 = vadd.f32 %v86, %v223
    %v225 = vpop.f32.mrf.mxu0
    %226 = vmatprep.mubr.f32.mxu0 0.0
    %227 = vmatmul.mubr.f32.gmra.mxu0 %v105
    %v228 = vpop.f32.mrf.mxu0
    %v229 = vadd.f32 %v86, %v228
    %v230 = vpop.f32.mrf.mxu0
    %231 = vmatprep.mubr.f32.mxu0 0.0
    %232 = vmatmul.mubr.f32.gmra.mxu0 %v108
    %v233 = vpop.f32.mrf.mxu0
    %v234 = vadd.f32 %v86, %v233
    %v235 = vpop.f32.mrf.mxu0
    %236 = vmatprep.mubr.f32.mxu0 0.0
    %237 = vmatmul.mubr.f32.gmra.mxu0 %v111
    %v238 = vpop.f32.mrf.mxu0
    %v239 = vadd.f32 %v86, %v238
    %v240 = vpop.f32.mrf.mxu0
    %241 = vmatprep.mubr.f32.mxu0 0.0
    %242 = vmatmul.mubr.f32.gmra.mxu0 %v114
    %v243 = vpop.f32.mrf.mxu0
    %v244 = vadd.f32 %v86, %v243
    %v245 = vpop.f32.mrf.mxu0
    %246 = vmatprep.mubr.f32.mxu0 0.0
    %247 = vmatmul.mubr.f32.gmra.mxu0 %v117
    %v248 = vpop.f32.mrf.mxu0
    %v249 = vadd.f32 %v86, %v248
    %v250 = vpop.f32.mrf.mxu0
    %251 = vmatprep.mubr.f32.mxu0 0.0
    %252 = vmatmul.mubr.f32.gmra.mxu0 %v120
    %v253 = vpop.f32.mrf.mxu0
    %v254 = vadd.f32 %v86, %v253
    %v255 = vpop.f32.mrf.mxu0
    %256 = vmatprep.mubr.f32.mxu0 0.0
    %257 = vmatmul.mubr.f32.gmra.mxu0 %v123
    %v258 = vpop.f32.mrf.mxu0
    %v259 = vadd.f32 %v86, %v258
    %v260 = vpop.f32.mrf.mxu0
    %261 = vmatprep.mubr.f32.mxu0 0.0
    %262 = vmatmul.mubr.f32.gmra.mxu0 %v126
    %v263 = vpop.f32.mrf.mxu0
    %v264 = vadd.f32 %v86, %v263
    %v265 = vpop.f32.mrf.mxu0
    %266 = vmatprep.mubr.f32.mxu0 0.0
    %267 = vmatmul.mubr.f32.gmra.mxu0 %v129
    %v268 = vpop.f32.mrf.mxu0
    %v269 = vadd.f32 %v86, %v268
    %v270 = vpop.f32.mrf.mxu0
    %271 = vmatprep.mubr.f32.mxu0 0.0
    %272 = vmatmul.mubr.f32.gmra.mxu0 %v132
    %v273 = vpop.f32.mrf.mxu0
    %v274 = vadd.f32 %v86, %v273
    %v275 = vpop.f32.mrf.mxu0
    %276 = vmatprep.mubr.f32.mxu0 0.0
    %277 = vmatmul.mubr.f32.gmra.mxu0 %v135
    %v278 = vpop.f32.mrf.mxu0
    %v279 = vadd.f32 %v86, %v278
    %v280 = vpop.f32.mrf.mxu0
    %281 = vdwg.mxu0
    %v282 = vld [vmem:[%s4] sm:$0xff]
    %v283 = vld [vmem:[%s4 + $0x8] sm:$0xff]
    %v284 = vld [vmem:[%s4 + $0x10] sm:$0xff]
    %v285 = vld [vmem:[%s4 + $0x18] sm:$0xff]
    %v286 = vld [vmem:[%s4 + $0x20] sm:$0xff]
    %v287 = vld [vmem:[%s4 + $0x28] sm:$0xff]
    %v288 = vld [vmem:[%s4 + $0x30] sm:$0xff]
    %v289 = vld [vmem:[%s4 + $0x38] sm:$0xff]
    %v290 = vld [vmem:[%s5] sm:$0x1]
    %v292 = vlaneseq
    %v293 = vshrl.u32 %v292, 7
    %v294 = vsub.s32 0, %v293
    %v295 = vrot.slane %v290, %v294
    %v298 = vsel %vm88, %v57, 0
    %v301 = vsel %vm88, %v58, 0
    %v304 = vsel %vm88, %v59, 0
    %v307 = vsel %vm88, %v60, 0
    %v310 = vsel %vm88, %v61, 0
    %v313 = vsel %vm88, %v62, 0
    %v316 = vsel %vm88, %v63, 0
    %v319 = vsel %vm88, %v64, 0
    %v322 = vsel %vm88, %v65, 0
    %v325 = vsel %vm88, %v66, 0
    %v328 = vsel %vm88, %v67, 0
    %v331 = vsel %vm88, %v68, 0
    %v334 = vsel %vm88, %v69, 0
    %v337 = vsel %vm88, %v70, 0
    %v340 = vsel %vm88, %v71, 0
    %v343 = vsel %vm88, %v72, 0
    %345 = vmatprep.subr.mxu0 0.0
    %346 = vmatpush1.msra.mxu0 0.0
    %347 = vmatprep.subr.mxu0 0.0
    %348 = vmatpush1.msra.mxu0 0.0
    %349 = vmatprep.subr.mxu0 0.0
    %350 = vmatpush1.msra.mxu0 0.0
    %351 = vmatprep.subr.mxu0 0.0
    %352 = vmatpush1.msra.mxu0 0.0
    %353 = vmatprep.subr.mxu0 0.0
    %354 = vmatpush1.msra.mxu0 0.0
    %355 = vmatprep.subr.mxu0 0.0
    %356 = vmatpush1.msra.mxu0 0.0
    %357 = vmatprep.subr.mxu0 0.0
    %358 = vmatpush1.msra.mxu0 0.0
    %359 = vmatprep.subr.mxu0 0.0
    %360 = vmatpush1.msra.mxu0 0.0
    %361 = vmatprep.subr.mxu0 0.0
    %362 = vmatpush1.msra.mxu0 %v289
    %363 = vmatprep.subr.mxu0 0.0
    %364 = vmatpush1.msra.mxu0 %v288
    %365 = vmatprep.subr.mxu0 0.0
    %366 = vmatpush1.msra.mxu0 %v287
    %367 = vmatprep.subr.mxu0 0.0
    %368 = vmatpush1.msra.mxu0 %v286
    %369 = vmatprep.subr.mxu0 0.0
    %370 = vmatpush1.msra.mxu0 %v285
    %371 = vmatprep.subr.mxu0 0.0
    %372 = vmatpush1.msra.mxu0 %v284
    %373 = vmatprep.subr.mxu0 0.0
    %374 = vmatpush1.msra.mxu0 %v283
    %375 = vmatprep.subr.mxu0 0.0
    %376 = vmatpush1.msra.mxu0 %v282
    %377 = vmatprep.subr.mxu0 0.0
    %378 = vmatpush2.msra.mxu0 0.0
    %379 = vmatprep.subr.mxu0 0.0
    %380 = vmatpush2.msra.mxu0 0.0
    %381 = vmatprep.subr.mxu0 0.0
    %382 = vmatpush2.msra.mxu0 0.0
    %383 = vmatprep.subr.mxu0 0.0
    %384 = vmatpush2.msra.mxu0 0.0
    %385 = vmatprep.subr.mxu0 0.0
    %386 = vmatpush2.msra.mxu0 0.0
    %387 = vmatprep.subr.mxu0 0.0
    %388 = vmatpush2.msra.mxu0 0.0
    %389 = vmatprep.subr.mxu0 0.0
    %390 = vmatpush2.msra.mxu0 0.0
    %391 = vmatprep.subr.mxu0 0.0
    %392 = vmatpush2.msra.mxu0 0.0
    %393 = vmatprep.subr.mxu0 0.0
    %394 = vmatpush2.msra.mxu0 0.0
    %395 = vmatprep.subr.mxu0 0.0
    %396 = vmatpush2.msra.mxu0 0.0
    %397 = vmatprep.subr.mxu0 0.0
    %398 = vmatpush2.msra.mxu0 0.0
    %399 = vmatprep.subr.mxu0 0.0
    %400 = vmatpush2.msra.mxu0 0.0
    %401 = vmatprep.subr.mxu0 0.0
    %402 = vmatpush2.msra.mxu0 0.0
    %403 = vmatprep.subr.mxu0 0.0
    %404 = vmatpush2.msra.mxu0 0.0
    %405 = vmatprep.subr.mxu0 0.0
    %406 = vmatpush2.msra.mxu0 0.0
    %407 = vmatprep.subr.mxu0 0.0
    %408 = vmatpush2.msra.mxu0 0.0
    %409 = vmatprep.mubr.f32.mxu0 0.0
    %410 = vmatmul.mubr.f32.gmra.mxu0 %v298
    %v411 = vpop.f32.mrf.mxu0
    %v412 = vadd.f32 %v295, %v411
    %v413 = vpop.f32.mrf.mxu0
    %414 = vmatprep.mubr.f32.mxu0 0.0
    %415 = vmatmul.mubr.f32.gmra.mxu0 %v301
    %v416 = vpop.f32.mrf.mxu0
    %v417 = vadd.f32 %v295, %v416
    %v418 = vpop.f32.mrf.mxu0
    %419 = vmatprep.mubr.f32.mxu0 0.0
    %420 = vmatmul.mubr.f32.gmra.mxu0 %v304
    %v421 = vpop.f32.mrf.mxu0
    %v422 = vadd.f32 %v295, %v421
    %v423 = vpop.f32.mrf.mxu0
    %424 = vmatprep.mubr.f32.mxu0 0.0
    %425 = vmatmul.mubr.f32.gmra.mxu0 %v307
    %v426 = vpop.f32.mrf.mxu0
    %v427 = vadd.f32 %v295, %v426
    %v428 = vpop.f32.mrf.mxu0
    %429 = vmatprep.mubr.f32.mxu0 0.0
    %430 = vmatmul.mubr.f32.gmra.mxu0 %v310
    %v431 = vpop.f32.mrf.mxu0
    %v432 = vadd.f32 %v295, %v431
    %v433 = vpop.f32.mrf.mxu0
    %434 = vmatprep.mubr.f32.mxu0 0.0
    %435 = vmatmul.mubr.f32.gmra.mxu0 %v313
    %v436 = vpop.f32.mrf.mxu0
    %v437 = vadd.f32 %v295, %v436
    %v438 = vpop.f32.mrf.mxu0
    %439 = vmatprep.mubr.f32.mxu0 0.0
    %440 = vmatmul.mubr.f32.gmra.mxu0 %v316
    %v441 = vpop.f32.mrf.mxu0
    %v442 = vadd.f32 %v295, %v441
    %v443 = vpop.f32.mrf.mxu0
    %444 = vmatprep.mubr.f32.mxu0 0.0
    %445 = vmatmul.mubr.f32.gmra.mxu0 %v319
    %v446 = vpop.f32.mrf.mxu0
    %v447 = vadd.f32 %v295, %v446
    %v448 = vpop.f32.mrf.mxu0
    %449 = vmatprep.mubr.f32.mxu0 0.0
    %450 = vmatmul.mubr.f32.gmra.mxu0 %v322
    %v451 = vpop.f32.mrf.mxu0
    %v452 = vadd.f32 %v295, %v451
    %v453 = vpop.f32.mrf.mxu0
    %454 = vmatprep.mubr.f32.mxu0 0.0
    %455 = vmatmul.mubr.f32.gmra.mxu0 %v325
    %v456 = vpop.f32.mrf.mxu0
    %v457 = vadd.f32 %v295, %v456
    %v458 = vpop.f32.mrf.mxu0
    %459 = vmatprep.mubr.f32.mxu0 0.0
    %460 = vmatmul.mubr.f32.gmra.mxu0 %v328
    %v461 = vpop.f32.mrf.mxu0
    %v462 = vadd.f32 %v295, %v461
    %v463 = vpop.f32.mrf.mxu0
    %464 = vmatprep.mubr.f32.mxu0 0.0
    %465 = vmatmul.mubr.f32.gmra.mxu0 %v331
    %v466 = vpop.f32.mrf.mxu0
    %v467 = vadd.f32 %v295, %v466
    %v468 = vpop.f32.mrf.mxu0
    %469 = vmatprep.mubr.f32.mxu0 0.0
    %470 = vmatmul.mubr.f32.gmra.mxu0 %v334
    %v471 = vpop.f32.mrf.mxu0
    %v472 = vadd.f32 %v295, %v471
    %v473 = vpop.f32.mrf.mxu0
    %474 = vmatprep.mubr.f32.mxu0 0.0
    %475 = vmatmul.mubr.f32.gmra.mxu0 %v337
    %v476 = vpop.f32.mrf.mxu0
    %v477 = vadd.f32 %v295, %v476
    %v478 = vpop.f32.mrf.mxu0
    %479 = vmatprep.mubr.f32.mxu0 0.0
    %480 = vmatmul.mubr.f32.gmra.mxu0 %v340
    %v481 = vpop.f32.mrf.mxu0
    %v482 = vadd.f32 %v295, %v481
    %v483 = vpop.f32.mrf.mxu0
    %484 = vmatprep.mubr.f32.mxu0 0.0
    %485 = vmatmul.mubr.f32.gmra.mxu0 %v343
    %v486 = vpop.f32.mrf.mxu0
    %v487 = vadd.f32 %v295, %v486
    %v488 = vpop.f32.mrf.mxu0
    %489 = vdwg.mxu0
    %v490 = vld [vmem:[%s6] sm:$0xff]
    %v491 = vld [vmem:[%s6 + $0x8] sm:$0xff]
    %v492 = vld [vmem:[%s6 + $0x10] sm:$0xff]
    %v493 = vld [vmem:[%s6 + $0x18] sm:$0xff]
    %v494 = vld [vmem:[%s6 + $0x20] sm:$0xff]
    %v495 = vld [vmem:[%s6 + $0x28] sm:$0xff]
    %v496 = vld [vmem:[%s6 + $0x30] sm:$0xff]
    %v497 = vld [vmem:[%s6 + $0x38] sm:$0xff]
    %v498 = vld [vmem:[%s6 + $0x40] sm:$0xff]
    %v499 = vld [vmem:[%s6 + $0x48] sm:$0xff]
    %v500 = vld [vmem:[%s6 + $0x50] sm:$0xff]
    %v501 = vld [vmem:[%s6 + $0x58] sm:$0xff]
    %v502 = vld [vmem:[%s6 + $0x60] sm:$0xff]
    %v503 = vld [vmem:[%s6 + $0x68] sm:$0xff]
    %v504 = vld [vmem:[%s6 + $0x70] sm:$0xff]
    %v505 = vld [vmem:[%s6 + $0x78] sm:$0xff]
    %v506 = vld [vmem:[%s6 + $0x80] sm:$0xff]
    %v507 = vld [vmem:[%s6 + $0x88] sm:$0xff]
    %v508 = vld [vmem:[%s6 + $0x90] sm:$0xff]
    %v509 = vld [vmem:[%s6 + $0x98] sm:$0xff]
    %v510 = vld [vmem:[%s6 + $0xa0] sm:$0xff]
    %v511 = vld [vmem:[%s6 + $0xa8] sm:$0xff]
    %v512 = vld [vmem:[%s6 + $0xb0] sm:$0xff]
    %v513 = vld [vmem:[%s6 + $0xb8] sm:$0xff]
    %v514 = vld [vmem:[%s6 + $0xc0] sm:$0xff]
    %v515 = vld [vmem:[%s6 + $0xc8] sm:$0xff]
    %v516 = vld [vmem:[%s6 + $0xd0] sm:$0xff]
    %v517 = vld [vmem:[%s6 + $0xd8] sm:$0xff]
    %v518 = vld [vmem:[%s6 + $0xe0] sm:$0xff]
    %v519 = vld [vmem:[%s6 + $0xe8] sm:$0xff]
    %v520 = vld [vmem:[%s6 + $0xf0] sm:$0xff]
    %v521 = vld [vmem:[%s6 + $0xf8] sm:$0xff]
    %v522 = vld [vmem:[%s6 + $0x100] sm:$0xff]
    %v523 = vld [vmem:[%s6 + $0x108] sm:$0xff]
    %v524 = vld [vmem:[%s6 + $0x110] sm:$0xff]
    %v525 = vld [vmem:[%s6 + $0x118] sm:$0xff]
    %v526 = vld [vmem:[%s6 + $0x120] sm:$0xff]
    %v527 = vld [vmem:[%s6 + $0x128] sm:$0xff]
    %v528 = vld [vmem:[%s6 + $0x130] sm:$0xff]
    %v529 = vld [vmem:[%s6 + $0x138] sm:$0xff]
    %v530 = vld [vmem:[%s6 + $0x140] sm:$0xff]
    %v531 = vld [vmem:[%s6 + $0x148] sm:$0xff]
    %v532 = vld [vmem:[%s6 + $0x150] sm:$0xff]
    %v533 = vld [vmem:[%s6 + $0x158] sm:$0xff]
    %v534 = vld [vmem:[%s6 + $0x160] sm:$0xff]
    %v535 = vld [vmem:[%s6 + $0x168] sm:$0xff]
    %v536 = vld [vmem:[%s6 + $0x170] sm:$0xff]
    %v537 = vld [vmem:[%s6 + $0x178] sm:$0xff]
    %v538 = vld [vmem:[%s6 + $0x180] sm:$0xff]
    %v539 = vld [vmem:[%s6 + $0x188] sm:$0xff]
    %v540 = vld [vmem:[%s6 + $0x190] sm:$0xff]
    %v541 = vld [vmem:[%s6 + $0x198] sm:$0xff]
    %v542 = vld [vmem:[%s6 + $0x1a0] sm:$0xff]
    %v543 = vld [vmem:[%s6 + $0x1a8] sm:$0xff]
    %v544 = vld [vmem:[%s6 + $0x1b0] sm:$0xff]
    %v545 = vld [vmem:[%s6 + $0x1b8] sm:$0xff]
    %v546 = vld [vmem:[%s6 + $0x1c0] sm:$0xff]
    %v547 = vld [vmem:[%s6 + $0x1c8] sm:$0xff]
    %v548 = vld [vmem:[%s6 + $0x1d0] sm:$0xff]
    %v549 = vld [vmem:[%s6 + $0x1d8] sm:$0xff]
    %v550 = vld [vmem:[%s6 + $0x1e0] sm:$0xff]
    %v551 = vld [vmem:[%s6 + $0x1e8] sm:$0xff]
    %v552 = vld [vmem:[%s6 + $0x1f0] sm:$0xff]
    %v553 = vld [vmem:[%s6 + $0x1f8] sm:$0xff]
    %v554 = vld [vmem:[%s7] sm:$0xff]
    %v555 = vld [vmem:[%s7 + $0x8] sm:$0xff]
    %v556 = vld [vmem:[%s7 + $0x10] sm:$0xff]
    %v557 = vld [vmem:[%s7 + $0x18] sm:$0xff]
    %v558 = vld [vmem:[%s7 + $0x20] sm:$0xff]
    %v559 = vld [vmem:[%s7 + $0x28] sm:$0xff]
    %v560 = vld [vmem:[%s7 + $0x30] sm:$0xff]
    %v561 = vld [vmem:[%s7 + $0x38] sm:$0xff]
    %v562 = vld [vmem:[%s7 + $0x40] sm:$0xff]
    %v563 = vld [vmem:[%s7 + $0x48] sm:$0xff]
    %v564 = vld [vmem:[%s7 + $0x50] sm:$0xff]
    %v565 = vld [vmem:[%s7 + $0x58] sm:$0xff]
    %v566 = vld [vmem:[%s7 + $0x60] sm:$0xff]
    %v567 = vld [vmem:[%s7 + $0x68] sm:$0xff]
    %v568 = vld [vmem:[%s7 + $0x70] sm:$0xff]
    %v569 = vld [vmem:[%s7 + $0x78] sm:$0xff]
    %v570 = vld [vmem:[%s7 + $0x80] sm:$0xff]
    %v571 = vld [vmem:[%s7 + $0x88] sm:$0xff]
    %v572 = vld [vmem:[%s7 + $0x90] sm:$0xff]
    %v573 = vld [vmem:[%s7 + $0x98] sm:$0xff]
    %v574 = vld [vmem:[%s7 + $0xa0] sm:$0xff]
    %v575 = vld [vmem:[%s7 + $0xa8] sm:$0xff]
    %v576 = vld [vmem:[%s7 + $0xb0] sm:$0xff]
    %v577 = vld [vmem:[%s7 + $0xb8] sm:$0xff]
    %v578 = vld [vmem:[%s7 + $0xc0] sm:$0xff]
    %v579 = vld [vmem:[%s7 + $0xc8] sm:$0xff]
    %v580 = vld [vmem:[%s7 + $0xd0] sm:$0xff]
    %v581 = vld [vmem:[%s7 + $0xd8] sm:$0xff]
    %v582 = vld [vmem:[%s7 + $0xe0] sm:$0xff]
    %v583 = vld [vmem:[%s7 + $0xe8] sm:$0xff]
    %v584 = vld [vmem:[%s7 + $0xf0] sm:$0xff]
    %v585 = vld [vmem:[%s7 + $0xf8] sm:$0xff]
    %v586 = vld [vmem:[%s7 + $0x100] sm:$0xff]
    %v587 = vld [vmem:[%s7 + $0x108] sm:$0xff]
    %v588 = vld [vmem:[%s7 + $0x110] sm:$0xff]
    %v589 = vld [vmem:[%s7 + $0x118] sm:$0xff]
    %v590 = vld [vmem:[%s7 + $0x120] sm:$0xff]
    %v591 = vld [vmem:[%s7 + $0x128] sm:$0xff]
    %v592 = vld [vmem:[%s7 + $0x130] sm:$0xff]
    %v593 = vld [vmem:[%s7 + $0x138] sm:$0xff]
    %v594 = vld [vmem:[%s7 + $0x140] sm:$0xff]
    %v595 = vld [vmem:[%s7 + $0x148] sm:$0xff]
    %v596 = vld [vmem:[%s7 + $0x150] sm:$0xff]
    %v597 = vld [vmem:[%s7 + $0x158] sm:$0xff]
    %v598 = vld [vmem:[%s7 + $0x160] sm:$0xff]
    %v599 = vld [vmem:[%s7 + $0x168] sm:$0xff]
    %v600 = vld [vmem:[%s7 + $0x170] sm:$0xff]
    %v601 = vld [vmem:[%s7 + $0x178] sm:$0xff]
    %v602 = vld [vmem:[%s7 + $0x180] sm:$0xff]
    %v603 = vld [vmem:[%s7 + $0x188] sm:$0xff]
    %v604 = vld [vmem:[%s7 + $0x190] sm:$0xff]
    %v605 = vld [vmem:[%s7 + $0x198] sm:$0xff]
    %v606 = vld [vmem:[%s7 + $0x1a0] sm:$0xff]
    %v607 = vld [vmem:[%s7 + $0x1a8] sm:$0xff]
    %v608 = vld [vmem:[%s7 + $0x1b0] sm:$0xff]
    %v609 = vld [vmem:[%s7 + $0x1b8] sm:$0xff]
    %v610 = vld [vmem:[%s7 + $0x1c0] sm:$0xff]
    %v611 = vld [vmem:[%s7 + $0x1c8] sm:$0xff]
    %v612 = vld [vmem:[%s7 + $0x1d0] sm:$0xff]
    %v613 = vld [vmem:[%s7 + $0x1d8] sm:$0xff]
    %v614 = vld [vmem:[%s7 + $0x1e0] sm:$0xff]
    %v615 = vld [vmem:[%s7 + $0x1e8] sm:$0xff]
    %v616 = vld [vmem:[%s7 + $0x1f0] sm:$0xff]
    %v617 = vld [vmem:[%s7 + $0x1f8] sm:$0xff]
    %v618 = vld [vmem:[%s8] sm:$0xff]
    %v619 = vld [vmem:[%s8 + $0x8] sm:$0xff]
    %v620 = vld [vmem:[%s8 + $0x10] sm:$0xff]
    %v621 = vld [vmem:[%s8 + $0x18] sm:$0xff]
    %v622 = vmul.f32 %v412, %v490
    %v623 = vmul.f32 %v417, %v491
    %v624 = vmul.f32 %v422, %v492
    %v625 = vmul.f32 %v427, %v493
    %v626 = vmul.f32 %v432, %v494
    %v627 = vmul.f32 %v437, %v495
    %v628 = vmul.f32 %v442, %v496
    %v629 = vmul.f32 %v447, %v497
    %v630 = vmul.f32 %v412, %v498
    %v631 = vmul.f32 %v417, %v499
    %v632 = vmul.f32 %v422, %v500
    %v633 = vmul.f32 %v427, %v501
    %v634 = vmul.f32 %v432, %v502
    %v635 = vmul.f32 %v437, %v503
    %v636 = vmul.f32 %v442, %v504
    %v637 = vmul.f32 %v447, %v505
    %v638 = vmul.f32 %v412, %v506
    %v639 = vmul.f32 %v417, %v507
    %v640 = vmul.f32 %v422, %v508
    %v641 = vmul.f32 %v427, %v509
    %v642 = vmul.f32 %v432, %v510
    %v643 = vmul.f32 %v437, %v511
    %v644 = vmul.f32 %v442, %v512
    %v645 = vmul.f32 %v447, %v513
    %v646 = vmul.f32 %v412, %v514
    %v647 = vmul.f32 %v417, %v515
    %v648 = vmul.f32 %v422, %v516
    %v649 = vmul.f32 %v427, %v517
    %v650 = vmul.f32 %v432, %v518
    %v651 = vmul.f32 %v437, %v519
    %v652 = vmul.f32 %v442, %v520
    %v653 = vmul.f32 %v447, %v521
    %v654 = vmul.f32 %v412, %v522
    %v655 = vmul.f32 %v417, %v523
    %v656 = vmul.f32 %v422, %v524
    %v657 = vmul.f32 %v427, %v525
    %v658 = vmul.f32 %v432, %v526
    %v659 = vmul.f32 %v437, %v527
    %v660 = vmul.f32 %v442, %v528
    %v661 = vmul.f32 %v447, %v529
    %v662 = vmul.f32 %v412, %v530
    %v663 = vmul.f32 %v417, %v531
    %v664 = vmul.f32 %v422, %v532
    %v665 = vmul.f32 %v427, %v533
    %v666 = vmul.f32 %v432, %v534
    %v667 = vmul.f32 %v437, %v535
    %v668 = vmul.f32 %v442, %v536
    %v669 = vmul.f32 %v447, %v537
    %v670 = vmul.f32 %v412, %v538
    %v671 = vmul.f32 %v417, %v539
    %v672 = vmul.f32 %v422, %v540
    %v673 = vmul.f32 %v427, %v541
    %v674 = vmul.f32 %v432, %v542
    %v675 = vmul.f32 %v437, %v543
    %v676 = vmul.f32 %v442, %v544
    %v677 = vmul.f32 %v447, %v545
    %v678 = vmul.f32 %v412, %v546
    %v679 = vmul.f32 %v417, %v547
    %v680 = vmul.f32 %v422, %v548
    %v681 = vmul.f32 %v427, %v549
    %v682 = vmul.f32 %v432, %v550
    %v683 = vmul.f32 %v437, %v551
    %v684 = vmul.f32 %v442, %v552
    %v685 = vmul.f32 %v447, %v553
    %750 = vrot.lane.b32.xlu0 %v490, 32
    %v751 = vpop.permute.xlu0 %750
    %752 = vrot.lane.b32.xlu0 %v491, 32
    %v753 = vpop.permute.xlu0 %752
    %754 = vrot.lane.b32.xlu0 %v492, 32
    %v755 = vpop.permute.xlu0 %754
    %756 = vrot.lane.b32.xlu0 %v493, 32
    %v757 = vpop.permute.xlu0 %756
    %758 = vrot.lane.b32.xlu0 %v494, 32
    %v759 = vpop.permute.xlu0 %758
    %760 = vrot.lane.b32.xlu0 %v495, 32
    %v761 = vpop.permute.xlu0 %760
    %762 = vrot.lane.b32.xlu0 %v496, 32
    %v763 = vpop.permute.xlu0 %762
    %764 = vrot.lane.b32.xlu0 %v497, 32
    %v765 = vpop.permute.xlu0 %764
    %766 = vrot.lane.b32.xlu0 %v498, 32
    %v767 = vpop.permute.xlu0 %766
    %768 = vrot.lane.b32.xlu0 %v499, 32
    %v769 = vpop.permute.xlu0 %768
    %770 = vrot.lane.b32.xlu0 %v500, 32
    %v771 = vpop.permute.xlu0 %770
    %772 = vrot.lane.b32.xlu0 %v501, 32
    %v773 = vpop.permute.xlu0 %772
    %774 = vrot.lane.b32.xlu0 %v502, 32
    %v775 = vpop.permute.xlu0 %774
    %776 = vrot.lane.b32.xlu0 %v503, 32
    %v777 = vpop.permute.xlu0 %776
    %778 = vrot.lane.b32.xlu0 %v504, 32
    %v779 = vpop.permute.xlu0 %778
    %780 = vrot.lane.b32.xlu0 %v505, 32
    %v781 = vpop.permute.xlu0 %780
    %782 = vrot.lane.b32.xlu0 %v506, 32
    %v783 = vpop.permute.xlu0 %782
    %784 = vrot.lane.b32.xlu0 %v507, 32
    %v785 = vpop.permute.xlu0 %784
    %786 = vrot.lane.b32.xlu0 %v508, 32
    %v787 = vpop.permute.xlu0 %786
    %788 = vrot.lane.b32.xlu0 %v509, 32
    %v789 = vpop.permute.xlu0 %788
    %790 = vrot.lane.b32.xlu0 %v510, 32
    %v791 = vpop.permute.xlu0 %790
    %792 = vrot.lane.b32.xlu0 %v511, 32
    %v793 = vpop.permute.xlu0 %792
    %794 = vrot.lane.b32.xlu0 %v512, 32
    %v795 = vpop.permute.xlu0 %794
    %796 = vrot.lane.b32.xlu0 %v513, 32
    %v797 = vpop.permute.xlu0 %796
    %798 = vrot.lane.b32.xlu0 %v514, 32
    %v799 = vpop.permute.xlu0 %798
    %800 = vrot.lane.b32.xlu0 %v515, 32
    %v801 = vpop.permute.xlu0 %800
    %802 = vrot.lane.b32.xlu0 %v516, 32
    %v803 = vpop.permute.xlu0 %802
    %804 = vrot.lane.b32.xlu0 %v517, 32
    %v805 = vpop.permute.xlu0 %804
    %806 = vrot.lane.b32.xlu0 %v518, 32
    %v807 = vpop.permute.xlu0 %806
    %808 = vrot.lane.b32.xlu0 %v519, 32
    %v809 = vpop.permute.xlu0 %808
    %810 = vrot.lane.b32.xlu0 %v520, 32
    %v811 = vpop.permute.xlu0 %810
    %812 = vrot.lane.b32.xlu0 %v521, 32
    %v813 = vpop.permute.xlu0 %812
    %814 = vrot.lane.b32.xlu0 %v522, 32
    %v815 = vpop.permute.xlu0 %814
    %816 = vrot.lane.b32.xlu0 %v523, 32
    %v817 = vpop.permute.xlu0 %816
    %818 = vrot.lane.b32.xlu0 %v524, 32
    %v819 = vpop.permute.xlu0 %818
    %820 = vrot.lane.b32.xlu0 %v525, 32
    %v821 = vpop.permute.xlu0 %820
    %822 = vrot.lane.b32.xlu0 %v526, 32
    %v823 = vpop.permute.xlu0 %822
    %824 = vrot.lane.b32.xlu0 %v527, 32
    %v825 = vpop.permute.xlu0 %824
    %826 = vrot.lane.b32.xlu0 %v528, 32
    %v827 = vpop.permute.xlu0 %826
    %828 = vrot.lane.b32.xlu0 %v529, 32
    %v829 = vpop.permute.xlu0 %828
    %830 = vrot.lane.b32.xlu0 %v530, 32
    %v831 = vpop.permute.xlu0 %830
    %832 = vrot.lane.b32.xlu0 %v531, 32
    %v833 = vpop.permute.xlu0 %832
    %834 = vrot.lane.b32.xlu0 %v532, 32
    %v835 = vpop.permute.xlu0 %834
    %836 = vrot.lane.b32.xlu0 %v533, 32
    %v837 = vpop.permute.xlu0 %836
    %838 = vrot.lane.b32.xlu0 %v534, 32
    %v839 = vpop.permute.xlu0 %838
    %840 = vrot.lane.b32.xlu0 %v535, 32
    %v841 = vpop.permute.xlu0 %840
    %842 = vrot.lane.b32.xlu0 %v536, 32
    %v843 = vpop.permute.xlu0 %842
    %844 = vrot.lane.b32.xlu0 %v537, 32
    %v845 = vpop.permute.xlu0 %844
    %846 = vrot.lane.b32.xlu0 %v538, 32
    %v847 = vpop.permute.xlu0 %846
    %848 = vrot.lane.b32.xlu0 %v539, 32
    %v849 = vpop.permute.xlu0 %848
    %850 = vrot.lane.b32.xlu0 %v540, 32
    %v851 = vpop.permute.xlu0 %850
    %852 = vrot.lane.b32.xlu0 %v541, 32
    %v853 = vpop.permute.xlu0 %852
    %854 = vrot.lane.b32.xlu0 %v542, 32
    %v855 = vpop.permute.xlu0 %854
    %856 = vrot.lane.b32.xlu0 %v543, 32
    %v857 = vpop.permute.xlu0 %856
    %858 = vrot.lane.b32.xlu0 %v544, 32
    %v859 = vpop.permute.xlu0 %858
    %860 = vrot.lane.b32.xlu0 %v545, 32
    %v861 = vpop.permute.xlu0 %860
    %862 = vrot.lane.b32.xlu0 %v546, 32
    %v863 = vpop.permute.xlu0 %862
    %864 = vrot.lane.b32.xlu0 %v547, 32
    %v865 = vpop.permute.xlu0 %864
    %866 = vrot.lane.b32.xlu0 %v548, 32
    %v867 = vpop.permute.xlu0 %866
    %868 = vrot.lane.b32.xlu0 %v549, 32
    %v869 = vpop.permute.xlu0 %868
    %870 = vrot.lane.b32.xlu0 %v550, 32
    %v871 = vpop.permute.xlu0 %870
    %872 = vrot.lane.b32.xlu0 %v551, 32
    %v873 = vpop.permute.xlu0 %872
    %874 = vrot.lane.b32.xlu0 %v552, 32
    %v875 = vpop.permute.xlu0 %874
    %876 = vrot.lane.b32.xlu0 %v553, 32
    %v877 = vpop.permute.xlu0 %876
    %v942 = vmul.f32 %v412, %v751
    %v943 = vmul.f32 %v417, %v753
    %v944 = vmul.f32 %v422, %v755
    %v945 = vmul.f32 %v427, %v757
    %v946 = vmul.f32 %v432, %v759
    %v947 = vmul.f32 %v437, %v761
    %v948 = vmul.f32 %v442, %v763
    %v949 = vmul.f32 %v447, %v765
    %v950 = vmul.f32 %v412, %v767
    %v951 = vmul.f32 %v417, %v769
    %v952 = vmul.f32 %v422, %v771
    %v953 = vmul.f32 %v427, %v773
    %v954 = vmul.f32 %v432, %v775
    %v955 = vmul.f32 %v437, %v777
    %v956 = vmul.f32 %v442, %v779
    %v957 = vmul.f32 %v447, %v781
    %v958 = vmul.f32 %v412, %v783
    %v959 = vmul.f32 %v417, %v785
    %v960 = vmul.f32 %v422, %v787
    %v961 = vmul.f32 %v427, %v789
    %v962 = vmul.f32 %v432, %v791
    %v963 = vmul.f32 %v437, %v793
    %v964 = vmul.f32 %v442, %v795
    %v965 = vmul.f32 %v447, %v797
    %v966 = vmul.f32 %v412, %v799
    %v967 = vmul.f32 %v417, %v801
    %v968 = vmul.f32 %v422, %v803
    %v969 = vmul.f32 %v427, %v805
    %v970 = vmul.f32 %v432, %v807
    %v971 = vmul.f32 %v437, %v809
    %v972 = vmul.f32 %v442, %v811
    %v973 = vmul.f32 %v447, %v813
    %v974 = vmul.f32 %v412, %v815
    %v975 = vmul.f32 %v417, %v817
    %v976 = vmul.f32 %v422, %v819
    %v977 = vmul.f32 %v427, %v821
    %v978 = vmul.f32 %v432, %v823
    %v979 = vmul.f32 %v437, %v825
    %v980 = vmul.f32 %v442, %v827
    %v981 = vmul.f32 %v447, %v829
    %v982 = vmul.f32 %v412, %v831
    %v983 = vmul.f32 %v417, %v833
    %v984 = vmul.f32 %v422, %v835
    %v985 = vmul.f32 %v427, %v837
    %v986 = vmul.f32 %v432, %v839
    %v987 = vmul.f32 %v437, %v841
    %v988 = vmul.f32 %v442, %v843
    %v989 = vmul.f32 %v447, %v845
    %v990 = vmul.f32 %v412, %v847
    %v991 = vmul.f32 %v417, %v849
    %v992 = vmul.f32 %v422, %v851
    %v993 = vmul.f32 %v427, %v853
    %v994 = vmul.f32 %v432, %v855
    %v995 = vmul.f32 %v437, %v857
    %v996 = vmul.f32 %v442, %v859
    %v997 = vmul.f32 %v447, %v861
    %v998 = vmul.f32 %v412, %v863
    %v999 = vmul.f32 %v417, %v865
    %v1000 = vmul.f32 %v422, %v867
    %v1001 = vmul.f32 %v427, %v869
    %v1002 = vmul.f32 %v432, %v871
    %v1003 = vmul.f32 %v437, %v873
    %v1004 = vmul.f32 %v442, %v875
    %v1005 = vmul.f32 %v447, %v877
    %vm1006 = vcmask 261120
    %v1008 = vsel %vm1006, %v204, 0
    %v1011 = vsel %vm1006, %v209, 0
    %v1014 = vsel %vm1006, %v214, 0
    %v1017 = vsel %vm1006, %v219, 0
    %v1020 = vsel %vm1006, %v224, 0
    %v1023 = vsel %vm1006, %v229, 0
    %v1026 = vsel %vm1006, %v234, 0
    %v1029 = vsel %vm1006, %v239, 0
    %v1032 = vsel %vm1006, %v622, 0
    %v1035 = vsel %vm1006, %v623, 0
    %v1038 = vsel %vm1006, %v624, 0
    %v1041 = vsel %vm1006, %v625, 0
    %v1044 = vsel %vm1006, %v626, 0
    %v1047 = vsel %vm1006, %v627, 0
    %v1050 = vsel %vm1006, %v628, 0
    %v1053 = vsel %vm1006, %v629, 0
    %v1056 = vsel %vm1006, %v630, 0
    %v1059 = vsel %vm1006, %v631, 0
    %v1062 = vsel %vm1006, %v632, 0
    %v1065 = vsel %vm1006, %v633, 0
    %v1068 = vsel %vm1006, %v634, 0
    %v1071 = vsel %vm1006, %v635, 0
    %v1074 = vsel %vm1006, %v636, 0
    %v1077 = vsel %vm1006, %v637, 0
    %v1080 = vsel %vm1006, %v638, 0
    %v1083 = vsel %vm1006, %v639, 0
    %v1086 = vsel %vm1006, %v640, 0
    %v1089 = vsel %vm1006, %v641, 0
    %v1092 = vsel %vm1006, %v642, 0
    %v1095 = vsel %vm1006, %v643, 0
    %v1098 = vsel %vm1006, %v644, 0
    %v1101 = vsel %vm1006, %v645, 0
    %v1104 = vsel %vm1006, %v646, 0
    %v1107 = vsel %vm1006, %v647, 0
    %v1110 = vsel %vm1006, %v648, 0
    %v1113 = vsel %vm1006, %v649, 0
    %v1116 = vsel %vm1006, %v650, 0
    %v1119 = vsel %vm1006, %v651, 0
    %v1122 = vsel %vm1006, %v652, 0
    %v1125 = vsel %vm1006, %v653, 0
    %v1128 = vsel %vm1006, %v654, 0
    %v1131 = vsel %vm1006, %v655, 0
    %v1134 = vsel %vm1006, %v656, 0
    %v1137 = vsel %vm1006, %v657, 0
    %v1140 = vsel %vm1006, %v658, 0
    %v1143 = vsel %vm1006, %v659, 0
    %v1146 = vsel %vm1006, %v660, 0
    %v1149 = vsel %vm1006, %v661, 0
    %v1152 = vsel %vm1006, %v662, 0
    %v1155 = vsel %vm1006, %v663, 0
    %v1158 = vsel %vm1006, %v664, 0
    %v1161 = vsel %vm1006, %v665, 0
    %v1164 = vsel %vm1006, %v666, 0
    %v1167 = vsel %vm1006, %v667, 0
    %v1170 = vsel %vm1006, %v668, 0
    %v1173 = vsel %vm1006, %v669, 0
    %v1176 = vsel %vm1006, %v670, 0
    %v1179 = vsel %vm1006, %v671, 0
    %v1182 = vsel %vm1006, %v672, 0
    %v1185 = vsel %vm1006, %v673, 0
    %v1188 = vsel %vm1006, %v674, 0
    %v1191 = vsel %vm1006, %v675, 0
    %v1194 = vsel %vm1006, %v676, 0
    %v1197 = vsel %vm1006, %v677, 0
    %v1200 = vsel %vm1006, %v678, 0
    %v1203 = vsel %vm1006, %v679, 0
    %v1206 = vsel %vm1006, %v680, 0
    %v1209 = vsel %vm1006, %v681, 0
    %v1212 = vsel %vm1006, %v682, 0
    %v1215 = vsel %vm1006, %v683, 0
    %v1218 = vsel %vm1006, %v684, 0
    %v1221 = vsel %vm1006, %v685, 0
    %1223 = vmatprep.subr.mxu0 0.0
    %1224 = vmatpush1.xpose.msra.mxu0 %v1077
    %1225 = vmatprep.subr.mxu0 0.0
    %1226 = vmatpush1.xpose.msra.mxu0 %v1074
    %1227 = vmatprep.subr.mxu0 0.0
    %1228 = vmatpush1.xpose.msra.mxu0 %v1071
    %1229 = vmatprep.subr.mxu0 0.0
    %1230 = vmatpush1.xpose.msra.mxu0 %v1068
    %1231 = vmatprep.subr.mxu0 0.0
    %1232 = vmatpush1.xpose.msra.mxu0 %v1065
    %1233 = vmatprep.subr.mxu0 0.0
    %1234 = vmatpush1.xpose.msra.mxu0 %v1062
    %1235 = vmatprep.subr.mxu0 0.0
    %1236 = vmatpush1.xpose.msra.mxu0 %v1059
    %1237 = vmatprep.subr.mxu0 0.0
    %1238 = vmatpush1.xpose.msra.mxu0 %v1056
    %1239 = vmatprep.subr.mxu0 0.0
    %1240 = vmatpush1.xpose.msra.mxu0 %v1053
    %1241 = vmatprep.subr.mxu0 0.0
    %1242 = vmatpush1.xpose.msra.mxu0 %v1050
    %1243 = vmatprep.subr.mxu0 0.0
    %1244 = vmatpush1.xpose.msra.mxu0 %v1047
    %1245 = vmatprep.subr.mxu0 0.0
    %1246 = vmatpush1.xpose.msra.mxu0 %v1044
    %1247 = vmatprep.subr.mxu0 0.0
    %1248 = vmatpush1.xpose.msra.mxu0 %v1041
    %1249 = vmatprep.subr.mxu0 0.0
    %1250 = vmatpush1.xpose.msra.mxu0 %v1038
    %1251 = vmatprep.subr.mxu0 0.0
    %1252 = vmatpush1.xpose.msra.mxu0 %v1035
    %1253 = vmatprep.subr.mxu0 0.0
    %1254 = vmatpush1.xpose.msra.mxu0 %v1032
    %1255 = vmatprep.subr.mxu0 0.0
    %1256 = vmatpush2.xpose.msra.mxu0 %v1125
    %1257 = vmatprep.subr.mxu0 0.0
    %1258 = vmatpush2.xpose.msra.mxu0 %v1122
    %1259 = vmatprep.subr.mxu0 0.0
    %1260 = vmatpush2.xpose.msra.mxu0 %v1119
    %1261 = vmatprep.subr.mxu0 0.0
    %1262 = vmatpush2.xpose.msra.mxu0 %v1116
    %1263 = vmatprep.subr.mxu0 0.0
    %1264 = vmatpush2.xpose.msra.mxu0 %v1113
    %1265 = vmatprep.subr.mxu0 0.0
    %1266 = vmatpush2.xpose.msra.mxu0 %v1110
    %1267 = vmatprep.subr.mxu0 0.0
    %1268 = vmatpush2.xpose.msra.mxu0 %v1107
    %1269 = vmatprep.subr.mxu0 0.0
    %1270 = vmatpush2.xpose.msra.mxu0 %v1104
    %1271 = vmatprep.subr.mxu0 0.0
    %1272 = vmatpush2.xpose.msra.mxu0 %v1101
    %1273 = vmatprep.subr.mxu0 0.0
    %1274 = vmatpush2.xpose.msra.mxu0 %v1098
    %1275 = vmatprep.subr.mxu0 0.0
    %1276 = vmatpush2.xpose.msra.mxu0 %v1095
    %1277 = vmatprep.subr.mxu0 0.0
    %1278 = vmatpush2.xpose.msra.mxu0 %v1092
    %1279 = vmatprep.subr.mxu0 0.0
    %1280 = vmatpush2.xpose.msra.mxu0 %v1089
    %1281 = vmatprep.subr.mxu0 0.0
    %1282 = vmatpush2.xpose.msra.mxu0 %v1086
    %1283 = vmatprep.subr.mxu0 0.0
    %1284 = vmatpush2.xpose.msra.mxu0 %v1083
    %1285 = vmatprep.subr.mxu0 0.0
    %1286 = vmatpush2.xpose.msra.mxu0 %v1080
    %1287 = vmatprep.mubr.f32.mxu0 0.0
    %1288 = vmatmul.mubr.f32.gmra.mxu0 %v1008
    %v1289 = vpop.f32.mrf.mxu0
    %v1290 = vadd.f32 0.0, %v1289
    %v1291 = vpop.f32.mrf.mxu0
    %v1292 = vadd.f32 0.0, %v1291
    %1293 = vmatprep.mubr.f32.mxu0 0.0
    %1294 = vmatmul.mubr.f32.gmra.mxu0 %v1011
    %v1295 = vpop.f32.mrf.mxu0
    %v1296 = vadd.f32 0.0, %v1295
    %v1297 = vpop.f32.mrf.mxu0
    %v1298 = vadd.f32 0.0, %v1297
    %1299 = vmatprep.mubr.f32.mxu0 0.0
    %1300 = vmatmul.mubr.f32.gmra.mxu0 %v1014
    %v1301 = vpop.f32.mrf.mxu0
    %v1302 = vadd.f32 0.0, %v1301
    %v1303 = vpop.f32.mrf.mxu0
    %v1304 = vadd.f32 0.0, %v1303
    %1305 = vmatprep.mubr.f32.mxu0 0.0
    %1306 = vmatmul.mubr.f32.gmra.mxu0 %v1017
    %v1307 = vpop.f32.mrf.mxu0
    %v1308 = vadd.f32 0.0, %v1307
    %v1309 = vpop.f32.mrf.mxu0
    %v1310 = vadd.f32 0.0, %v1309
    %1311 = vmatprep.mubr.f32.mxu0 0.0
    %1312 = vmatmul.mubr.f32.gmra.mxu0 %v1020
    %v1313 = vpop.f32.mrf.mxu0
    %v1314 = vadd.f32 0.0, %v1313
    %v1315 = vpop.f32.mrf.mxu0
    %v1316 = vadd.f32 0.0, %v1315
    %1317 = vmatprep.mubr.f32.mxu0 0.0
    %1318 = vmatmul.mubr.f32.gmra.mxu0 %v1023
    %v1319 = vpop.f32.mrf.mxu0
    %v1320 = vadd.f32 0.0, %v1319
    %v1321 = vpop.f32.mrf.mxu0
    %v1322 = vadd.f32 0.0, %v1321
    %1323 = vmatprep.mubr.f32.mxu0 0.0
    %1324 = vmatmul.mubr.f32.gmra.mxu0 %v1026
    %v1325 = vpop.f32.mrf.mxu0
    %v1326 = vadd.f32 0.0, %v1325
    %v1327 = vpop.f32.mrf.mxu0
    %v1328 = vadd.f32 0.0, %v1327
    %1329 = vmatprep.mubr.f32.mxu0 0.0
    %1330 = vmatmul.mubr.f32.gmra.mxu0 %v1029
    %v1331 = vpop.f32.mrf.mxu0
    %v1332 = vadd.f32 0.0, %v1331
    %v1333 = vpop.f32.mrf.mxu0
    %v1334 = vadd.f32 0.0, %v1333
    %1335 = vdwg.mxu0
    %1336 = vmatprep.subr.mxu0 0.0
    %1337 = vmatpush1.xpose.msra.mxu0 %v1173
    %1338 = vmatprep.subr.mxu0 0.0
    %1339 = vmatpush1.xpose.msra.mxu0 %v1170
    %1340 = vmatprep.subr.mxu0 0.0
    %1341 = vmatpush1.xpose.msra.mxu0 %v1167
    %1342 = vmatprep.subr.mxu0 0.0
    %1343 = vmatpush1.xpose.msra.mxu0 %v1164
    %1344 = vmatprep.subr.mxu0 0.0
    %1345 = vmatpush1.xpose.msra.mxu0 %v1161
    %1346 = vmatprep.subr.mxu0 0.0
    %1347 = vmatpush1.xpose.msra.mxu0 %v1158
    %1348 = vmatprep.subr.mxu0 0.0
    %1349 = vmatpush1.xpose.msra.mxu0 %v1155
    %1350 = vmatprep.subr.mxu0 0.0
    %1351 = vmatpush1.xpose.msra.mxu0 %v1152
    %1352 = vmatprep.subr.mxu0 0.0
    %1353 = vmatpush1.xpose.msra.mxu0 %v1149
    %1354 = vmatprep.subr.mxu0 0.0
    %1355 = vmatpush1.xpose.msra.mxu0 %v1146
    %1356 = vmatprep.subr.mxu0 0.0
    %1357 = vmatpush1.xpose.msra.mxu0 %v1143
    %1358 = vmatprep.subr.mxu0 0.0
    %1359 = vmatpush1.xpose.msra.mxu0 %v1140
    %1360 = vmatprep.subr.mxu0 0.0
    %1361 = vmatpush1.xpose.msra.mxu0 %v1137
    %1362 = vmatprep.subr.mxu0 0.0
    %1363 = vmatpush1.xpose.msra.mxu0 %v1134
    %1364 = vmatprep.subr.mxu0 0.0
    %1365 = vmatpush1.xpose.msra.mxu0 %v1131
    %1366 = vmatprep.subr.mxu0 0.0
    %1367 = vmatpush1.xpose.msra.mxu0 %v1128
    %1368 = vmatprep.subr.mxu0 0.0
    %1369 = vmatpush2.xpose.msra.mxu0 %v1221
    %1370 = vmatprep.subr.mxu0 0.0
    %1371 = vmatpush2.xpose.msra.mxu0 %v1218
    %1372 = vmatprep.subr.mxu0 0.0
    %1373 = vmatpush2.xpose.msra.mxu0 %v1215
    %1374 = vmatprep.subr.mxu0 0.0
    %1375 = vmatpush2.xpose.msra.mxu0 %v1212
    %1376 = vmatprep.subr.mxu0 0.0
    %1377 = vmatpush2.xpose.msra.mxu0 %v1209
    %1378 = vmatprep.subr.mxu0 0.0
    %1379 = vmatpush2.xpose.msra.mxu0 %v1206
    %1380 = vmatprep.subr.mxu0 0.0
    %1381 = vmatpush2.xpose.msra.mxu0 %v1203
    %1382 = vmatprep.subr.mxu0 0.0
    %1383 = vmatpush2.xpose.msra.mxu0 %v1200
    %1384 = vmatprep.subr.mxu0 0.0
    %1385 = vmatpush2.xpose.msra.mxu0 %v1197
    %1386 = vmatprep.subr.mxu0 0.0
    %1387 = vmatpush2.xpose.msra.mxu0 %v1194
    %1388 = vmatprep.subr.mxu0 0.0
    %1389 = vmatpush2.xpose.msra.mxu0 %v1191
    %1390 = vmatprep.subr.mxu0 0.0
    %1391 = vmatpush2.xpose.msra.mxu0 %v1188
    %1392 = vmatprep.subr.mxu0 0.0
    %1393 = vmatpush2.xpose.msra.mxu0 %v1185
    %1394 = vmatprep.subr.mxu0 0.0
    %1395 = vmatpush2.xpose.msra.mxu0 %v1182
    %1396 = vmatprep.subr.mxu0 0.0
    %1397 = vmatpush2.xpose.msra.mxu0 %v1179
    %1398 = vmatprep.subr.mxu0 0.0
    %1399 = vmatpush2.xpose.msra.mxu0 %v1176
    %1400 = vmatprep.mubr.f32.mxu0 0.0
    %1401 = vmatmul.mubr.f32.gmra.mxu0 %v1008
    %v1402 = vpop.f32.mrf.mxu0
    %v1403 = vadd.f32 0.0, %v1402
    %v1404 = vpop.f32.mrf.mxu0
    %v1405 = vadd.f32 0.0, %v1404
    %1406 = vmatprep.mubr.f32.mxu0 0.0
    %1407 = vmatmul.mubr.f32.gmra.mxu0 %v1011
    %v1408 = vpop.f32.mrf.mxu0
    %v1409 = vadd.f32 0.0, %v1408
    %v1410 = vpop.f32.mrf.mxu0
    %v1411 = vadd.f32 0.0, %v1410
    %1412 = vmatprep.mubr.f32.mxu0 0.0
    %1413 = vmatmul.mubr.f32.gmra.mxu0 %v1014
    %v1414 = vpop.f32.mrf.mxu0
    %v1415 = vadd.f32 0.0, %v1414
    %v1416 = vpop.f32.mrf.mxu0
    %v1417 = vadd.f32 0.0, %v1416
    %1418 = vmatprep.mubr.f32.mxu0 0.0
    %1419 = vmatmul.mubr.f32.gmra.mxu0 %v1017
    %v1420 = vpop.f32.mrf.mxu0
    %v1421 = vadd.f32 0.0, %v1420
    %v1422 = vpop.f32.mrf.mxu0
    %v1423 = vadd.f32 0.0, %v1422
    %1424 = vmatprep.mubr.f32.mxu0 0.0
    %1425 = vmatmul.mubr.f32.gmra.mxu0 %v1020
    %v1426 = vpop.f32.mrf.mxu0
    %v1427 = vadd.f32 0.0, %v1426
    %v1428 = vpop.f32.mrf.mxu0
    %v1429 = vadd.f32 0.0, %v1428
    %1430 = vmatprep.mubr.f32.mxu0 0.0
    %1431 = vmatmul.mubr.f32.gmra.mxu0 %v1023
    %v1432 = vpop.f32.mrf.mxu0
    %v1433 = vadd.f32 0.0, %v1432
    %v1434 = vpop.f32.mrf.mxu0
    %v1435 = vadd.f32 0.0, %v1434
    %1436 = vmatprep.mubr.f32.mxu0 0.0
    %1437 = vmatmul.mubr.f32.gmra.mxu0 %v1026
    %v1438 = vpop.f32.mrf.mxu0
    %v1439 = vadd.f32 0.0, %v1438
    %v1440 = vpop.f32.mrf.mxu0
    %v1441 = vadd.f32 0.0, %v1440
    %1442 = vmatprep.mubr.f32.mxu0 0.0
    %1443 = vmatmul.mubr.f32.gmra.mxu0 %v1029
    %v1444 = vpop.f32.mrf.mxu0
    %v1445 = vadd.f32 0.0, %v1444
    %v1446 = vpop.f32.mrf.mxu0
    %v1447 = vadd.f32 0.0, %v1446
    %1448 = vdwg.mxu0
    %v1449 = vsel %vm88, %v1290, -inf
    %1450 = vmax.xlane.f32.xlu0 %v1449
    %v1451 = vpop.xlane.xlu0 %1450
    %v1452 = vsel %vm88, %v1296, -inf
    %1453 = vmax.xlane.f32.xlu0 %v1452
    %v1454 = vpop.xlane.xlu0 %1453
    %v1455 = vsel %vm88, %v1302, -inf
    %1456 = vmax.xlane.f32.xlu0 %v1455
    %v1457 = vpop.xlane.xlu0 %1456
    %v1458 = vsel %vm88, %v1308, -inf
    %1459 = vmax.xlane.f32.xlu0 %v1458
    %v1460 = vpop.xlane.xlu0 %1459
    %v1461 = vsel %vm88, %v1314, -inf
    %1462 = vmax.xlane.f32.xlu0 %v1461
    %v1463 = vpop.xlane.xlu0 %1462
    %v1464 = vsel %vm88, %v1320, -inf
    %1465 = vmax.xlane.f32.xlu0 %v1464
    %v1466 = vpop.xlane.xlu0 %1465
    %v1467 = vsel %vm88, %v1326, -inf
    %1468 = vmax.xlane.f32.xlu0 %v1467
    %v1469 = vpop.xlane.xlu0 %1468
    %v1470 = vsel %vm88, %v1332, -inf
    %1471 = vmax.xlane.f32.xlu0 %v1470
    %v1472 = vpop.xlane.xlu0 %1471
    %vm1473 = vcmask 1048064
    %v1474 = vsel %vm1473, %v1290, -inf
    %1475 = vmax.xlane.f32.xlu0 %v1474
    %v1476 = vpop.xlane.xlu0 %1475
    %v1477 = vsel %vm1473, %v1296, -inf
    %1478 = vmax.xlane.f32.xlu0 %v1477
    %v1479 = vpop.xlane.xlu0 %1478
    %v1480 = vsel %vm1473, %v1302, -inf
    %1481 = vmax.xlane.f32.xlu0 %v1480
    %v1482 = vpop.xlane.xlu0 %1481
    %v1483 = vsel %vm1473, %v1308, -inf
    %1484 = vmax.xlane.f32.xlu0 %v1483
    %v1485 = vpop.xlane.xlu0 %1484
    %v1486 = vsel %vm1473, %v1314, -inf
    %1487 = vmax.xlane.f32.xlu0 %v1486
    %v1488 = vpop.xlane.xlu0 %1487
    %v1489 = vsel %vm1473, %v1320, -inf
    %1490 = vmax.xlane.f32.xlu0 %v1489
    %v1491 = vpop.xlane.xlu0 %1490
    %v1492 = vsel %vm1473, %v1326, -inf
    %1493 = vmax.xlane.f32.xlu0 %v1492
    %v1494 = vpop.xlane.xlu0 %1493
    %v1495 = vsel %vm1473, %v1332, -inf
    %1496 = vmax.xlane.f32.xlu0 %v1495
    %v1497 = vpop.xlane.xlu0 %1496
    %v1498 = vsel %vm88, %v1292, -inf
    %1499 = vmax.xlane.f32.xlu0 %v1498
    %v1500 = vpop.xlane.xlu0 %1499
    %v1501 = vsel %vm88, %v1298, -inf
    %1502 = vmax.xlane.f32.xlu0 %v1501
    %v1503 = vpop.xlane.xlu0 %1502
    %v1504 = vsel %vm88, %v1304, -inf
    %1505 = vmax.xlane.f32.xlu0 %v1504
    %v1506 = vpop.xlane.xlu0 %1505
    %v1507 = vsel %vm88, %v1310, -inf
    %1508 = vmax.xlane.f32.xlu0 %v1507
    %v1509 = vpop.xlane.xlu0 %1508
    %v1510 = vsel %vm88, %v1316, -inf
    %1511 = vmax.xlane.f32.xlu0 %v1510
    %v1512 = vpop.xlane.xlu0 %1511
    %v1513 = vsel %vm88, %v1322, -inf
    %1514 = vmax.xlane.f32.xlu0 %v1513
    %v1515 = vpop.xlane.xlu0 %1514
    %v1516 = vsel %vm88, %v1328, -inf
    %1517 = vmax.xlane.f32.xlu0 %v1516
    %v1518 = vpop.xlane.xlu0 %1517
    %v1519 = vsel %vm88, %v1334, -inf
    %1520 = vmax.xlane.f32.xlu0 %v1519
    %v1521 = vpop.xlane.xlu0 %1520
    %v1522 = vsel %vm1473, %v1292, -inf
    %1523 = vmax.xlane.f32.xlu0 %v1522
    %v1524 = vpop.xlane.xlu0 %1523
    %v1525 = vsel %vm1473, %v1298, -inf
    %1526 = vmax.xlane.f32.xlu0 %v1525
    %v1527 = vpop.xlane.xlu0 %1526
    %v1528 = vsel %vm1473, %v1304, -inf
    %1529 = vmax.xlane.f32.xlu0 %v1528
    %v1530 = vpop.xlane.xlu0 %1529
    %v1531 = vsel %vm1473, %v1310, -inf
    %1532 = vmax.xlane.f32.xlu0 %v1531
    %v1533 = vpop.xlane.xlu0 %1532
    %v1534 = vsel %vm1473, %v1316, -inf
    %1535 = vmax.xlane.f32.xlu0 %v1534
    %v1536 = vpop.xlane.xlu0 %1535
    %v1537 = vsel %vm1473, %v1322, -inf
    %1538 = vmax.xlane.f32.xlu0 %v1537
    %v1539 = vpop.xlane.xlu0 %1538
    %v1540 = vsel %vm1473, %v1328, -inf
    %1541 = vmax.xlane.f32.xlu0 %v1540
    %v1542 = vpop.xlane.xlu0 %1541
    %v1543 = vsel %vm1473, %v1334, -inf
    %1544 = vmax.xlane.f32.xlu0 %v1543
    %v1545 = vpop.xlane.xlu0 %1544
    %v1546 = vsel %vm88, %v1403, -inf
    %1547 = vmax.xlane.f32.xlu0 %v1546
    %v1548 = vpop.xlane.xlu0 %1547
    %v1549 = vsel %vm88, %v1409, -inf
    %1550 = vmax.xlane.f32.xlu0 %v1549
    %v1551 = vpop.xlane.xlu0 %1550
    %v1552 = vsel %vm88, %v1415, -inf
    %1553 = vmax.xlane.f32.xlu0 %v1552
    %v1554 = vpop.xlane.xlu0 %1553
    %v1555 = vsel %vm88, %v1421, -inf
    %1556 = vmax.xlane.f32.xlu0 %v1555
    %v1557 = vpop.xlane.xlu0 %1556
    %v1558 = vsel %vm88, %v1427, -inf
    %1559 = vmax.xlane.f32.xlu0 %v1558
    %v1560 = vpop.xlane.xlu0 %1559
    %v1561 = vsel %vm88, %v1433, -inf
    %1562 = vmax.xlane.f32.xlu0 %v1561
    %v1563 = vpop.xlane.xlu0 %1562
    %v1564 = vsel %vm88, %v1439, -inf
    %1565 = vmax.xlane.f32.xlu0 %v1564
    %v1566 = vpop.xlane.xlu0 %1565
    %v1567 = vsel %vm88, %v1445, -inf
    %1568 = vmax.xlane.f32.xlu0 %v1567
    %v1569 = vpop.xlane.xlu0 %1568
    %v1570 = vsel %vm1473, %v1403, -inf
    %1571 = vmax.xlane.f32.xlu0 %v1570
    %v1572 = vpop.xlane.xlu0 %1571
    %v1573 = vsel %vm1473, %v1409, -inf
    %1574 = vmax.xlane.f32.xlu0 %v1573
    %v1575 = vpop.xlane.xlu0 %1574
    %v1576 = vsel %vm1473, %v1415, -inf
    %1577 = vmax.xlane.f32.xlu0 %v1576
    %v1578 = vpop.xlane.xlu0 %1577
    %v1579 = vsel %vm1473, %v1421, -inf
    %1580 = vmax.xlane.f32.xlu0 %v1579
    %v1581 = vpop.xlane.xlu0 %1580
    %v1582 = vsel %vm1473, %v1427, -inf
    %1583 = vmax.xlane.f32.xlu0 %v1582
    %v1584 = vpop.xlane.xlu0 %1583
    %v1585 = vsel %vm1473, %v1433, -inf
    %1586 = vmax.xlane.f32.xlu0 %v1585
    %v1587 = vpop.xlane.xlu0 %1586
    %v1588 = vsel %vm1473, %v1439, -inf
    %1589 = vmax.xlane.f32.xlu0 %v1588
    %v1590 = vpop.xlane.xlu0 %1589
    %v1591 = vsel %vm1473, %v1445, -inf
    %1592 = vmax.xlane.f32.xlu0 %v1591
    %v1593 = vpop.xlane.xlu0 %1592
    %v1594 = vsel %vm88, %v1405, -inf
    %1595 = vmax.xlane.f32.xlu0 %v1594
    %v1596 = vpop.xlane.xlu0 %1595
    %v1597 = vsel %vm88, %v1411, -inf
    %1598 = vmax.xlane.f32.xlu0 %v1597
    %v1599 = vpop.xlane.xlu0 %1598
    %v1600 = vsel %vm88, %v1417, -inf
    %1601 = vmax.xlane.f32.xlu0 %v1600
    %v1602 = vpop.xlane.xlu0 %1601
    %v1603 = vsel %vm88, %v1423, -inf
    %1604 = vmax.xlane.f32.xlu0 %v1603
    %v1605 = vpop.xlane.xlu0 %1604
    %v1606 = vsel %vm88, %v1429, -inf
    %1607 = vmax.xlane.f32.xlu0 %v1606
    %v1608 = vpop.xlane.xlu0 %1607
    %v1609 = vsel %vm88, %v1435, -inf
    %1610 = vmax.xlane.f32.xlu0 %v1609
    %v1611 = vpop.xlane.xlu0 %1610
    %v1612 = vsel %vm88, %v1441, -inf
    %1613 = vmax.xlane.f32.xlu0 %v1612
    %v1614 = vpop.xlane.xlu0 %1613
    %v1615 = vsel %vm88, %v1447, -inf
    %1616 = vmax.xlane.f32.xlu0 %v1615
    %v1617 = vpop.xlane.xlu0 %1616
    %v1618 = vsel %vm1473, %v1405, -inf
    %1619 = vmax.xlane.f32.xlu0 %v1618
    %v1620 = vpop.xlane.xlu0 %1619
    %v1621 = vsel %vm1473, %v1411, -inf
    %1622 = vmax.xlane.f32.xlu0 %v1621
    %v1623 = vpop.xlane.xlu0 %1622
    %v1624 = vsel %vm1473, %v1417, -inf
    %1625 = vmax.xlane.f32.xlu0 %v1624
    %v1626 = vpop.xlane.xlu0 %1625
    %v1627 = vsel %vm1473, %v1423, -inf
    %1628 = vmax.xlane.f32.xlu0 %v1627
    %v1629 = vpop.xlane.xlu0 %1628
    %v1630 = vsel %vm1473, %v1429, -inf
    %1631 = vmax.xlane.f32.xlu0 %v1630
    %v1632 = vpop.xlane.xlu0 %1631
    %v1633 = vsel %vm1473, %v1435, -inf
    %1634 = vmax.xlane.f32.xlu0 %v1633
    %v1635 = vpop.xlane.xlu0 %1634
    %v1636 = vsel %vm1473, %v1441, -inf
    %1637 = vmax.xlane.f32.xlu0 %v1636
    %v1638 = vpop.xlane.xlu0 %1637
    %v1639 = vsel %vm1473, %v1447, -inf
    %1640 = vmax.xlane.f32.xlu0 %v1639
    %v1641 = vpop.xlane.xlu0 %1640
    %v1642 = vsel %vm88, %v1451, %v1476
    %v1643 = vsel %vm88, %v1454, %v1479
    %v1644 = vsel %vm88, %v1457, %v1482
    %v1645 = vsel %vm88, %v1460, %v1485
    %v1646 = vsel %vm88, %v1463, %v1488
    %v1647 = vsel %vm88, %v1466, %v1491
    %v1648 = vsel %vm88, %v1469, %v1494
    %v1649 = vsel %vm88, %v1472, %v1497
    %v1650 = vsel %vm88, %v1500, %v1524
    %v1651 = vsel %vm88, %v1503, %v1527
    %v1652 = vsel %vm88, %v1506, %v1530
    %v1653 = vsel %vm88, %v1509, %v1533
    %v1654 = vsel %vm88, %v1512, %v1536
    %v1655 = vsel %vm88, %v1515, %v1539
    %v1656 = vsel %vm88, %v1518, %v1542
    %v1657 = vsel %vm88, %v1521, %v1545
    %v1658 = vsel %vm88, %v1548, %v1572
    %v1659 = vsel %vm88, %v1551, %v1575
    %v1660 = vsel %vm88, %v1554, %v1578
    %v1661 = vsel %vm88, %v1557, %v1581
    %v1662 = vsel %vm88, %v1560, %v1584
    %v1663 = vsel %vm88, %v1563, %v1587
    %v1664 = vsel %vm88, %v1566, %v1590
    %v1665 = vsel %vm88, %v1569, %v1593
    %v1666 = vsel %vm88, %v1596, %v1620
    %v1667 = vsel %vm88, %v1599, %v1623
    %v1668 = vsel %vm88, %v1602, %v1626
    %v1669 = vsel %vm88, %v1605, %v1629
    %v1670 = vsel %vm88, %v1608, %v1632
    %v1671 = vsel %vm88, %v1611, %v1635
    %v1672 = vsel %vm88, %v1614, %v1638
    %v1673 = vsel %vm88, %v1617, %v1641
    %v1674 = vsub.f32 %v1290, %v1642
    %v1675 = vsub.f32 %v1292, %v1650
    %v1676 = vsub.f32 %v1403, %v1658
    %v1677 = vsub.f32 %v1405, %v1666
    %v1678 = vsub.f32 %v1296, %v1643
    %v1679 = vsub.f32 %v1298, %v1651
    %v1680 = vsub.f32 %v1409, %v1659
    %v1681 = vsub.f32 %v1411, %v1667
    %v1682 = vsub.f32 %v1302, %v1644
    %v1683 = vsub.f32 %v1304, %v1652
    %v1684 = vsub.f32 %v1415, %v1660
    %v1685 = vsub.f32 %v1417, %v1668
    %v1686 = vsub.f32 %v1308, %v1645
    %v1687 = vsub.f32 %v1310, %v1653
    %v1688 = vsub.f32 %v1421, %v1661
    %v1689 = vsub.f32 %v1423, %v1669
    %v1690 = vsub.f32 %v1314, %v1646
    %v1691 = vsub.f32 %v1316, %v1654
    %v1692 = vsub.f32 %v1427, %v1662
    %v1693 = vsub.f32 %v1429, %v1670
    %v1694 = vsub.f32 %v1320, %v1647
    %v1695 = vsub.f32 %v1322, %v1655
    %v1696 = vsub.f32 %v1433, %v1663
    %v1697 = vsub.f32 %v1435, %v1671
    %v1698 = vsub.f32 %v1326, %v1648
    %v1699 = vsub.f32 %v1328, %v1656
    %v1700 = vsub.f32 %v1439, %v1664
    %v1701 = vsub.f32 %v1441, %v1672
    %v1702 = vsub.f32 %v1332, %v1649
    %v1703 = vsub.f32 %v1334, %v1657
    %v1704 = vsub.f32 %v1445, %v1665
    %v1705 = vsub.f32 %v1447, %v1673
    %v1706 = vmul.f32 %v1674, 1.442695
    %v1707 = vpow.pop %v1706
    %v1708 = vmul.f32 %v1675, 1.442695
    %v1709 = vpow.pop %v1708
    %v1710 = vmul.f32 %v1676, 1.442695
    %v1711 = vpow.pop %v1710
    %v1712 = vmul.f32 %v1677, 1.442695
    %v1713 = vpow.pop %v1712
    %v1714 = vmul.f32 %v1678, 1.442695
    %v1715 = vpow.pop %v1714
    %v1716 = vmul.f32 %v1679, 1.442695
    %v1717 = vpow.pop %v1716
    %v1718 = vmul.f32 %v1680, 1.442695
    %v1719 = vpow.pop %v1718
    %v1720 = vmul.f32 %v1681, 1.442695
    %v1721 = vpow.pop %v1720
    %v1722 = vmul.f32 %v1682, 1.442695
    %v1723 = vpow.pop %v1722
    %v1724 = vmul.f32 %v1683, 1.442695
    %v1725 = vpow.pop %v1724
    %v1726 = vmul.f32 %v1684, 1.442695
    %v1727 = vpow.pop %v1726
    %v1728 = vmul.f32 %v1685, 1.442695
    %v1729 = vpow.pop %v1728
    %v1730 = vmul.f32 %v1686, 1.442695
    %v1731 = vpow.pop %v1730
    %v1732 = vmul.f32 %v1687, 1.442695
    %v1733 = vpow.pop %v1732
    %v1734 = vmul.f32 %v1688, 1.442695
    %v1735 = vpow.pop %v1734
    %v1736 = vmul.f32 %v1689, 1.442695
    %v1737 = vpow.pop %v1736
    %v1738 = vmul.f32 %v1690, 1.442695
    %v1739 = vpow.pop %v1738
    %v1740 = vmul.f32 %v1691, 1.442695
    %v1741 = vpow.pop %v1740
    %v1742 = vmul.f32 %v1692, 1.442695
    %v1743 = vpow.pop %v1742
    %v1744 = vmul.f32 %v1693, 1.442695
    %v1745 = vpow.pop %v1744
    %v1746 = vmul.f32 %v1694, 1.442695
    %v1747 = vpow.pop %v1746
    %v1748 = vmul.f32 %v1695, 1.442695
    %v1749 = vpow.pop %v1748
    %v1750 = vmul.f32 %v1696, 1.442695
    %v1751 = vpow.pop %v1750
    %v1752 = vmul.f32 %v1697, 1.442695
    %v1753 = vpow.pop %v1752
    %v1754 = vmul.f32 %v1698, 1.442695
    %v1755 = vpow.pop %v1754
    %v1756 = vmul.f32 %v1699, 1.442695
    %v1757 = vpow.pop %v1756
    %v1758 = vmul.f32 %v1700, 1.442695
    %v1759 = vpow.pop %v1758
    %v1760 = vmul.f32 %v1701, 1.442695
    %v1761 = vpow.pop %v1760
    %v1762 = vmul.f32 %v1702, 1.442695
    %v1763 = vpow.pop %v1762
    %v1764 = vmul.f32 %v1703, 1.442695
    %v1765 = vpow.pop %v1764
    %v1766 = vmul.f32 %v1704, 1.442695
    %v1767 = vpow.pop %v1766
    %v1768 = vmul.f32 %v1705, 1.442695
    %v1769 = vpow.pop %v1768
    %1770 = vmatprep.subr.mxu0 0.0
    %1771 = vmatpush1.msra.mxu0 %v569
    %1772 = vmatprep.subr.mxu0 0.0
    %1773 = vmatpush1.msra.mxu0 %v568
    %1774 = vmatprep.subr.mxu0 0.0
    %1775 = vmatpush1.msra.mxu0 %v567
    %1776 = vmatprep.subr.mxu0 0.0
    %1777 = vmatpush1.msra.mxu0 %v566
    %1778 = vmatprep.subr.mxu0 0.0
    %1779 = vmatpush1.msra.mxu0 %v565
    %1780 = vmatprep.subr.mxu0 0.0
    %1781 = vmatpush1.msra.mxu0 %v564
    %1782 = vmatprep.subr.mxu0 0.0
    %1783 = vmatpush1.msra.mxu0 %v563
    %1784 = vmatprep.subr.mxu0 0.0
    %1785 = vmatpush1.msra.mxu0 %v562
    %1786 = vmatprep.subr.mxu0 0.0
    %1787 = vmatpush1.msra.mxu0 %v561
    %1788 = vmatprep.subr.mxu0 0.0
    %1789 = vmatpush1.msra.mxu0 %v560
    %1790 = vmatprep.subr.mxu0 0.0
    %1791 = vmatpush1.msra.mxu0 %v559
    %1792 = vmatprep.subr.mxu0 0.0
    %1793 = vmatpush1.msra.mxu0 %v558
    %1794 = vmatprep.subr.mxu0 0.0
    %1795 = vmatpush1.msra.mxu0 %v557
    %1796 = vmatprep.subr.mxu0 0.0
    %1797 = vmatpush1.msra.mxu0 %v556
    %1798 = vmatprep.subr.mxu0 0.0
    %1799 = vmatpush1.msra.mxu0 %v555
    %1800 = vmatprep.subr.mxu0 0.0
    %1801 = vmatpush1.msra.mxu0 %v554
    %1802 = vmatprep.subr.mxu0 0.0
    %1803 = vmatpush2.msra.mxu0 %v585
    %1804 = vmatprep.subr.mxu0 0.0
    %1805 = vmatpush2.msra.mxu0 %v584
    %1806 = vmatprep.subr.mxu0 0.0
    %1807 = vmatpush2.msra.mxu0 %v583
    %1808 = vmatprep.subr.mxu0 0.0
    %1809 = vmatpush2.msra.mxu0 %v582
    %1810 = vmatprep.subr.mxu0 0.0
    %1811 = vmatpush2.msra.mxu0 %v581
    %1812 = vmatprep.subr.mxu0 0.0
    %1813 = vmatpush2.msra.mxu0 %v580
    %1814 = vmatprep.subr.mxu0 0.0
    %1815 = vmatpush2.msra.mxu0 %v579
    %1816 = vmatprep.subr.mxu0 0.0
    %1817 = vmatpush2.msra.mxu0 %v578
    %1818 = vmatprep.subr.mxu0 0.0
    %1819 = vmatpush2.msra.mxu0 %v577
    %1820 = vmatprep.subr.mxu0 0.0
    %1821 = vmatpush2.msra.mxu0 %v576
    %1822 = vmatprep.subr.mxu0 0.0
    %1823 = vmatpush2.msra.mxu0 %v575
    %1824 = vmatprep.subr.mxu0 0.0
    %1825 = vmatpush2.msra.mxu0 %v574
    %1826 = vmatprep.subr.mxu0 0.0
    %1827 = vmatpush2.msra.mxu0 %v573
    %1828 = vmatprep.subr.mxu0 0.0
    %1829 = vmatpush2.msra.mxu0 %v572
    %1830 = vmatprep.subr.mxu0 0.0
    %1831 = vmatpush2.msra.mxu0 %v571
    %1832 = vmatprep.subr.mxu0 0.0
    %1833 = vmatpush2.msra.mxu0 %v570
    %1834 = vmatprep.mubr.f32.mxu0 %v1709
    %1835 = vmatmul.mubr.f32.gmra.mxu0 %v1707
    %v1836 = vpop.f32.mrf.mxu0
    %v1837 = vadd.f32 0.0, %v1836
    %v1838 = vpop.f32.mrf.mxu0
    %1839 = vmatprep.mubr.f32.mxu0 %v1717
    %1840 = vmatmul.mubr.f32.gmra.mxu0 %v1715
    %v1841 = vpop.f32.mrf.mxu0
    %v1842 = vadd.f32 0.0, %v1841
    %v1843 = vpop.f32.mrf.mxu0
    %1844 = vmatprep.mubr.f32.mxu0 %v1725
    %1845 = vmatmul.mubr.f32.gmra.mxu0 %v1723
    %v1846 = vpop.f32.mrf.mxu0
    %v1847 = vadd.f32 0.0, %v1846
    %v1848 = vpop.f32.mrf.mxu0
    %1849 = vmatprep.mubr.f32.mxu0 %v1733
    %1850 = vmatmul.mubr.f32.gmra.mxu0 %v1731
    %v1851 = vpop.f32.mrf.mxu0
    %v1852 = vadd.f32 0.0, %v1851
    %v1853 = vpop.f32.mrf.mxu0
    %1854 = vmatprep.mubr.f32.mxu0 %v1741
    %1855 = vmatmul.mubr.f32.gmra.mxu0 %v1739
    %v1856 = vpop.f32.mrf.mxu0
    %v1857 = vadd.f32 0.0, %v1856
    %v1858 = vpop.f32.mrf.mxu0
    %1859 = vmatprep.mubr.f32.mxu0 %v1749
    %1860 = vmatmul.mubr.f32.gmra.mxu0 %v1747
    %v1861 = vpop.f32.mrf.mxu0
    %v1862 = vadd.f32 0.0, %v1861
    %v1863 = vpop.f32.mrf.mxu0
    %1864 = vmatprep.mubr.f32.mxu0 %v1757
    %1865 = vmatmul.mubr.f32.gmra.mxu0 %v1755
    %v1866 = vpop.f32.mrf.mxu0
    %v1867 = vadd.f32 0.0, %v1866
    %v1868 = vpop.f32.mrf.mxu0
    %1869 = vmatprep.mubr.f32.mxu0 %v1765
    %1870 = vmatmul.mubr.f32.gmra.mxu0 %v1763
    %v1871 = vpop.f32.mrf.mxu0
    %v1872 = vadd.f32 0.0, %v1871
    %v1873 = vpop.f32.mrf.mxu0
    %1874 = vdwg.mxu0
    %1875 = vmatprep.subr.mxu0 0.0
    %1876 = vmatpush1.msra.mxu0 %v601
    %1877 = vmatprep.subr.mxu0 0.0
    %1878 = vmatpush1.msra.mxu0 %v600
    %1879 = vmatprep.subr.mxu0 0.0
    %1880 = vmatpush1.msra.mxu0 %v599
    %1881 = vmatprep.subr.mxu0 0.0
    %1882 = vmatpush1.msra.mxu0 %v598
    %1883 = vmatprep.subr.mxu0 0.0
    %1884 = vmatpush1.msra.mxu0 %v597
    %1885 = vmatprep.subr.mxu0 0.0
    %1886 = vmatpush1.msra.mxu0 %v596
    %1887 = vmatprep.subr.mxu0 0.0
    %1888 = vmatpush1.msra.mxu0 %v595
    %1889 = vmatprep.subr.mxu0 0.0
    %1890 = vmatpush1.msra.mxu0 %v594
    %1891 = vmatprep.subr.mxu0 0.0
    %1892 = vmatpush1.msra.mxu0 %v593
    %1893 = vmatprep.subr.mxu0 0.0
    %1894 = vmatpush1.msra.mxu0 %v592
    %1895 = vmatprep.subr.mxu0 0.0
    %1896 = vmatpush1.msra.mxu0 %v591
    %1897 = vmatprep.subr.mxu0 0.0
    %1898 = vmatpush1.msra.mxu0 %v590
    %1899 = vmatprep.subr.mxu0 0.0
    %1900 = vmatpush1.msra.mxu0 %v589
    %1901 = vmatprep.subr.mxu0 0.0
    %1902 = vmatpush1.msra.mxu0 %v588
    %1903 = vmatprep.subr.mxu0 0.0
    %1904 = vmatpush1.msra.mxu0 %v587
    %1905 = vmatprep.subr.mxu0 0.0
    %1906 = vmatpush1.msra.mxu0 %v586
    %1907 = vmatprep.subr.mxu0 0.0
    %1908 = vmatpush2.msra.mxu0 %v617
    %1909 = vmatprep.subr.mxu0 0.0
    %1910 = vmatpush2.msra.mxu0 %v616
    %1911 = vmatprep.subr.mxu0 0.0
    %1912 = vmatpush2.msra.mxu0 %v615
    %1913 = vmatprep.subr.mxu0 0.0
    %1914 = vmatpush2.msra.mxu0 %v614
    %1915 = vmatprep.subr.mxu0 0.0
    %1916 = vmatpush2.msra.mxu0 %v613
    %1917 = vmatprep.subr.mxu0 0.0
    %1918 = vmatpush2.msra.mxu0 %v612
    %1919 = vmatprep.subr.mxu0 0.0
    %1920 = vmatpush2.msra.mxu0 %v611
    %1921 = vmatprep.subr.mxu0 0.0
    %1922 = vmatpush2.msra.mxu0 %v610
    %1923 = vmatprep.subr.mxu0 0.0
    %1924 = vmatpush2.msra.mxu0 %v609
    %1925 = vmatprep.subr.mxu0 0.0
    %1926 = vmatpush2.msra.mxu0 %v608
    %1927 = vmatprep.subr.mxu0 0.0
    %1928 = vmatpush2.msra.mxu0 %v607
    %1929 = vmatprep.subr.mxu0 0.0
    %1930 = vmatpush2.msra.mxu0 %v606
    %1931 = vmatprep.subr.mxu0 0.0
    %1932 = vmatpush2.msra.mxu0 %v605
    %1933 = vmatprep.subr.mxu0 0.0
    %1934 = vmatpush2.msra.mxu0 %v604
    %1935 = vmatprep.subr.mxu0 0.0
    %1936 = vmatpush2.msra.mxu0 %v603
    %1937 = vmatprep.subr.mxu0 0.0
    %1938 = vmatpush2.msra.mxu0 %v602
    %1939 = vmatprep.mubr.f32.mxu0 %v1713
    %1940 = vmatmul.mubr.f32.gmra.mxu0 %v1711
    %v1941 = vpop.f32.mrf.mxu0
    %v1942 = vadd.f32 %v1837, %v1941
    %v1943 = vpop.f32.mrf.mxu0
    %1944 = vmatprep.mubr.f32.mxu0 %v1721
    %1945 = vmatmul.mubr.f32.gmra.mxu0 %v1719
    %v1946 = vpop.f32.mrf.mxu0
    %v1947 = vadd.f32 %v1842, %v1946
    %v1948 = vpop.f32.mrf.mxu0
    %1949 = vmatprep.mubr.f32.mxu0 %v1729
    %1950 = vmatmul.mubr.f32.gmra.mxu0 %v1727
    %v1951 = vpop.f32.mrf.mxu0
    %v1952 = vadd.f32 %v1847, %v1951
    %v1953 = vpop.f32.mrf.mxu0
    %1954 = vmatprep.mubr.f32.mxu0 %v1737
    %1955 = vmatmul.mubr.f32.gmra.mxu0 %v1735
    %v1956 = vpop.f32.mrf.mxu0
    %v1957 = vadd.f32 %v1852, %v1956
    %v1958 = vpop.f32.mrf.mxu0
    %1959 = vmatprep.mubr.f32.mxu0 %v1745
    %1960 = vmatmul.mubr.f32.gmra.mxu0 %v1743
    %v1961 = vpop.f32.mrf.mxu0
    %v1962 = vadd.f32 %v1857, %v1961
    %v1963 = vpop.f32.mrf.mxu0
    %1964 = vmatprep.mubr.f32.mxu0 %v1753
    %1965 = vmatmul.mubr.f32.gmra.mxu0 %v1751
    %v1966 = vpop.f32.mrf.mxu0
    %v1967 = vadd.f32 %v1862, %v1966
    %v1968 = vpop.f32.mrf.mxu0
    %1969 = vmatprep.mubr.f32.mxu0 %v1761
    %1970 = vmatmul.mubr.f32.gmra.mxu0 %v1759
    %v1971 = vpop.f32.mrf.mxu0
    %v1972 = vadd.f32 %v1867, %v1971
    %v1973 = vpop.f32.mrf.mxu0
    %1974 = vmatprep.mubr.f32.mxu0 %v1769
    %1975 = vmatmul.mubr.f32.gmra.mxu0 %v1767
    %v1976 = vpop.f32.mrf.mxu0
    %v1977 = vadd.f32 %v1872, %v1976
    %v1978 = vpop.f32.mrf.mxu0
    %1979 = vdwg.mxu0
    %v1980 = vrcp.pop %v1942
    %v1981 = vrcp.pop %v1947
    %v1982 = vrcp.pop %v1952
    %v1983 = vrcp.pop %v1957
    %v1984 = vrcp.pop %v1962
    %v1985 = vrcp.pop %v1967
    %v1986 = vrcp.pop %v1972
    %v1987 = vrcp.pop %v1977
    %vm1988 = vcmask 64512
    %v1990 = vsel %vm1988, %v1980, 0
    %v1993 = vsel %vm1988, %v1981, 0
    %v1996 = vsel %vm1988, %v1982, 0
    %v1999 = vsel %vm1988, %v1983, 0
    %v2002 = vsel %vm1988, %v1984, 0
    %v2005 = vsel %vm1988, %v1985, 0
    %v2008 = vsel %vm1988, %v1986, 0
    %v2011 = vsel %vm1988, %v1987, 0
    %2013 = vmatprep.subr.mxu0 0.0
    %2014 = vmatpush1.msra.mxu0 0.0
    %2015 = vmatprep.subr.mxu0 0.0
    %2016 = vmatpush1.msra.mxu0 0.0
    %2017 = vmatprep.subr.mxu0 0.0
    %2018 = vmatpush1.msra.mxu0 0.0
    %2019 = vmatprep.subr.mxu0 0.0
    %2020 = vmatpush1.msra.mxu0 0.0
    %2021 = vmatprep.subr.mxu0 0.0
    %2022 = vmatpush1.msra.mxu0 0.0
    %2023 = vmatprep.subr.mxu0 0.0
    %2024 = vmatpush1.msra.mxu0 0.0
    %2025 = vmatprep.subr.mxu0 0.0
    %2026 = vmatpush1.msra.mxu0 0.0
    %2027 = vmatprep.subr.mxu0 0.0
    %2028 = vmatpush1.msra.mxu0 0.0
    %2029 = vmatprep.subr.mxu0 0.0
    %2030 = vmatpush1.msra.mxu0 0.0
    %2031 = vmatprep.subr.mxu0 0.0
    %2032 = vmatpush1.msra.mxu0 0.0
    %2033 = vmatprep.subr.mxu0 0.0
    %2034 = vmatpush1.msra.mxu0 0.0
    %2035 = vmatprep.subr.mxu0 0.0
    %2036 = vmatpush1.msra.mxu0 0.0
    %2037 = vmatprep.subr.mxu0 0.0
    %2038 = vmatpush1.msra.mxu0 0.0
    %2039 = vmatprep.subr.mxu0 0.0
    %2040 = vmatpush1.msra.mxu0 0.0
    %2041 = vmatprep.subr.mxu0 0.0
    %2042 = vmatpush1.msra.mxu0 0.0
    %2043 = vmatprep.subr.mxu0 %v619
    %2044 = vmatpush1.msra.mxu0 %v618
    %2045 = vmatprep.subr.mxu0 0.0
    %2046 = vmatpush2.msra.mxu0 0.0
    %2047 = vmatprep.subr.mxu0 0.0
    %2048 = vmatpush2.msra.mxu0 0.0
    %2049 = vmatprep.subr.mxu0 0.0
    %2050 = vmatpush2.msra.mxu0 0.0
    %2051 = vmatprep.subr.mxu0 0.0
    %2052 = vmatpush2.msra.mxu0 0.0
    %2053 = vmatprep.subr.mxu0 0.0
    %2054 = vmatpush2.msra.mxu0 0.0
    %2055 = vmatprep.subr.mxu0 0.0
    %2056 = vmatpush2.msra.mxu0 0.0
    %2057 = vmatprep.subr.mxu0 0.0
    %2058 = vmatpush2.msra.mxu0 0.0
    %2059 = vmatprep.subr.mxu0 0.0
    %2060 = vmatpush2.msra.mxu0 0.0
    %2061 = vmatprep.subr.mxu0 0.0
    %2062 = vmatpush2.msra.mxu0 0.0
    %2063 = vmatprep.subr.mxu0 0.0
    %2064 = vmatpush2.msra.mxu0 0.0
    %2065 = vmatprep.subr.mxu0 0.0
    %2066 = vmatpush2.msra.mxu0 0.0
    %2067 = vmatprep.subr.mxu0 0.0
    %2068 = vmatpush2.msra.mxu0 0.0
    %2069 = vmatprep.subr.mxu0 0.0
    %2070 = vmatpush2.msra.mxu0 0.0
    %2071 = vmatprep.subr.mxu0 0.0
    %2072 = vmatpush2.msra.mxu0 0.0
    %2073 = vmatprep.subr.mxu0 0.0
    %2074 = vmatpush2.msra.mxu0 0.0
    %2075 = vmatprep.subr.mxu0 0.0
    %2076 = vmatpush2.msra.mxu0 0.0
    %2077 = vmatprep.mubr.f32.mxu0 0.0
    %2078 = vmatmul.mubr.f32.gmra.mxu0 %v1990
    %v2079 = vpop.f32.mrf.mxu0
    %v2080 = vadd.f32 0.0, %v2079
    %v2081 = vpop.f32.mrf.mxu0
    %v2082 = vadd.f32 0.0, %v2081
    %2083 = vmatprep.mubr.f32.mxu0 0.0
    %2084 = vmatmul.mubr.f32.gmra.mxu0 %v1993
    %v2085 = vpop.f32.mrf.mxu0
    %v2086 = vadd.f32 0.0, %v2085
    %v2087 = vpop.f32.mrf.mxu0
    %v2088 = vadd.f32 0.0, %v2087
    %2089 = vmatprep.mubr.f32.mxu0 0.0
    %2090 = vmatmul.mubr.f32.gmra.mxu0 %v1996
    %v2091 = vpop.f32.mrf.mxu0
    %v2092 = vadd.f32 0.0, %v2091
    %v2093 = vpop.f32.mrf.mxu0
    %v2094 = vadd.f32 0.0, %v2093
    %2095 = vmatprep.mubr.f32.mxu0 0.0
    %2096 = vmatmul.mubr.f32.gmra.mxu0 %v1999
    %v2097 = vpop.f32.mrf.mxu0
    %v2098 = vadd.f32 0.0, %v2097
    %v2099 = vpop.f32.mrf.mxu0
    %v2100 = vadd.f32 0.0, %v2099
    %2101 = vmatprep.mubr.f32.mxu0 0.0
    %2102 = vmatmul.mubr.f32.gmra.mxu0 %v2002
    %v2103 = vpop.f32.mrf.mxu0
    %v2104 = vadd.f32 0.0, %v2103
    %v2105 = vpop.f32.mrf.mxu0
    %v2106 = vadd.f32 0.0, %v2105
    %2107 = vmatprep.mubr.f32.mxu0 0.0
    %2108 = vmatmul.mubr.f32.gmra.mxu0 %v2005
    %v2109 = vpop.f32.mrf.mxu0
    %v2110 = vadd.f32 0.0, %v2109
    %v2111 = vpop.f32.mrf.mxu0
    %v2112 = vadd.f32 0.0, %v2111
    %2113 = vmatprep.mubr.f32.mxu0 0.0
    %2114 = vmatmul.mubr.f32.gmra.mxu0 %v2008
    %v2115 = vpop.f32.mrf.mxu0
    %v2116 = vadd.f32 0.0, %v2115
    %v2117 = vpop.f32.mrf.mxu0
    %v2118 = vadd.f32 0.0, %v2117
    %2119 = vmatprep.mubr.f32.mxu0 0.0
    %2120 = vmatmul.mubr.f32.gmra.mxu0 %v2011
    %v2121 = vpop.f32.mrf.mxu0
    %v2122 = vadd.f32 0.0, %v2121
    %v2123 = vpop.f32.mrf.mxu0
    %v2124 = vadd.f32 0.0, %v2123
    %2125 = vdwg.mxu0
    %2126 = vmatprep.subr.mxu0 0.0
    %2127 = vmatpush1.msra.mxu0 0.0
    %2128 = vmatprep.subr.mxu0 0.0
    %2129 = vmatpush1.msra.mxu0 0.0
    %2130 = vmatprep.subr.mxu0 0.0
    %2131 = vmatpush1.msra.mxu0 0.0
    %2132 = vmatprep.subr.mxu0 0.0
    %2133 = vmatpush1.msra.mxu0 0.0
    %2134 = vmatprep.subr.mxu0 0.0
    %2135 = vmatpush1.msra.mxu0 0.0
    %2136 = vmatprep.subr.mxu0 0.0
    %2137 = vmatpush1.msra.mxu0 0.0
    %2138 = vmatprep.subr.mxu0 0.0
    %2139 = vmatpush1.msra.mxu0 0.0
    %2140 = vmatprep.subr.mxu0 0.0
    %2141 = vmatpush1.msra.mxu0 0.0
    %2142 = vmatprep.subr.mxu0 0.0
    %2143 = vmatpush1.msra.mxu0 0.0
    %2144 = vmatprep.subr.mxu0 0.0
    %2145 = vmatpush1.msra.mxu0 0.0
    %2146 = vmatprep.subr.mxu0 0.0
    %2147 = vmatpush1.msra.mxu0 0.0
    %2148 = vmatprep.subr.mxu0 0.0
    %2149 = vmatpush1.msra.mxu0 0.0
    %2150 = vmatprep.subr.mxu0 0.0
    %2151 = vmatpush1.msra.mxu0 0.0
    %2152 = vmatprep.subr.mxu0 0.0
    %2153 = vmatpush1.msra.mxu0 0.0
    %2154 = vmatprep.subr.mxu0 0.0
    %2155 = vmatpush1.msra.mxu0 0.0
    %2156 = vmatprep.subr.mxu0 %v621
    %2157 = vmatpush1.msra.mxu0 %v620
    %2158 = vmatprep.subr.mxu0 0.0
    %2159 = vmatpush2.msra.mxu0 0.0
    %2160 = vmatprep.subr.mxu0 0.0
    %2161 = vmatpush2.msra.mxu0 0.0
    %2162 = vmatprep.subr.mxu0 0.0
    %2163 = vmatpush2.msra.mxu0 0.0
    %2164 = vmatprep.subr.mxu0 0.0
    %2165 = vmatpush2.msra.mxu0 0.0
    %2166 = vmatprep.subr.mxu0 0.0
    %2167 = vmatpush2.msra.mxu0 0.0
    %2168 = vmatprep.subr.mxu0 0.0
    %2169 = vmatpush2.msra.mxu0 0.0
    %2170 = vmatprep.subr.mxu0 0.0
    %2171 = vmatpush2.msra.mxu0 0.0
    %2172 = vmatprep.subr.mxu0 0.0
    %2173 = vmatpush2.msra.mxu0 0.0
    %2174 = vmatprep.subr.mxu0 0.0
    %2175 = vmatpush2.msra.mxu0 0.0
    %2176 = vmatprep.subr.mxu0 0.0
    %2177 = vmatpush2.msra.mxu0 0.0
    %2178 = vmatprep.subr.mxu0 0.0
    %2179 = vmatpush2.msra.mxu0 0.0
    %2180 = vmatprep.subr.mxu0 0.0
    %2181 = vmatpush2.msra.mxu0 0.0
    %2182 = vmatprep.subr.mxu0 0.0
    %2183 = vmatpush2.msra.mxu0 0.0
    %2184 = vmatprep.subr.mxu0 0.0
    %2185 = vmatpush2.msra.mxu0 0.0
    %2186 = vmatprep.subr.mxu0 0.0
    %2187 = vmatpush2.msra.mxu0 0.0
    %2188 = vmatprep.subr.mxu0 0.0
    %2189 = vmatpush2.msra.mxu0 0.0
    %2190 = vmatprep.mubr.f32.mxu0 0.0
    %2191 = vmatmul.mubr.f32.gmra.mxu0 %v1990
    %v2192 = vpop.f32.mrf.mxu0
    %v2193 = vadd.f32 0.0, %v2192
    %v2194 = vpop.f32.mrf.mxu0
    %v2195 = vadd.f32 0.0, %v2194
    %2196 = vmatprep.mubr.f32.mxu0 0.0
    %2197 = vmatmul.mubr.f32.gmra.mxu0 %v1993
    %v2198 = vpop.f32.mrf.mxu0
    %v2199 = vadd.f32 0.0, %v2198
    %v2200 = vpop.f32.mrf.mxu0
    %v2201 = vadd.f32 0.0, %v2200
    %2202 = vmatprep.mubr.f32.mxu0 0.0
    %2203 = vmatmul.mubr.f32.gmra.mxu0 %v1996
    %v2204 = vpop.f32.mrf.mxu0
    %v2205 = vadd.f32 0.0, %v2204
    %v2206 = vpop.f32.mrf.mxu0
    %v2207 = vadd.f32 0.0, %v2206
    %2208 = vmatprep.mubr.f32.mxu0 0.0
    %2209 = vmatmul.mubr.f32.gmra.mxu0 %v1999
    %v2210 = vpop.f32.mrf.mxu0
    %v2211 = vadd.f32 0.0, %v2210
    %v2212 = vpop.f32.mrf.mxu0
    %v2213 = vadd.f32 0.0, %v2212
    %2214 = vmatprep.mubr.f32.mxu0 0.0
    %2215 = vmatmul.mubr.f32.gmra.mxu0 %v2002
    %v2216 = vpop.f32.mrf.mxu0
    %v2217 = vadd.f32 0.0, %v2216
    %v2218 = vpop.f32.mrf.mxu0
    %v2219 = vadd.f32 0.0, %v2218
    %2220 = vmatprep.mubr.f32.mxu0 0.0
    %2221 = vmatmul.mubr.f32.gmra.mxu0 %v2005
    %v2222 = vpop.f32.mrf.mxu0
    %v2223 = vadd.f32 0.0, %v2222
    %v2224 = vpop.f32.mrf.mxu0
    %v2225 = vadd.f32 0.0, %v2224
    %2226 = vmatprep.mubr.f32.mxu0 0.0
    %2227 = vmatmul.mubr.f32.gmra.mxu0 %v2008
    %v2228 = vpop.f32.mrf.mxu0
    %v2229 = vadd.f32 0.0, %v2228
    %v2230 = vpop.f32.mrf.mxu0
    %v2231 = vadd.f32 0.0, %v2230
    %2232 = vmatprep.mubr.f32.mxu0 0.0
    %2233 = vmatmul.mubr.f32.gmra.mxu0 %v2011
    %v2234 = vpop.f32.mrf.mxu0
    %v2235 = vadd.f32 0.0, %v2234
    %v2236 = vpop.f32.mrf.mxu0
    %v2237 = vadd.f32 0.0, %v2236
    %2238 = vdwg.mxu0
    %v2239 = vmul.f32 %v1707, %v2080
    %v2240 = vmul.f32 %v1709, %v2082
    %v2241 = vmul.f32 %v1711, %v2193
    %v2242 = vmul.f32 %v1713, %v2195
    %v2243 = vmul.f32 %v1715, %v2086
    %v2244 = vmul.f32 %v1717, %v2088
    %v2245 = vmul.f32 %v1719, %v2199
    %v2246 = vmul.f32 %v1721, %v2201
    %v2247 = vmul.f32 %v1723, %v2092
    %v2248 = vmul.f32 %v1725, %v2094
    %v2249 = vmul.f32 %v1727, %v2205
    %v2250 = vmul.f32 %v1729, %v2207
    %v2251 = vmul.f32 %v1731, %v2098
    %v2252 = vmul.f32 %v1733, %v2100
    %v2253 = vmul.f32 %v1735, %v2211
    %v2254 = vmul.f32 %v1737, %v2213
    %v2255 = vmul.f32 %v1739, %v2104
    %v2256 = vmul.f32 %v1741, %v2106
    %v2257 = vmul.f32 %v1743, %v2217
    %v2258 = vmul.f32 %v1745, %v2219
    %v2259 = vmul.f32 %v1747, %v2110
    %v2260 = vmul.f32 %v1749, %v2112
    %v2261 = vmul.f32 %v1751, %v2223
    %v2262 = vmul.f32 %v1753, %v2225
    %v2263 = vmul.f32 %v1755, %v2116
    %v2264 = vmul.f32 %v1757, %v2118
    %v2265 = vmul.f32 %v1759, %v2229
    %v2266 = vmul.f32 %v1761, %v2231
    %v2267 = vmul.f32 %v1763, %v2122
    %v2268 = vmul.f32 %v1765, %v2124
    %v2269 = vmul.f32 %v1767, %v2235
    %v2270 = vmul.f32 %v1769, %v2237
    %2271 = vst [vmem:[#allocation2] sm:$0xff] %v2239
    %2272 = vst [vmem:[#allocation2 + $0x8] sm:$0xff] %v2240
    %2273 = vst [vmem:[#allocation2 + $0x10] sm:$0xff] %v2241
    %2274 = vst [vmem:[#allocation2 + $0x18] sm:$0xff] %v2242
    %2275 = vst [vmem:[#allocation2 + $0x20] sm:$0xff] %v2243
    %2276 = vst [vmem:[#allocation2 + $0x28] sm:$0xff] %v2244
    %2277 = vst [vmem:[#allocation2 + $0x30] sm:$0xff] %v2245
    %2278 = vst [vmem:[#allocation2 + $0x38] sm:$0xff] %v2246
    %2279 = vst [vmem:[#allocation2 + $0x40] sm:$0xff] %v2247
    %2280 = vst [vmem:[#allocation2 + $0x48] sm:$0xff] %v2248
    %2281 = vst [vmem:[#allocation2 + $0x50] sm:$0xff] %v2249
    %2282 = vst [vmem:[#allocation2 + $0x58] sm:$0xff] %v2250
    %2283 = vst [vmem:[#allocation2 + $0x60] sm:$0xff] %v2251
    %2284 = vst [vmem:[#allocation2 + $0x68] sm:$0xff] %v2252
    %2285 = vst [vmem:[#allocation2 + $0x70] sm:$0xff] %v2253
    %2286 = vst [vmem:[#allocation2 + $0x78] sm:$0xff] %v2254
    %2287 = vst [vmem:[#allocation2 + $0x80] sm:$0xff] %v2255
    %2288 = vst [vmem:[#allocation2 + $0x88] sm:$0xff] %v2256
    %2289 = vst [vmem:[#allocation2 + $0x90] sm:$0xff] %v2257
    %2290 = vst [vmem:[#allocation2 + $0x98] sm:$0xff] %v2258
    %2291 = vst [vmem:[#allocation2 + $0xa0] sm:$0xff] %v2259
    %2292 = vst [vmem:[#allocation2 + $0xa8] sm:$0xff] %v2260
    %2293 = vst [vmem:[#allocation2 + $0xb0] sm:$0xff] %v2261
    %2294 = vst [vmem:[#allocation2 + $0xb8] sm:$0xff] %v2262
    %2295 = vst [vmem:[#allocation2 + $0xc0] sm:$0xff] %v2263
    %2296 = vst [vmem:[#allocation2 + $0xc8] sm:$0xff] %v2264
    %2297 = vst [vmem:[#allocation2 + $0xd0] sm:$0xff] %v2265
    %2298 = vst [vmem:[#allocation2 + $0xd8] sm:$0xff] %v2266
    %2299 = vst [vmem:[#allocation2 + $0xe0] sm:$0xff] %v2267
    %2300 = vst [vmem:[#allocation2 + $0xe8] sm:$0xff] %v2268
    %2301 = vst [vmem:[#allocation2 + $0xf0] sm:$0xff] %v2269
    %2302 = vst [vmem:[#allocation2 + $0xf8] sm:$0xff] %v2270
    %2367 = vrot.lane.b32.xlu0 %v942, 96
    %v2368 = vpop.permute.xlu0 %2367
    %2369 = vrot.lane.b32.xlu0 %v943, 96
    %v2370 = vpop.permute.xlu0 %2369
    %2371 = vrot.lane.b32.xlu0 %v944, 96
    %v2372 = vpop.permute.xlu0 %2371
    %2373 = vrot.lane.b32.xlu0 %v945, 96
    %v2374 = vpop.permute.xlu0 %2373
    %2375 = vrot.lane.b32.xlu0 %v946, 96
    %v2376 = vpop.permute.xlu0 %2375
    %2377 = vrot.lane.b32.xlu0 %v947, 96
    %v2378 = vpop.permute.xlu0 %2377
    %2379 = vrot.lane.b32.xlu0 %v948, 96
    %v2380 = vpop.permute.xlu0 %2379
    %2381 = vrot.lane.b32.xlu0 %v949, 96
    %v2382 = vpop.permute.xlu0 %2381
    %2383 = vrot.lane.b32.xlu0 %v950, 96
    %v2384 = vpop.permute.xlu0 %2383
    %2385 = vrot.lane.b32.xlu0 %v951, 96
    %v2386 = vpop.permute.xlu0 %2385
    %2387 = vrot.lane.b32.xlu0 %v952, 96
    %v2388 = vpop.permute.xlu0 %2387
    %2389 = vrot.lane.b32.xlu0 %v953, 96
    %v2390 = vpop.permute.xlu0 %2389
    %2391 = vrot.lane.b32.xlu0 %v954, 96
    %v2392 = vpop.permute.xlu0 %2391
    %2393 = vrot.lane.b32.xlu0 %v955, 96
    %v2394 = vpop.permute.xlu0 %2393
    %2395 = vrot.lane.b32.xlu0 %v956, 96
    %v2396 = vpop.permute.xlu0 %2395
    %2397 = vrot.lane.b32.xlu0 %v957, 96
    %v2398 = vpop.permute.xlu0 %2397
    %2399 = vrot.lane.b32.xlu0 %v958, 96
    %v2400 = vpop.permute.xlu0 %2399
    %2401 = vrot.lane.b32.xlu0 %v959, 96
    %v2402 = vpop.permute.xlu0 %2401
    %2403 = vrot.lane.b32.xlu0 %v960, 96
    %v2404 = vpop.permute.xlu0 %2403
    %2405 = vrot.lane.b32.xlu0 %v961, 96
    %v2406 = vpop.permute.xlu0 %2405
    %2407 = vrot.lane.b32.xlu0 %v962, 96
    %v2408 = vpop.permute.xlu0 %2407
    %2409 = vrot.lane.b32.xlu0 %v963, 96
    %v2410 = vpop.permute.xlu0 %2409
    %2411 = vrot.lane.b32.xlu0 %v964, 96
    %v2412 = vpop.permute.xlu0 %2411
    %2413 = vrot.lane.b32.xlu0 %v965, 96
    %v2414 = vpop.permute.xlu0 %2413
    %2415 = vrot.lane.b32.xlu0 %v966, 96
    %v2416 = vpop.permute.xlu0 %2415
    %2417 = vrot.lane.b32.xlu0 %v967, 96
    %v2418 = vpop.permute.xlu0 %2417
    %2419 = vrot.lane.b32.xlu0 %v968, 96
    %v2420 = vpop.permute.xlu0 %2419
    %2421 = vrot.lane.b32.xlu0 %v969, 96
    %v2422 = vpop.permute.xlu0 %2421
    %2423 = vrot.lane.b32.xlu0 %v970, 96
    %v2424 = vpop.permute.xlu0 %2423
    %2425 = vrot.lane.b32.xlu0 %v971, 96
    %v2426 = vpop.permute.xlu0 %2425
    %2427 = vrot.lane.b32.xlu0 %v972, 96
    %v2428 = vpop.permute.xlu0 %2427
    %2429 = vrot.lane.b32.xlu0 %v973, 96
    %v2430 = vpop.permute.xlu0 %2429
    %2431 = vrot.lane.b32.xlu0 %v974, 96
    %v2432 = vpop.permute.xlu0 %2431
    %2433 = vrot.lane.b32.xlu0 %v975, 96
    %v2434 = vpop.permute.xlu0 %2433
    %2435 = vrot.lane.b32.xlu0 %v976, 96
    %v2436 = vpop.permute.xlu0 %2435
    %2437 = vrot.lane.b32.xlu0 %v977, 96
    %v2438 = vpop.permute.xlu0 %2437
    %2439 = vrot.lane.b32.xlu0 %v978, 96
    %v2440 = vpop.permute.xlu0 %2439
    %2441 = vrot.lane.b32.xlu0 %v979, 96
    %v2442 = vpop.permute.xlu0 %2441
    %2443 = vrot.lane.b32.xlu0 %v980, 96
    %v2444 = vpop.permute.xlu0 %2443
    %2445 = vrot.lane.b32.xlu0 %v981, 96
    %v2446 = vpop.permute.xlu0 %2445
    %2447 = vrot.lane.b32.xlu0 %v982, 96
    %v2448 = vpop.permute.xlu0 %2447
    %2449 = vrot.lane.b32.xlu0 %v983, 96
    %v2450 = vpop.permute.xlu0 %2449
    %2451 = vrot.lane.b32.xlu0 %v984, 96
    %v2452 = vpop.permute.xlu0 %2451
    %2453 = vrot.lane.b32.xlu0 %v985, 96
    %v2454 = vpop.permute.xlu0 %2453
    %2455 = vrot.lane.b32.xlu0 %v986, 96
    %v2456 = vpop.permute.xlu0 %2455
    %2457 = vrot.lane.b32.xlu0 %v987, 96
    %v2458 = vpop.permute.xlu0 %2457
    %2459 = vrot.lane.b32.xlu0 %v988, 96
    %v2460 = vpop.permute.xlu0 %2459
    %2461 = vrot.lane.b32.xlu0 %v989, 96
    %v2462 = vpop.permute.xlu0 %2461
    %2463 = vrot.lane.b32.xlu0 %v990, 96
    %v2464 = vpop.permute.xlu0 %2463
    %2465 = vrot.lane.b32.xlu0 %v991, 96
    %v2466 = vpop.permute.xlu0 %2465
    %2467 = vrot.lane.b32.xlu0 %v992, 96
    %v2468 = vpop.permute.xlu0 %2467
    %2469 = vrot.lane.b32.xlu0 %v993, 96
    %v2470 = vpop.permute.xlu0 %2469
    %2471 = vrot.lane.b32.xlu0 %v994, 96
    %v2472 = vpop.permute.xlu0 %2471
    %2473 = vrot.lane.b32.xlu0 %v995, 96
    %v2474 = vpop.permute.xlu0 %2473
    %2475 = vrot.lane.b32.xlu0 %v996, 96
    %v2476 = vpop.permute.xlu0 %2475
    %2477 = vrot.lane.b32.xlu0 %v997, 96
    %v2478 = vpop.permute.xlu0 %2477
    %2479 = vrot.lane.b32.xlu0 %v998, 96
    %v2480 = vpop.permute.xlu0 %2479
    %2481 = vrot.lane.b32.xlu0 %v999, 96
    %v2482 = vpop.permute.xlu0 %2481
    %2483 = vrot.lane.b32.xlu0 %v1000, 96
    %v2484 = vpop.permute.xlu0 %2483
    %2485 = vrot.lane.b32.xlu0 %v1001, 96
    %v2486 = vpop.permute.xlu0 %2485
    %2487 = vrot.lane.b32.xlu0 %v1002, 96
    %v2488 = vpop.permute.xlu0 %2487
    %2489 = vrot.lane.b32.xlu0 %v1003, 96
    %v2490 = vpop.permute.xlu0 %2489
    %2491 = vrot.lane.b32.xlu0 %v1004, 96
    %v2492 = vpop.permute.xlu0 %2491
    %2493 = vrot.lane.b32.xlu0 %v1005, 96
    %v2494 = vpop.permute.xlu0 %2493
    %2559 = vmatprep.subr.mxu0 0.0
    %2560 = vmatpush1.msra.mxu0 %v2398
    %2561 = vmatprep.subr.mxu0 0.0
    %2562 = vmatpush1.msra.mxu0 %v2396
    %2563 = vmatprep.subr.mxu0 0.0
    %2564 = vmatpush1.msra.mxu0 %v2394
    %2565 = vmatprep.subr.mxu0 0.0
    %2566 = vmatpush1.msra.mxu0 %v2392
    %2567 = vmatprep.subr.mxu0 0.0
    %2568 = vmatpush1.msra.mxu0 %v2390
    %2569 = vmatprep.subr.mxu0 0.0
    %2570 = vmatpush1.msra.mxu0 %v2388
    %2571 = vmatprep.subr.mxu0 0.0
    %2572 = vmatpush1.msra.mxu0 %v2386
    %2573 = vmatprep.subr.mxu0 0.0
    %2574 = vmatpush1.msra.mxu0 %v2384
    %2575 = vmatprep.subr.mxu0 0.0
    %2576 = vmatpush1.msra.mxu0 %v2382
    %2577 = vmatprep.subr.mxu0 0.0
    %2578 = vmatpush1.msra.mxu0 %v2380
    %2579 = vmatprep.subr.mxu0 0.0
    %2580 = vmatpush1.msra.mxu0 %v2378
    %2581 = vmatprep.subr.mxu0 0.0
    %2582 = vmatpush1.msra.mxu0 %v2376
    %2583 = vmatprep.subr.mxu0 0.0
    %2584 = vmatpush1.msra.mxu0 %v2374
    %2585 = vmatprep.subr.mxu0 0.0
    %2586 = vmatpush1.msra.mxu0 %v2372
    %2587 = vmatprep.subr.mxu0 0.0
    %2588 = vmatpush1.msra.mxu0 %v2370
    %2589 = vmatprep.subr.mxu0 0.0
    %2590 = vmatpush1.msra.mxu0 %v2368
    %2591 = vmatprep.subr.mxu0 0.0
    %2592 = vmatpush2.msra.mxu0 %v2430
    %2593 = vmatprep.subr.mxu0 0.0
    %2594 = vmatpush2.msra.mxu0 %v2428
    %2595 = vmatprep.subr.mxu0 0.0
    %2596 = vmatpush2.msra.mxu0 %v2426
    %2597 = vmatprep.subr.mxu0 0.0
    %2598 = vmatpush2.msra.mxu0 %v2424
    %2599 = vmatprep.subr.mxu0 0.0
    %2600 = vmatpush2.msra.mxu0 %v2422
    %2601 = vmatprep.subr.mxu0 0.0
    %2602 = vmatpush2.msra.mxu0 %v2420
    %2603 = vmatprep.subr.mxu0 0.0
    %2604 = vmatpush2.msra.mxu0 %v2418
    %2605 = vmatprep.subr.mxu0 0.0
    %2606 = vmatpush2.msra.mxu0 %v2416
    %2607 = vmatprep.subr.mxu0 0.0
    %2608 = vmatpush2.msra.mxu0 %v2414
    %2609 = vmatprep.subr.mxu0 0.0
    %2610 = vmatpush2.msra.mxu0 %v2412
    %2611 = vmatprep.subr.mxu0 0.0
    %2612 = vmatpush2.msra.mxu0 %v2410
    %2613 = vmatprep.subr.mxu0 0.0
    %2614 = vmatpush2.msra.mxu0 %v2408
    %2615 = vmatprep.subr.mxu0 0.0
    %2616 = vmatpush2.msra.mxu0 %v2406
    %2617 = vmatprep.subr.mxu0 0.0
    %2618 = vmatpush2.msra.mxu0 %v2404
    %2619 = vmatprep.subr.mxu0 0.0
    %2620 = vmatpush2.msra.mxu0 %v2402
    %2621 = vmatprep.subr.mxu0 0.0
    %2622 = vmatpush2.msra.mxu0 %v2400
    %2623 = vmatprep.mubr.f32.mxu0 %v2240
    %2624 = vmatmul.mubr.f32.gmra.mxu0 %v2239
    %v2625 = vpop.f32.mrf.mxu0
    %v2626 = vadd.f32 0.0, %v2625
    %v2627 = vpop.f32.mrf.mxu0
    %2628 = vmatprep.mubr.f32.mxu0 %v2244
    %2629 = vmatmul.mubr.f32.gmra.mxu0 %v2243
    %v2630 = vpop.f32.mrf.mxu0
    %v2631 = vadd.f32 0.0, %v2630
    %v2632 = vpop.f32.mrf.mxu0
    %2633 = vmatprep.mubr.f32.mxu0 %v2248
    %2634 = vmatmul.mubr.f32.gmra.mxu0 %v2247
    %v2635 = vpop.f32.mrf.mxu0
    %v2636 = vadd.f32 0.0, %v2635
    %v2637 = vpop.f32.mrf.mxu0
    %2638 = vmatprep.mubr.f32.mxu0 %v2252
    %2639 = vmatmul.mubr.f32.gmra.mxu0 %v2251
    %v2640 = vpop.f32.mrf.mxu0
    %v2641 = vadd.f32 0.0, %v2640
    %v2642 = vpop.f32.mrf.mxu0
    %2643 = vmatprep.mubr.f32.mxu0 %v2256
    %2644 = vmatmul.mubr.f32.gmra.mxu0 %v2255
    %v2645 = vpop.f32.mrf.mxu0
    %v2646 = vadd.f32 0.0, %v2645
    %v2647 = vpop.f32.mrf.mxu0
    %2648 = vmatprep.mubr.f32.mxu0 %v2260
    %2649 = vmatmul.mubr.f32.gmra.mxu0 %v2259
    %v2650 = vpop.f32.mrf.mxu0
    %v2651 = vadd.f32 0.0, %v2650
    %v2652 = vpop.f32.mrf.mxu0
    %2653 = vmatprep.mubr.f32.mxu0 %v2264
    %2654 = vmatmul.mubr.f32.gmra.mxu0 %v2263
    %v2655 = vpop.f32.mrf.mxu0
    %v2656 = vadd.f32 0.0, %v2655
    %v2657 = vpop.f32.mrf.mxu0
    %2658 = vmatprep.mubr.f32.mxu0 %v2268
    %2659 = vmatmul.mubr.f32.gmra.mxu0 %v2267
    %v2660 = vpop.f32.mrf.mxu0
    %v2661 = vadd.f32 0.0, %v2660
    %v2662 = vpop.f32.mrf.mxu0
    %2663 = vdwg.mxu0
    %2664 = vmatprep.subr.mxu0 0.0
    %2665 = vmatpush1.msra.mxu0 %v2462
    %2666 = vmatprep.subr.mxu0 0.0
    %2667 = vmatpush1.msra.mxu0 %v2460
    %2668 = vmatprep.subr.mxu0 0.0
    %2669 = vmatpush1.msra.mxu0 %v2458
    %2670 = vmatprep.subr.mxu0 0.0
    %2671 = vmatpush1.msra.mxu0 %v2456
    %2672 = vmatprep.subr.mxu0 0.0
    %2673 = vmatpush1.msra.mxu0 %v2454
    %2674 = vmatprep.subr.mxu0 0.0
    %2675 = vmatpush1.msra.mxu0 %v2452
    %2676 = vmatprep.subr.mxu0 0.0
    %2677 = vmatpush1.msra.mxu0 %v2450
    %2678 = vmatprep.subr.mxu0 0.0
    %2679 = vmatpush1.msra.mxu0 %v2448
    %2680 = vmatprep.subr.mxu0 0.0
    %2681 = vmatpush1.msra.mxu0 %v2446
    %2682 = vmatprep.subr.mxu0 0.0
    %2683 = vmatpush1.msra.mxu0 %v2444
    %2684 = vmatprep.subr.mxu0 0.0
    %2685 = vmatpush1.msra.mxu0 %v2442
    %2686 = vmatprep.subr.mxu0 0.0
    %2687 = vmatpush1.msra.mxu0 %v2440
    %2688 = vmatprep.subr.mxu0 0.0
    %2689 = vmatpush1.msra.mxu0 %v2438
    %2690 = vmatprep.subr.mxu0 0.0
    %2691 = vmatpush1.msra.mxu0 %v2436
    %2692 = vmatprep.subr.mxu0 0.0
    %2693 = vmatpush1.msra.mxu0 %v2434
    %2694 = vmatprep.subr.mxu0 0.0
    %2695 = vmatpush1.msra.mxu0 %v2432
    %2696 = vmatprep.subr.mxu0 0.0
    %2697 = vmatpush2.msra.mxu0 %v2494
    %2698 = vmatprep.subr.mxu0 0.0
    %2699 = vmatpush2.msra.mxu0 %v2492
    %2700 = vmatprep.subr.mxu0 0.0
    %2701 = vmatpush2.msra.mxu0 %v2490
    %2702 = vmatprep.subr.mxu0 0.0
    %2703 = vmatpush2.msra.mxu0 %v2488
    %2704 = vmatprep.subr.mxu0 0.0
    %2705 = vmatpush2.msra.mxu0 %v2486
    %2706 = vmatprep.subr.mxu0 0.0
    %2707 = vmatpush2.msra.mxu0 %v2484
    %2708 = vmatprep.subr.mxu0 0.0
    %2709 = vmatpush2.msra.mxu0 %v2482
    %2710 = vmatprep.subr.mxu0 0.0
    %2711 = vmatpush2.msra.mxu0 %v2480
    %2712 = vmatprep.subr.mxu0 0.0
    %2713 = vmatpush2.msra.mxu0 %v2478
    %2714 = vmatprep.subr.mxu0 0.0
    %2715 = vmatpush2.msra.mxu0 %v2476
    %2716 = vmatprep.subr.mxu0 0.0
    %2717 = vmatpush2.msra.mxu0 %v2474
    %2718 = vmatprep.subr.mxu0 0.0
    %2719 = vmatpush2.msra.mxu0 %v2472
    %2720 = vmatprep.subr.mxu0 0.0
    %2721 = vmatpush2.msra.mxu0 %v2470
    %2722 = vmatprep.subr.mxu0 0.0
    %2723 = vmatpush2.msra.mxu0 %v2468
    %2724 = vmatprep.subr.mxu0 0.0
    %2725 = vmatpush2.msra.mxu0 %v2466
    %2726 = vmatprep.subr.mxu0 0.0
    %2727 = vmatpush2.msra.mxu0 %v2464
    %2728 = vmatprep.mubr.f32.mxu0 %v2242
    %2729 = vmatmul.mubr.f32.gmra.mxu0 %v2241
    %v2730 = vpop.f32.mrf.mxu0
    %v2731 = vadd.f32 %v2626, %v2730
    %v2732 = vpop.f32.mrf.mxu0
    %2733 = vmatprep.mubr.f32.mxu0 %v2246
    %2734 = vmatmul.mubr.f32.gmra.mxu0 %v2245
    %v2735 = vpop.f32.mrf.mxu0
    %v2736 = vadd.f32 %v2631, %v2735
    %v2737 = vpop.f32.mrf.mxu0
    %2738 = vmatprep.mubr.f32.mxu0 %v2250
    %2739 = vmatmul.mubr.f32.gmra.mxu0 %v2249
    %v2740 = vpop.f32.mrf.mxu0
    %v2741 = vadd.f32 %v2636, %v2740
    %v2742 = vpop.f32.mrf.mxu0
    %2743 = vmatprep.mubr.f32.mxu0 %v2254
    %2744 = vmatmul.mubr.f32.gmra.mxu0 %v2253
    %v2745 = vpop.f32.mrf.mxu0
    %v2746 = vadd.f32 %v2641, %v2745
    %v2747 = vpop.f32.mrf.mxu0
    %2748 = vmatprep.mubr.f32.mxu0 %v2258
    %2749 = vmatmul.mubr.f32.gmra.mxu0 %v2257
    %v2750 = vpop.f32.mrf.mxu0
    %v2751 = vadd.f32 %v2646, %v2750
    %v2752 = vpop.f32.mrf.mxu0
    %2753 = vmatprep.mubr.f32.mxu0 %v2262
    %2754 = vmatmul.mubr.f32.gmra.mxu0 %v2261
    %v2755 = vpop.f32.mrf.mxu0
    %v2756 = vadd.f32 %v2651, %v2755
    %v2757 = vpop.f32.mrf.mxu0
    %2758 = vmatprep.mubr.f32.mxu0 %v2266
    %2759 = vmatmul.mubr.f32.gmra.mxu0 %v2265
    %v2760 = vpop.f32.mrf.mxu0
    %v2761 = vadd.f32 %v2656, %v2760
    %v2762 = vpop.f32.mrf.mxu0
    %2763 = vmatprep.mubr.f32.mxu0 %v2270
    %2764 = vmatmul.mubr.f32.gmra.mxu0 %v2269
    %v2765 = vpop.f32.mrf.mxu0
    %v2766 = vadd.f32 %v2661, %v2765
    %v2767 = vpop.f32.mrf.mxu0
    %2768 = vdwg.mxu0
    %v2769 = vmul.f32 %v452, %v490
    %v2770 = vmul.f32 %v457, %v491
    %v2771 = vmul.f32 %v462, %v492
    %v2772 = vmul.f32 %v467, %v493
    %v2773 = vmul.f32 %v472, %v494
    %v2774 = vmul.f32 %v477, %v495
    %v2775 = vmul.f32 %v482, %v496
    %v2776 = vmul.f32 %v487, %v497
    %v2777 = vmul.f32 %v452, %v498
    %v2778 = vmul.f32 %v457, %v499
    %v2779 = vmul.f32 %v462, %v500
    %v2780 = vmul.f32 %v467, %v501
    %v2781 = vmul.f32 %v472, %v502
    %v2782 = vmul.f32 %v477, %v503
    %v2783 = vmul.f32 %v482, %v504
    %v2784 = vmul.f32 %v487, %v505
    %v2785 = vmul.f32 %v452, %v506
    %v2786 = vmul.f32 %v457, %v507
    %v2787 = vmul.f32 %v462, %v508
    %v2788 = vmul.f32 %v467, %v509
    %v2789 = vmul.f32 %v472, %v510
    %v2790 = vmul.f32 %v477, %v511
    %v2791 = vmul.f32 %v482, %v512
    %v2792 = vmul.f32 %v487, %v513
    %v2793 = vmul.f32 %v452, %v514
    %v2794 = vmul.f32 %v457, %v515
    %v2795 = vmul.f32 %v462, %v516
    %v2796 = vmul.f32 %v467, %v517
    %v2797 = vmul.f32 %v472, %v518
    %v2798 = vmul.f32 %v477, %v519
    %v2799 = vmul.f32 %v482, %v520
    %v2800 = vmul.f32 %v487, %v521
    %v2801 = vmul.f32 %v452, %v522
    %v2802 = vmul.f32 %v457, %v523
    %v2803 = vmul.f32 %v462, %v524
    %v2804 = vmul.f32 %v467, %v525
    %v2805 = vmul.f32 %v472, %v526
    %v2806 = vmul.f32 %v477, %v527
    %v2807 = vmul.f32 %v482, %v528
    %v2808 = vmul.f32 %v487, %v529
    %v2809 = vmul.f32 %v452, %v530
    %v2810 = vmul.f32 %v457, %v531
    %v2811 = vmul.f32 %v462, %v532
    %v2812 = vmul.f32 %v467, %v533
    %v2813 = vmul.f32 %v472, %v534
    %v2814 = vmul.f32 %v477, %v535
    %v2815 = vmul.f32 %v482, %v536
    %v2816 = vmul.f32 %v487, %v537
    %v2817 = vmul.f32 %v452, %v538
    %v2818 = vmul.f32 %v457, %v539
    %v2819 = vmul.f32 %v462, %v540
    %v2820 = vmul.f32 %v467, %v541
    %v2821 = vmul.f32 %v472, %v542
    %v2822 = vmul.f32 %v477, %v543
    %v2823 = vmul.f32 %v482, %v544
    %v2824 = vmul.f32 %v487, %v545
    %v2825 = vmul.f32 %v452, %v546
    %v2826 = vmul.f32 %v457, %v547
    %v2827 = vmul.f32 %v462, %v548
    %v2828 = vmul.f32 %v467, %v549
    %v2829 = vmul.f32 %v472, %v550
    %v2830 = vmul.f32 %v477, %v551
    %v2831 = vmul.f32 %v482, %v552
    %v2832 = vmul.f32 %v487, %v553
    %v2833 = vmul.f32 %v452, %v751
    %v2834 = vmul.f32 %v457, %v753
    %v2835 = vmul.f32 %v462, %v755
    %v2836 = vmul.f32 %v467, %v757
    %v2837 = vmul.f32 %v472, %v759
    %v2838 = vmul.f32 %v477, %v761
    %v2839 = vmul.f32 %v482, %v763
    %v2840 = vmul.f32 %v487, %v765
    %v2841 = vmul.f32 %v452, %v767
    %v2842 = vmul.f32 %v457, %v769
    %v2843 = vmul.f32 %v462, %v771
    %v2844 = vmul.f32 %v467, %v773
    %v2845 = vmul.f32 %v472, %v775
    %v2846 = vmul.f32 %v477, %v777
    %v2847 = vmul.f32 %v482, %v779
    %v2848 = vmul.f32 %v487, %v781
    %v2849 = vmul.f32 %v452, %v783
    %v2850 = vmul.f32 %v457, %v785
    %v2851 = vmul.f32 %v462, %v787
    %v2852 = vmul.f32 %v467, %v789
    %v2853 = vmul.f32 %v472, %v791
    %v2854 = vmul.f32 %v477, %v793
    %v2855 = vmul.f32 %v482, %v795
    %v2856 = vmul.f32 %v487, %v797
    %v2857 = vmul.f32 %v452, %v799
    %v2858 = vmul.f32 %v457, %v801
    %v2859 = vmul.f32 %v462, %v803
    %v2860 = vmul.f32 %v467, %v805
    %v2861 = vmul.f32 %v472, %v807
    %v2862 = vmul.f32 %v477, %v809
    %v2863 = vmul.f32 %v482, %v811
    %v2864 = vmul.f32 %v487, %v813
    %v2865 = vmul.f32 %v452, %v815
    %v2866 = vmul.f32 %v457, %v817
    %v2867 = vmul.f32 %v462, %v819
    %v2868 = vmul.f32 %v467, %v821
    %v2869 = vmul.f32 %v472, %v823
    %v2870 = vmul.f32 %v477, %v825
    %v2871 = vmul.f32 %v482, %v827
    %v2872 = vmul.f32 %v487, %v829
    %v2873 = vmul.f32 %v452, %v831
    %v2874 = vmul.f32 %v457, %v833
    %v2875 = vmul.f32 %v462, %v835
    %v2876 = vmul.f32 %v467, %v837
    %v2877 = vmul.f32 %v472, %v839
    %v2878 = vmul.f32 %v477, %v841
    %v2879 = vmul.f32 %v482, %v843
    %v2880 = vmul.f32 %v487, %v845
    %v2881 = vmul.f32 %v452, %v847
    %v2882 = vmul.f32 %v457, %v849
    %v2883 = vmul.f32 %v462, %v851
    %v2884 = vmul.f32 %v467, %v853
    %v2885 = vmul.f32 %v472, %v855
    %v2886 = vmul.f32 %v477, %v857
    %v2887 = vmul.f32 %v482, %v859
    %v2888 = vmul.f32 %v487, %v861
    %v2889 = vmul.f32 %v452, %v863
    %v2890 = vmul.f32 %v457, %v865
    %v2891 = vmul.f32 %v462, %v867
    %v2892 = vmul.f32 %v467, %v869
    %v2893 = vmul.f32 %v472, %v871
    %v2894 = vmul.f32 %v477, %v873
    %v2895 = vmul.f32 %v482, %v875
    %v2896 = vmul.f32 %v487, %v877
    %v2898 = vsel %vm1006, %v244, 0
    %v2901 = vsel %vm1006, %v249, 0
    %v2904 = vsel %vm1006, %v254, 0
    %v2907 = vsel %vm1006, %v259, 0
    %v2910 = vsel %vm1006, %v264, 0
    %v2913 = vsel %vm1006, %v269, 0
    %v2916 = vsel %vm1006, %v274, 0
    %v2919 = vsel %vm1006, %v279, 0
    %v2922 = vsel %vm1006, %v2769, 0
    %v2925 = vsel %vm1006, %v2770, 0
    %v2928 = vsel %vm1006, %v2771, 0
    %v2931 = vsel %vm1006, %v2772, 0
    %v2934 = vsel %vm1006, %v2773, 0
    %v2937 = vsel %vm1006, %v2774, 0
    %v2940 = vsel %vm1006, %v2775, 0
    %v2943 = vsel %vm1006, %v2776, 0
    %v2946 = vsel %vm1006, %v2777, 0
    %v2949 = vsel %vm1006, %v2778, 0
    %v2952 = vsel %vm1006, %v2779, 0
    %v2955 = vsel %vm1006, %v2780, 0
    %v2958 = vsel %vm1006, %v2781, 0
    %v2961 = vsel %vm1006, %v2782, 0
    %v2964 = vsel %vm1006, %v2783, 0
    %v2967 = vsel %vm1006, %v2784, 0
    %v2970 = vsel %vm1006, %v2785, 0
    %v2973 = vsel %vm1006, %v2786, 0
    %v2976 = vsel %vm1006, %v2787, 0
    %v2979 = vsel %vm1006, %v2788, 0
    %v2982 = vsel %vm1006, %v2789, 0
    %v2985 = vsel %vm1006, %v2790, 0
    %v2988 = vsel %vm1006, %v2791, 0
    %v2991 = vsel %vm1006, %v2792, 0
    %v2994 = vsel %vm1006, %v2793, 0
    %v2997 = vsel %vm1006, %v2794, 0
    %v3000 = vsel %vm1006, %v2795, 0
    %v3003 = vsel %vm1006, %v2796, 0
    %v3006 = vsel %vm1006, %v2797, 0
    %v3009 = vsel %vm1006, %v2798, 0
    %v3012 = vsel %vm1006, %v2799, 0
    %v3015 = vsel %vm1006, %v2800, 0
    %v3018 = vsel %vm1006, %v2801, 0
    %v3021 = vsel %vm1006, %v2802, 0
    %v3024 = vsel %vm1006, %v2803, 0
    %v3027 = vsel %vm1006, %v2804, 0
    %v3030 = vsel %vm1006, %v2805, 0
    %v3033 = vsel %vm1006, %v2806, 0
    %v3036 = vsel %vm1006, %v2807, 0
    %v3039 = vsel %vm1006, %v2808, 0
    %v3042 = vsel %vm1006, %v2809, 0
    %v3045 = vsel %vm1006, %v2810, 0
    %v3048 = vsel %vm1006, %v2811, 0
    %v3051 = vsel %vm1006, %v2812, 0
    %v3054 = vsel %vm1006, %v2813, 0
    %v3057 = vsel %vm1006, %v2814, 0
    %v3060 = vsel %vm1006, %v2815, 0
    %v3063 = vsel %vm1006, %v2816, 0
    %v3066 = vsel %vm1006, %v2817, 0
    %v3069 = vsel %vm1006, %v2818, 0
    %v3072 = vsel %vm1006, %v2819, 0
    %v3075 = vsel %vm1006, %v2820, 0
    %v3078 = vsel %vm1006, %v2821, 0
    %v3081 = vsel %vm1006, %v2822, 0
    %v3084 = vsel %vm1006, %v2823, 0
    %v3087 = vsel %vm1006, %v2824, 0
    %v3090 = vsel %vm1006, %v2825, 0
    %v3093 = vsel %vm1006, %v2826, 0
    %v3096 = vsel %vm1006, %v2827, 0
    %v3099 = vsel %vm1006, %v2828, 0
    %v3102 = vsel %vm1006, %v2829, 0
    %v3105 = vsel %vm1006, %v2830, 0
    %v3108 = vsel %vm1006, %v2831, 0
    %v3111 = vsel %vm1006, %v2832, 0
    %3113 = vmatprep.subr.mxu0 0.0
    %3114 = vmatpush1.xpose.msra.mxu0 %v2967
    %3115 = vmatprep.subr.mxu0 0.0
    %3116 = vmatpush1.xpose.msra.mxu0 %v2964
    %3117 = vmatprep.subr.mxu0 0.0
    %3118 = vmatpush1.xpose.msra.mxu0 %v2961
    %3119 = vmatprep.subr.mxu0 0.0
    %3120 = vmatpush1.xpose.msra.mxu0 %v2958
    %3121 = vmatprep.subr.mxu0 0.0
    %3122 = vmatpush1.xpose.msra.mxu0 %v2955
    %3123 = vmatprep.subr.mxu0 0.0
    %3124 = vmatpush1.xpose.msra.mxu0 %v2952
    %3125 = vmatprep.subr.mxu0 0.0
    %3126 = vmatpush1.xpose.msra.mxu0 %v2949
    %3127 = vmatprep.subr.mxu0 0.0
    %3128 = vmatpush1.xpose.msra.mxu0 %v2946
    %3129 = vmatprep.subr.mxu0 0.0
    %3130 = vmatpush1.xpose.msra.mxu0 %v2943
    %3131 = vmatprep.subr.mxu0 0.0
    %3132 = vmatpush1.xpose.msra.mxu0 %v2940
    %3133 = vmatprep.subr.mxu0 0.0
    %3134 = vmatpush1.xpose.msra.mxu0 %v2937
    %3135 = vmatprep.subr.mxu0 0.0
    %3136 = vmatpush1.xpose.msra.mxu0 %v2934
    %3137 = vmatprep.subr.mxu0 0.0
    %3138 = vmatpush1.xpose.msra.mxu0 %v2931
    %3139 = vmatprep.subr.mxu0 0.0
    %3140 = vmatpush1.xpose.msra.mxu0 %v2928
    %3141 = vmatprep.subr.mxu0 0.0
    %3142 = vmatpush1.xpose.msra.mxu0 %v2925
    %3143 = vmatprep.subr.mxu0 0.0
    %3144 = vmatpush1.xpose.msra.mxu0 %v2922
    %3145 = vmatprep.subr.mxu0 0.0
    %3146 = vmatpush2.xpose.msra.mxu0 %v3015
    %3147 = vmatprep.subr.mxu0 0.0
    %3148 = vmatpush2.xpose.msra.mxu0 %v3012
    %3149 = vmatprep.subr.mxu0 0.0
    %3150 = vmatpush2.xpose.msra.mxu0 %v3009
    %3151 = vmatprep.subr.mxu0 0.0
    %3152 = vmatpush2.xpose.msra.mxu0 %v3006
    %3153 = vmatprep.subr.mxu0 0.0
    %3154 = vmatpush2.xpose.msra.mxu0 %v3003
    %3155 = vmatprep.subr.mxu0 0.0
    %3156 = vmatpush2.xpose.msra.mxu0 %v3000
    %3157 = vmatprep.subr.mxu0 0.0
    %3158 = vmatpush2.xpose.msra.mxu0 %v2997
    %3159 = vmatprep.subr.mxu0 0.0
    %3160 = vmatpush2.xpose.msra.mxu0 %v2994
    %3161 = vmatprep.subr.mxu0 0.0
    %3162 = vmatpush2.xpose.msra.mxu0 %v2991
    %3163 = vmatprep.subr.mxu0 0.0
    %3164 = vmatpush2.xpose.msra.mxu0 %v2988
    %3165 = vmatprep.subr.mxu0 0.0
    %3166 = vmatpush2.xpose.msra.mxu0 %v2985
    %3167 = vmatprep.subr.mxu0 0.0
    %3168 = vmatpush2.xpose.msra.mxu0 %v2982
    %3169 = vmatprep.subr.mxu0 0.0
    %3170 = vmatpush2.xpose.msra.mxu0 %v2979
    %3171 = vmatprep.subr.mxu0 0.0
    %3172 = vmatpush2.xpose.msra.mxu0 %v2976
    %3173 = vmatprep.subr.mxu0 0.0
    %3174 = vmatpush2.xpose.msra.mxu0 %v2973
    %3175 = vmatprep.subr.mxu0 0.0
    %3176 = vmatpush2.xpose.msra.mxu0 %v2970
    %3177 = vmatprep.mubr.f32.mxu0 0.0
    %3178 = vmatmul.mubr.f32.gmra.mxu0 %v2898
    %v3179 = vpop.f32.mrf.mxu0
    %v3180 = vadd.f32 0.0, %v3179
    %v3181 = vpop.f32.mrf.mxu0
    %v3182 = vadd.f32 0.0, %v3181
    %3183 = vmatprep.mubr.f32.mxu0 0.0
    %3184 = vmatmul.mubr.f32.gmra.mxu0 %v2901
    %v3185 = vpop.f32.mrf.mxu0
    %v3186 = vadd.f32 0.0, %v3185
    %v3187 = vpop.f32.mrf.mxu0
    %v3188 = vadd.f32 0.0, %v3187
    %3189 = vmatprep.mubr.f32.mxu0 0.0
    %3190 = vmatmul.mubr.f32.gmra.mxu0 %v2904
    %v3191 = vpop.f32.mrf.mxu0
    %v3192 = vadd.f32 0.0, %v3191
    %v3193 = vpop.f32.mrf.mxu0
    %v3194 = vadd.f32 0.0, %v3193
    %3195 = vmatprep.mubr.f32.mxu0 0.0
    %3196 = vmatmul.mubr.f32.gmra.mxu0 %v2907
    %v3197 = vpop.f32.mrf.mxu0
    %v3198 = vadd.f32 0.0, %v3197
    %v3199 = vpop.f32.mrf.mxu0
    %v3200 = vadd.f32 0.0, %v3199
    %3201 = vmatprep.mubr.f32.mxu0 0.0
    %3202 = vmatmul.mubr.f32.gmra.mxu0 %v2910
    %v3203 = vpop.f32.mrf.mxu0
    %v3204 = vadd.f32 0.0, %v3203
    %v3205 = vpop.f32.mrf.mxu0
    %v3206 = vadd.f32 0.0, %v3205
    %3207 = vmatprep.mubr.f32.mxu0 0.0
    %3208 = vmatmul.mubr.f32.gmra.mxu0 %v2913
    %v3209 = vpop.f32.mrf.mxu0
    %v3210 = vadd.f32 0.0, %v3209
    %v3211 = vpop.f32.mrf.mxu0
    %v3212 = vadd.f32 0.0, %v3211
    %3213 = vmatprep.mubr.f32.mxu0 0.0
    %3214 = vmatmul.mubr.f32.gmra.mxu0 %v2916
    %v3215 = vpop.f32.mrf.mxu0
    %v3216 = vadd.f32 0.0, %v3215
    %v3217 = vpop.f32.mrf.mxu0
    %v3218 = vadd.f32 0.0, %v3217
    %3219 = vmatprep.mubr.f32.mxu0 0.0
    %3220 = vmatmul.mubr.f32.gmra.mxu0 %v2919
    %v3221 = vpop.f32.mrf.mxu0
    %v3222 = vadd.f32 0.0, %v3221
    %v3223 = vpop.f32.mrf.mxu0
    %v3224 = vadd.f32 0.0, %v3223
    %3225 = vdwg.mxu0
    %3226 = vmatprep.subr.mxu0 0.0
    %3227 = vmatpush1.xpose.msra.mxu0 %v3063
    %3228 = vmatprep.subr.mxu0 0.0
    %3229 = vmatpush1.xpose.msra.mxu0 %v3060
    %3230 = vmatprep.subr.mxu0 0.0
    %3231 = vmatpush1.xpose.msra.mxu0 %v3057
    %3232 = vmatprep.subr.mxu0 0.0
    %3233 = vmatpush1.xpose.msra.mxu0 %v3054
    %3234 = vmatprep.subr.mxu0 0.0
    %3235 = vmatpush1.xpose.msra.mxu0 %v3051
    %3236 = vmatprep.subr.mxu0 0.0
    %3237 = vmatpush1.xpose.msra.mxu0 %v3048
    %3238 = vmatprep.subr.mxu0 0.0
    %3239 = vmatpush1.xpose.msra.mxu0 %v3045
    %3240 = vmatprep.subr.mxu0 0.0
    %3241 = vmatpush1.xpose.msra.mxu0 %v3042
    %3242 = vmatprep.subr.mxu0 0.0
    %3243 = vmatpush1.xpose.msra.mxu0 %v3039
    %3244 = vmatprep.subr.mxu0 0.0
    %3245 = vmatpush1.xpose.msra.mxu0 %v3036
    %3246 = vmatprep.subr.mxu0 0.0
    %3247 = vmatpush1.xpose.msra.mxu0 %v3033
    %3248 = vmatprep.subr.mxu0 0.0
    %3249 = vmatpush1.xpose.msra.mxu0 %v3030
    %3250 = vmatprep.subr.mxu0 0.0
    %3251 = vmatpush1.xpose.msra.mxu0 %v3027
    %3252 = vmatprep.subr.mxu0 0.0
    %3253 = vmatpush1.xpose.msra.mxu0 %v3024
    %3254 = vmatprep.subr.mxu0 0.0
    %3255 = vmatpush1.xpose.msra.mxu0 %v3021
    %3256 = vmatprep.subr.mxu0 0.0
    %3257 = vmatpush1.xpose.msra.mxu0 %v3018
    %3258 = vmatprep.subr.mxu0 0.0
    %3259 = vmatpush2.xpose.msra.mxu0 %v3111
    %3260 = vmatprep.subr.mxu0 0.0
    %3261 = vmatpush2.xpose.msra.mxu0 %v3108
    %3262 = vmatprep.subr.mxu0 0.0
    %3263 = vmatpush2.xpose.msra.mxu0 %v3105
    %3264 = vmatprep.subr.mxu0 0.0
    %3265 = vmatpush2.xpose.msra.mxu0 %v3102
    %3266 = vmatprep.subr.mxu0 0.0
    %3267 = vmatpush2.xpose.msra.mxu0 %v3099
    %3268 = vmatprep.subr.mxu0 0.0
    %3269 = vmatpush2.xpose.msra.mxu0 %v3096
    %3270 = vmatprep.subr.mxu0 0.0
    %3271 = vmatpush2.xpose.msra.mxu0 %v3093
    %3272 = vmatprep.subr.mxu0 0.0
    %3273 = vmatpush2.xpose.msra.mxu0 %v3090
    %3274 = vmatprep.subr.mxu0 0.0
    %3275 = vmatpush2.xpose.msra.mxu0 %v3087
    %3276 = vmatprep.subr.mxu0 0.0
    %3277 = vmatpush2.xpose.msra.mxu0 %v3084
    %3278 = vmatprep.subr.mxu0 0.0
    %3279 = vmatpush2.xpose.msra.mxu0 %v3081
    %3280 = vmatprep.subr.mxu0 0.0
    %3281 = vmatpush2.xpose.msra.mxu0 %v3078
    %3282 = vmatprep.subr.mxu0 0.0
    %3283 = vmatpush2.xpose.msra.mxu0 %v3075
    %3284 = vmatprep.subr.mxu0 0.0
    %3285 = vmatpush2.xpose.msra.mxu0 %v3072
    %3286 = vmatprep.subr.mxu0 0.0
    %3287 = vmatpush2.xpose.msra.mxu0 %v3069
    %3288 = vmatprep.subr.mxu0 0.0
    %3289 = vmatpush2.xpose.msra.mxu0 %v3066
    %3290 = vmatprep.mubr.f32.mxu0 0.0
    %3291 = vmatmul.mubr.f32.gmra.mxu0 %v2898
    %v3292 = vpop.f32.mrf.mxu0
    %v3293 = vadd.f32 0.0, %v3292
    %v3294 = vpop.f32.mrf.mxu0
    %v3295 = vadd.f32 0.0, %v3294
    %3296 = vmatprep.mubr.f32.mxu0 0.0
    %3297 = vmatmul.mubr.f32.gmra.mxu0 %v2901
    %v3298 = vpop.f32.mrf.mxu0
    %v3299 = vadd.f32 0.0, %v3298
    %v3300 = vpop.f32.mrf.mxu0
    %v3301 = vadd.f32 0.0, %v3300
    %3302 = vmatprep.mubr.f32.mxu0 0.0
    %3303 = vmatmul.mubr.f32.gmra.mxu0 %v2904
    %v3304 = vpop.f32.mrf.mxu0
    %v3305 = vadd.f32 0.0, %v3304
    %v3306 = vpop.f32.mrf.mxu0
    %v3307 = vadd.f32 0.0, %v3306
    %3308 = vmatprep.mubr.f32.mxu0 0.0
    %3309 = vmatmul.mubr.f32.gmra.mxu0 %v2907
    %v3310 = vpop.f32.mrf.mxu0
    %v3311 = vadd.f32 0.0, %v3310
    %v3312 = vpop.f32.mrf.mxu0
    %v3313 = vadd.f32 0.0, %v3312
    %3314 = vmatprep.mubr.f32.mxu0 0.0
    %3315 = vmatmul.mubr.f32.gmra.mxu0 %v2910
    %v3316 = vpop.f32.mrf.mxu0
    %v3317 = vadd.f32 0.0, %v3316
    %v3318 = vpop.f32.mrf.mxu0
    %v3319 = vadd.f32 0.0, %v3318
    %3320 = vmatprep.mubr.f32.mxu0 0.0
    %3321 = vmatmul.mubr.f32.gmra.mxu0 %v2913
    %v3322 = vpop.f32.mrf.mxu0
    %v3323 = vadd.f32 0.0, %v3322
    %v3324 = vpop.f32.mrf.mxu0
    %v3325 = vadd.f32 0.0, %v3324
    %3326 = vmatprep.mubr.f32.mxu0 0.0
    %3327 = vmatmul.mubr.f32.gmra.mxu0 %v2916
    %v3328 = vpop.f32.mrf.mxu0
    %v3329 = vadd.f32 0.0, %v3328
    %v3330 = vpop.f32.mrf.mxu0
    %v3331 = vadd.f32 0.0, %v3330
    %3332 = vmatprep.mubr.f32.mxu0 0.0
    %3333 = vmatmul.mubr.f32.gmra.mxu0 %v2919
    %v3334 = vpop.f32.mrf.mxu0
    %v3335 = vadd.f32 0.0, %v3334
    %v3336 = vpop.f32.mrf.mxu0
    %v3337 = vadd.f32 0.0, %v3336
    %3338 = vdwg.mxu0
    %v3339 = vsel %vm88, %v3180, -inf
    %3340 = vmax.xlane.f32.xlu0 %v3339
    %v3341 = vpop.xlane.xlu0 %3340
    %v3342 = vsel %vm88, %v3186, -inf
    %3343 = vmax.xlane.f32.xlu0 %v3342
    %v3344 = vpop.xlane.xlu0 %3343
    %v3345 = vsel %vm88, %v3192, -inf
    %3346 = vmax.xlane.f32.xlu0 %v3345
    %v3347 = vpop.xlane.xlu0 %3346
    %v3348 = vsel %vm88, %v3198, -inf
    %3349 = vmax.xlane.f32.xlu0 %v3348
    %v3350 = vpop.xlane.xlu0 %3349
    %v3351 = vsel %vm88, %v3204, -inf
    %3352 = vmax.xlane.f32.xlu0 %v3351
    %v3353 = vpop.xlane.xlu0 %3352
    %v3354 = vsel %vm88, %v3210, -inf
    %3355 = vmax.xlane.f32.xlu0 %v3354
    %v3356 = vpop.xlane.xlu0 %3355
    %v3357 = vsel %vm88, %v3216, -inf
    %3358 = vmax.xlane.f32.xlu0 %v3357
    %v3359 = vpop.xlane.xlu0 %3358
    %v3360 = vsel %vm88, %v3222, -inf
    %3361 = vmax.xlane.f32.xlu0 %v3360
    %v3362 = vpop.xlane.xlu0 %3361
    %v3363 = vsel %vm1473, %v3180, -inf
    %3364 = vmax.xlane.f32.xlu0 %v3363
    %v3365 = vpop.xlane.xlu0 %3364
    %v3366 = vsel %vm1473, %v3186, -inf
    %3367 = vmax.xlane.f32.xlu0 %v3366
    %v3368 = vpop.xlane.xlu0 %3367
    %v3369 = vsel %vm1473, %v3192, -inf
    %3370 = vmax.xlane.f32.xlu0 %v3369
    %v3371 = vpop.xlane.xlu0 %3370
    %v3372 = vsel %vm1473, %v3198, -inf
    %3373 = vmax.xlane.f32.xlu0 %v3372
    %v3374 = vpop.xlane.xlu0 %3373
    %v3375 = vsel %vm1473, %v3204, -inf
    %3376 = vmax.xlane.f32.xlu0 %v3375
    %v3377 = vpop.xlane.xlu0 %3376
    %v3378 = vsel %vm1473, %v3210, -inf
    %3379 = vmax.xlane.f32.xlu0 %v3378
    %v3380 = vpop.xlane.xlu0 %3379
    %v3381 = vsel %vm1473, %v3216, -inf
    %3382 = vmax.xlane.f32.xlu0 %v3381
    %v3383 = vpop.xlane.xlu0 %3382
    %v3384 = vsel %vm1473, %v3222, -inf
    %3385 = vmax.xlane.f32.xlu0 %v3384
    %v3386 = vpop.xlane.xlu0 %3385
    %v3387 = vsel %vm88, %v3182, -inf
    %3388 = vmax.xlane.f32.xlu0 %v3387
    %v3389 = vpop.xlane.xlu0 %3388
    %v3390 = vsel %vm88, %v3188, -inf
    %3391 = vmax.xlane.f32.xlu0 %v3390
    %v3392 = vpop.xlane.xlu0 %3391
    %v3393 = vsel %vm88, %v3194, -inf
    %3394 = vmax.xlane.f32.xlu0 %v3393
    %v3395 = vpop.xlane.xlu0 %3394
    %v3396 = vsel %vm88, %v3200, -inf
    %3397 = vmax.xlane.f32.xlu0 %v3396
    %v3398 = vpop.xlane.xlu0 %3397
    %v3399 = vsel %vm88, %v3206, -inf
    %3400 = vmax.xlane.f32.xlu0 %v3399
    %v3401 = vpop.xlane.xlu0 %3400
    %v3402 = vsel %vm88, %v3212, -inf
    %3403 = vmax.xlane.f32.xlu0 %v3402
    %v3404 = vpop.xlane.xlu0 %3403
    %v3405 = vsel %vm88, %v3218, -inf
    %3406 = vmax.xlane.f32.xlu0 %v3405
    %v3407 = vpop.xlane.xlu0 %3406
    %v3408 = vsel %vm88, %v3224, -inf
    %3409 = vmax.xlane.f32.xlu0 %v3408
    %v3410 = vpop.xlane.xlu0 %3409
    %v3411 = vsel %vm1473, %v3182, -inf
    %3412 = vmax.xlane.f32.xlu0 %v3411
    %v3413 = vpop.xlane.xlu0 %3412
    %v3414 = vsel %vm1473, %v3188, -inf
    %3415 = vmax.xlane.f32.xlu0 %v3414
    %v3416 = vpop.xlane.xlu0 %3415
    %v3417 = vsel %vm1473, %v3194, -inf
    %3418 = vmax.xlane.f32.xlu0 %v3417
    %v3419 = vpop.xlane.xlu0 %3418
    %v3420 = vsel %vm1473, %v3200, -inf
    %3421 = vmax.xlane.f32.xlu0 %v3420
    %v3422 = vpop.xlane.xlu0 %3421
    %v3423 = vsel %vm1473, %v3206, -inf
    %3424 = vmax.xlane.f32.xlu0 %v3423
    %v3425 = vpop.xlane.xlu0 %3424
    %v3426 = vsel %vm1473, %v3212, -inf
    %3427 = vmax.xlane.f32.xlu0 %v3426
    %v3428 = vpop.xlane.xlu0 %3427
    %v3429 = vsel %vm1473, %v3218, -inf
    %3430 = vmax.xlane.f32.xlu0 %v3429
    %v3431 = vpop.xlane.xlu0 %3430
    %v3432 = vsel %vm1473, %v3224, -inf
    %3433 = vmax.xlane.f32.xlu0 %v3432
    %v3434 = vpop.xlane.xlu0 %3433
    %v3435 = vsel %vm88, %v3293, -inf
    %3436 = vmax.xlane.f32.xlu0 %v3435
    %v3437 = vpop.xlane.xlu0 %3436
    %v3438 = vsel %vm88, %v3299, -inf
    %3439 = vmax.xlane.f32.xlu0 %v3438
    %v3440 = vpop.xlane.xlu0 %3439
    %v3441 = vsel %vm88, %v3305, -inf
    %3442 = vmax.xlane.f32.xlu0 %v3441
    %v3443 = vpop.xlane.xlu0 %3442
    %v3444 = vsel %vm88, %v3311, -inf
    %3445 = vmax.xlane.f32.xlu0 %v3444
    %v3446 = vpop.xlane.xlu0 %3445
    %v3447 = vsel %vm88, %v3317, -inf
    %3448 = vmax.xlane.f32.xlu0 %v3447
    %v3449 = vpop.xlane.xlu0 %3448
    %v3450 = vsel %vm88, %v3323, -inf
    %3451 = vmax.xlane.f32.xlu0 %v3450
    %v3452 = vpop.xlane.xlu0 %3451
    %v3453 = vsel %vm88, %v3329, -inf
    %3454 = vmax.xlane.f32.xlu0 %v3453
    %v3455 = vpop.xlane.xlu0 %3454
    %v3456 = vsel %vm88, %v3335, -inf
    %3457 = vmax.xlane.f32.xlu0 %v3456
    %v3458 = vpop.xlane.xlu0 %3457
    %v3459 = vsel %vm1473, %v3293, -inf
    %3460 = vmax.xlane.f32.xlu0 %v3459
    %v3461 = vpop.xlane.xlu0 %3460
    %v3462 = vsel %vm1473, %v3299, -inf
    %3463 = vmax.xlane.f32.xlu0 %v3462
    %v3464 = vpop.xlane.xlu0 %3463
    %v3465 = vsel %vm1473, %v3305, -inf
    %3466 = vmax.xlane.f32.xlu0 %v3465
    %v3467 = vpop.xlane.xlu0 %3466
    %v3468 = vsel %vm1473, %v3311, -inf
    %3469 = vmax.xlane.f32.xlu0 %v3468
    %v3470 = vpop.xlane.xlu0 %3469
    %v3471 = vsel %vm1473, %v3317, -inf
    %3472 = vmax.xlane.f32.xlu0 %v3471
    %v3473 = vpop.xlane.xlu0 %3472
    %v3474 = vsel %vm1473, %v3323, -inf
    %3475 = vmax.xlane.f32.xlu0 %v3474
    %v3476 = vpop.xlane.xlu0 %3475
    %v3477 = vsel %vm1473, %v3329, -inf
    %3478 = vmax.xlane.f32.xlu0 %v3477
    %v3479 = vpop.xlane.xlu0 %3478
    %v3480 = vsel %vm1473, %v3335, -inf
    %3481 = vmax.xlane.f32.xlu0 %v3480
    %v3482 = vpop.xlane.xlu0 %3481
    %v3483 = vsel %vm88, %v3295, -inf
    %3484 = vmax.xlane.f32.xlu0 %v3483
    %v3485 = vpop.xlane.xlu0 %3484
    %v3486 = vsel %vm88, %v3301, -inf
    %3487 = vmax.xlane.f32.xlu0 %v3486
    %v3488 = vpop.xlane.xlu0 %3487
    %v3489 = vsel %vm88, %v3307, -inf
    %3490 = vmax.xlane.f32.xlu0 %v3489
    %v3491 = vpop.xlane.xlu0 %3490
    %v3492 = vsel %vm88, %v3313, -inf
    %3493 = vmax.xlane.f32.xlu0 %v3492
    %v3494 = vpop.xlane.xlu0 %3493
    %v3495 = vsel %vm88, %v3319, -inf
    %3496 = vmax.xlane.f32.xlu0 %v3495
    %v3497 = vpop.xlane.xlu0 %3496
    %v3498 = vsel %vm88, %v3325, -inf
    %3499 = vmax.xlane.f32.xlu0 %v3498
    %v3500 = vpop.xlane.xlu0 %3499
    %v3501 = vsel %vm88, %v3331, -inf
    %3502 = vmax.xlane.f32.xlu0 %v3501
    %v3503 = vpop.xlane.xlu0 %3502
    %v3504 = vsel %vm88, %v3337, -inf
    %3505 = vmax.xlane.f32.xlu0 %v3504
    %v3506 = vpop.xlane.xlu0 %3505
    %v3507 = vsel %vm1473, %v3295, -inf
    %3508 = vmax.xlane.f32.xlu0 %v3507
    %v3509 = vpop.xlane.xlu0 %3508
    %v3510 = vsel %vm1473, %v3301, -inf
    %3511 = vmax.xlane.f32.xlu0 %v3510
    %v3512 = vpop.xlane.xlu0 %3511
    %v3513 = vsel %vm1473, %v3307, -inf
    %3514 = vmax.xlane.f32.xlu0 %v3513
    %v3515 = vpop.xlane.xlu0 %3514
    %v3516 = vsel %vm1473, %v3313, -inf
    %3517 = vmax.xlane.f32.xlu0 %v3516
    %v3518 = vpop.xlane.xlu0 %3517
    %v3519 = vsel %vm1473, %v3319, -inf
    %3520 = vmax.xlane.f32.xlu0 %v3519
    %v3521 = vpop.xlane.xlu0 %3520
    %v3522 = vsel %vm1473, %v3325, -inf
    %3523 = vmax.xlane.f32.xlu0 %v3522
    %v3524 = vpop.xlane.xlu0 %3523
    %v3525 = vsel %vm1473, %v3331, -inf
    %3526 = vmax.xlane.f32.xlu0 %v3525
    %v3527 = vpop.xlane.xlu0 %3526
    %v3528 = vsel %vm1473, %v3337, -inf
    %3529 = vmax.xlane.f32.xlu0 %v3528
    %v3530 = vpop.xlane.xlu0 %3529
    %v3531 = vsel %vm88, %v3341, %v3365
    %v3532 = vsel %vm88, %v3344, %v3368
    %v3533 = vsel %vm88, %v3347, %v3371
    %v3534 = vsel %vm88, %v3350, %v3374
    %v3535 = vsel %vm88, %v3353, %v3377
    %v3536 = vsel %vm88, %v3356, %v3380
    %v3537 = vsel %vm88, %v3359, %v3383
    %v3538 = vsel %vm88, %v3362, %v3386
    %v3539 = vsel %vm88, %v3389, %v3413
    %v3540 = vsel %vm88, %v3392, %v3416
    %v3541 = vsel %vm88, %v3395, %v3419
    %v3542 = vsel %vm88, %v3398, %v3422
    %v3543 = vsel %vm88, %v3401, %v3425
    %v3544 = vsel %vm88, %v3404, %v3428
    %v3545 = vsel %vm88, %v3407, %v3431
    %v3546 = vsel %vm88, %v3410, %v3434
    %v3547 = vsel %vm88, %v3437, %v3461
    %v3548 = vsel %vm88, %v3440, %v3464
    %v3549 = vsel %vm88, %v3443, %v3467
    %v3550 = vsel %vm88, %v3446, %v3470
    %v3551 = vsel %vm88, %v3449, %v3473
    %v3552 = vsel %vm88, %v3452, %v3476
    %v3553 = vsel %vm88, %v3455, %v3479
    %v3554 = vsel %vm88, %v3458, %v3482
    %v3555 = vsel %vm88, %v3485, %v3509
    %v3556 = vsel %vm88, %v3488, %v3512
    %v3557 = vsel %vm88, %v3491, %v3515
    %v3558 = vsel %vm88, %v3494, %v3518
    %v3559 = vsel %vm88, %v3497, %v3521
    %v3560 = vsel %vm88, %v3500, %v3524
    %v3561 = vsel %vm88, %v3503, %v3527
    %v3562 = vsel %vm88, %v3506, %v3530
    %v3563 = vsub.f32 %v3180, %v3531
    %v3564 = vsub.f32 %v3182, %v3539
    %v3565 = vsub.f32 %v3293, %v3547
    %v3566 = vsub.f32 %v3295, %v3555
    %v3567 = vsub.f32 %v3186, %v3532
    %v3568 = vsub.f32 %v3188, %v3540
    %v3569 = vsub.f32 %v3299, %v3548
    %v3570 = vsub.f32 %v3301, %v3556
    %v3571 = vsub.f32 %v3192, %v3533
    %v3572 = vsub.f32 %v3194, %v3541
    %v3573 = vsub.f32 %v3305, %v3549
    %v3574 = vsub.f32 %v3307, %v3557
    %v3575 = vsub.f32 %v3198, %v3534
    %v3576 = vsub.f32 %v3200, %v3542
    %v3577 = vsub.f32 %v3311, %v3550
    %v3578 = vsub.f32 %v3313, %v3558
    %v3579 = vsub.f32 %v3204, %v3535
    %v3580 = vsub.f32 %v3206, %v3543
    %v3581 = vsub.f32 %v3317, %v3551
    %v3582 = vsub.f32 %v3319, %v3559
    %v3583 = vsub.f32 %v3210, %v3536
    %v3584 = vsub.f32 %v3212, %v3544
    %v3585 = vsub.f32 %v3323, %v3552
    %v3586 = vsub.f32 %v3325, %v3560
    %v3587 = vsub.f32 %v3216, %v3537
    %v3588 = vsub.f32 %v3218, %v3545
    %v3589 = vsub.f32 %v3329, %v3553
    %v3590 = vsub.f32 %v3331, %v3561
    %v3591 = vsub.f32 %v3222, %v3538
    %v3592 = vsub.f32 %v3224, %v3546
    %v3593 = vsub.f32 %v3335, %v3554
    %v3594 = vsub.f32 %v3337, %v3562
    %v3595 = vmul.f32 %v3563, 1.442695
    %v3596 = vpow.pop %v3595
    %v3597 = vmul.f32 %v3564, 1.442695
    %v3598 = vpow.pop %v3597
    %v3599 = vmul.f32 %v3565, 1.442695
    %v3600 = vpow.pop %v3599
    %v3601 = vmul.f32 %v3566, 1.442695
    %v3602 = vpow.pop %v3601
    %v3603 = vmul.f32 %v3567, 1.442695
    %v3604 = vpow.pop %v3603
    %v3605 = vmul.f32 %v3568, 1.442695
    %v3606 = vpow.pop %v3605
    %v3607 = vmul.f32 %v3569, 1.442695
    %v3608 = vpow.pop %v3607
    %v3609 = vmul.f32 %v3570, 1.442695
    %v3610 = vpow.pop %v3609
    %v3611 = vmul.f32 %v3571, 1.442695
    %v3612 = vpow.pop %v3611
    %v3613 = vmul.f32 %v3572, 1.442695
    %v3614 = vpow.pop %v3613
    %v3615 = vmul.f32 %v3573, 1.442695
    %v3616 = vpow.pop %v3615
    %v3617 = vmul.f32 %v3574, 1.442695
    %v3618 = vpow.pop %v3617
    %v3619 = vmul.f32 %v3575, 1.442695
    %v3620 = vpow.pop %v3619
    %v3621 = vmul.f32 %v3576, 1.442695
    %v3622 = vpow.pop %v3621
    %v3623 = vmul.f32 %v3577, 1.442695
    %v3624 = vpow.pop %v3623
    %v3625 = vmul.f32 %v3578, 1.442695
    %v3626 = vpow.pop %v3625
    %v3627 = vmul.f32 %v3579, 1.442695
    %v3628 = vpow.pop %v3627
    %v3629 = vmul.f32 %v3580, 1.442695
    %v3630 = vpow.pop %v3629
    %v3631 = vmul.f32 %v3581, 1.442695
    %v3632 = vpow.pop %v3631
    %v3633 = vmul.f32 %v3582, 1.442695
    %v3634 = vpow.pop %v3633
    %v3635 = vmul.f32 %v3583, 1.442695
    %v3636 = vpow.pop %v3635
    %v3637 = vmul.f32 %v3584, 1.442695
    %v3638 = vpow.pop %v3637
    %v3639 = vmul.f32 %v3585, 1.442695
    %v3640 = vpow.pop %v3639
    %v3641 = vmul.f32 %v3586, 1.442695
    %v3642 = vpow.pop %v3641
    %v3643 = vmul.f32 %v3587, 1.442695
    %v3644 = vpow.pop %v3643
    %v3645 = vmul.f32 %v3588, 1.442695
    %v3646 = vpow.pop %v3645
    %v3647 = vmul.f32 %v3589, 1.442695
    %v3648 = vpow.pop %v3647
    %v3649 = vmul.f32 %v3590, 1.442695
    %v3650 = vpow.pop %v3649
    %v3651 = vmul.f32 %v3591, 1.442695
    %v3652 = vpow.pop %v3651
    %v3653 = vmul.f32 %v3592, 1.442695
    %v3654 = vpow.pop %v3653
    %v3655 = vmul.f32 %v3593, 1.442695
    %v3656 = vpow.pop %v3655
    %v3657 = vmul.f32 %v3594, 1.442695
    %v3658 = vpow.pop %v3657
    %3659 = vmatprep.subr.mxu0 0.0
    %3660 = vmatpush1.msra.mxu0 %v569
    %3661 = vmatprep.subr.mxu0 0.0
    %3662 = vmatpush1.msra.mxu0 %v568
    %3663 = vmatprep.subr.mxu0 0.0
    %3664 = vmatpush1.msra.mxu0 %v567
    %3665 = vmatprep.subr.mxu0 0.0
    %3666 = vmatpush1.msra.mxu0 %v566
    %3667 = vmatprep.subr.mxu0 0.0
    %3668 = vmatpush1.msra.mxu0 %v565
    %3669 = vmatprep.subr.mxu0 0.0
    %3670 = vmatpush1.msra.mxu0 %v564
    %3671 = vmatprep.subr.mxu0 0.0
    %3672 = vmatpush1.msra.mxu0 %v563
    %3673 = vmatprep.subr.mxu0 0.0
    %3674 = vmatpush1.msra.mxu0 %v562
    %3675 = vmatprep.subr.mxu0 0.0
    %3676 = vmatpush1.msra.mxu0 %v561
    %3677 = vmatprep.subr.mxu0 0.0
    %3678 = vmatpush1.msra.mxu0 %v560
    %3679 = vmatprep.subr.mxu0 0.0
    %3680 = vmatpush1.msra.mxu0 %v559
    %3681 = vmatprep.subr.mxu0 0.0
    %3682 = vmatpush1.msra.mxu0 %v558
    %3683 = vmatprep.subr.mxu0 0.0
    %3684 = vmatpush1.msra.mxu0 %v557
    %3685 = vmatprep.subr.mxu0 0.0
    %3686 = vmatpush1.msra.mxu0 %v556
    %3687 = vmatprep.subr.mxu0 0.0
    %3688 = vmatpush1.msra.mxu0 %v555
    %3689 = vmatprep.subr.mxu0 0.0
    %3690 = vmatpush1.msra.mxu0 %v554
    %3691 = vmatprep.subr.mxu0 0.0
    %3692 = vmatpush2.msra.mxu0 %v585
    %3693 = vmatprep.subr.mxu0 0.0
    %3694 = vmatpush2.msra.mxu0 %v584
    %3695 = vmatprep.subr.mxu0 0.0
    %3696 = vmatpush2.msra.mxu0 %v583
    %3697 = vmatprep.subr.mxu0 0.0
    %3698 = vmatpush2.msra.mxu0 %v582
    %3699 = vmatprep.subr.mxu0 0.0
    %3700 = vmatpush2.msra.mxu0 %v581
    %3701 = vmatprep.subr.mxu0 0.0
    %3702 = vmatpush2.msra.mxu0 %v580
    %3703 = vmatprep.subr.mxu0 0.0
    %3704 = vmatpush2.msra.mxu0 %v579
    %3705 = vmatprep.subr.mxu0 0.0
    %3706 = vmatpush2.msra.mxu0 %v578
    %3707 = vmatprep.subr.mxu0 0.0
    %3708 = vmatpush2.msra.mxu0 %v577
    %3709 = vmatprep.subr.mxu0 0.0
    %3710 = vmatpush2.msra.mxu0 %v576
    %3711 = vmatprep.subr.mxu0 0.0
    %3712 = vmatpush2.msra.mxu0 %v575
    %3713 = vmatprep.subr.mxu0 0.0
    %3714 = vmatpush2.msra.mxu0 %v574
    %3715 = vmatprep.subr.mxu0 0.0
    %3716 = vmatpush2.msra.mxu0 %v573
    %3717 = vmatprep.subr.mxu0 0.0
    %3718 = vmatpush2.msra.mxu0 %v572
    %3719 = vmatprep.subr.mxu0 0.0
    %3720 = vmatpush2.msra.mxu0 %v571
    %3721 = vmatprep.subr.mxu0 0.0
    %3722 = vmatpush2.msra.mxu0 %v570
    %3723 = vmatprep.mubr.f32.mxu0 %v3598
    %3724 = vmatmul.mubr.f32.gmra.mxu0 %v3596
    %v3725 = vpop.f32.mrf.mxu0
    %v3726 = vadd.f32 0.0, %v3725
    %v3727 = vpop.f32.mrf.mxu0
    %3728 = vmatprep.mubr.f32.mxu0 %v3606
    %3729 = vmatmul.mubr.f32.gmra.mxu0 %v3604
    %v3730 = vpop.f32.mrf.mxu0
    %v3731 = vadd.f32 0.0, %v3730
    %v3732 = vpop.f32.mrf.mxu0
    %3733 = vmatprep.mubr.f32.mxu0 %v3614
    %3734 = vmatmul.mubr.f32.gmra.mxu0 %v3612
    %v3735 = vpop.f32.mrf.mxu0
    %v3736 = vadd.f32 0.0, %v3735
    %v3737 = vpop.f32.mrf.mxu0
    %3738 = vmatprep.mubr.f32.mxu0 %v3622
    %3739 = vmatmul.mubr.f32.gmra.mxu0 %v3620
    %v3740 = vpop.f32.mrf.mxu0
    %v3741 = vadd.f32 0.0, %v3740
    %v3742 = vpop.f32.mrf.mxu0
    %3743 = vmatprep.mubr.f32.mxu0 %v3630
    %3744 = vmatmul.mubr.f32.gmra.mxu0 %v3628
    %v3745 = vpop.f32.mrf.mxu0
    %v3746 = vadd.f32 0.0, %v3745
    %v3747 = vpop.f32.mrf.mxu0
    %3748 = vmatprep.mubr.f32.mxu0 %v3638
    %3749 = vmatmul.mubr.f32.gmra.mxu0 %v3636
    %v3750 = vpop.f32.mrf.mxu0
    %v3751 = vadd.f32 0.0, %v3750
    %v3752 = vpop.f32.mrf.mxu0
    %3753 = vmatprep.mubr.f32.mxu0 %v3646
    %3754 = vmatmul.mubr.f32.gmra.mxu0 %v3644
    %v3755 = vpop.f32.mrf.mxu0
    %v3756 = vadd.f32 0.0, %v3755
    %v3757 = vpop.f32.mrf.mxu0
    %3758 = vmatprep.mubr.f32.mxu0 %v3654
    %3759 = vmatmul.mubr.f32.gmra.mxu0 %v3652
    %v3760 = vpop.f32.mrf.mxu0
    %v3761 = vadd.f32 0.0, %v3760
    %v3762 = vpop.f32.mrf.mxu0
    %3763 = vdwg.mxu0
    %3764 = vmatprep.subr.mxu0 0.0
    %3765 = vmatpush1.msra.mxu0 %v601
    %3766 = vmatprep.subr.mxu0 0.0
    %3767 = vmatpush1.msra.mxu0 %v600
    %3768 = vmatprep.subr.mxu0 0.0
    %3769 = vmatpush1.msra.mxu0 %v599
    %3770 = vmatprep.subr.mxu0 0.0
    %3771 = vmatpush1.msra.mxu0 %v598
    %3772 = vmatprep.subr.mxu0 0.0
    %3773 = vmatpush1.msra.mxu0 %v597
    %3774 = vmatprep.subr.mxu0 0.0
    %3775 = vmatpush1.msra.mxu0 %v596
    %3776 = vmatprep.subr.mxu0 0.0
    %3777 = vmatpush1.msra.mxu0 %v595
    %3778 = vmatprep.subr.mxu0 0.0
    %3779 = vmatpush1.msra.mxu0 %v594
    %3780 = vmatprep.subr.mxu0 0.0
    %3781 = vmatpush1.msra.mxu0 %v593
    %3782 = vmatprep.subr.mxu0 0.0
    %3783 = vmatpush1.msra.mxu0 %v592
    %3784 = vmatprep.subr.mxu0 0.0
    %3785 = vmatpush1.msra.mxu0 %v591
    %3786 = vmatprep.subr.mxu0 0.0
    %3787 = vmatpush1.msra.mxu0 %v590
    %3788 = vmatprep.subr.mxu0 0.0
    %3789 = vmatpush1.msra.mxu0 %v589
    %3790 = vmatprep.subr.mxu0 0.0
    %3791 = vmatpush1.msra.mxu0 %v588
    %3792 = vmatprep.subr.mxu0 0.0
    %3793 = vmatpush1.msra.mxu0 %v587
    %3794 = vmatprep.subr.mxu0 0.0
    %3795 = vmatpush1.msra.mxu0 %v586
    %3796 = vmatprep.subr.mxu0 0.0
    %3797 = vmatpush2.msra.mxu0 %v617
    %3798 = vmatprep.subr.mxu0 0.0
    %3799 = vmatpush2.msra.mxu0 %v616
    %3800 = vmatprep.subr.mxu0 0.0
    %3801 = vmatpush2.msra.mxu0 %v615
    %3802 = vmatprep.subr.mxu0 0.0
    %3803 = vmatpush2.msra.mxu0 %v614
    %3804 = vmatprep.subr.mxu0 0.0
    %3805 = vmatpush2.msra.mxu0 %v613
    %3806 = vmatprep.subr.mxu0 0.0
    %3807 = vmatpush2.msra.mxu0 %v612
    %3808 = vmatprep.subr.mxu0 0.0
    %3809 = vmatpush2.msra.mxu0 %v611
    %3810 = vmatprep.subr.mxu0 0.0
    %3811 = vmatpush2.msra.mxu0 %v610
    %3812 = vmatprep.subr.mxu0 0.0
    %3813 = vmatpush2.msra.mxu0 %v609
    %3814 = vmatprep.subr.mxu0 0.0
    %3815 = vmatpush2.msra.mxu0 %v608
    %3816 = vmatprep.subr.mxu0 0.0
    %3817 = vmatpush2.msra.mxu0 %v607
    %3818 = vmatprep.subr.mxu0 0.0
    %3819 = vmatpush2.msra.mxu0 %v606
    %3820 = vmatprep.subr.mxu0 0.0
    %3821 = vmatpush2.msra.mxu0 %v605
    %3822 = vmatprep.subr.mxu0 0.0
    %3823 = vmatpush2.msra.mxu0 %v604
    %3824 = vmatprep.subr.mxu0 0.0
    %3825 = vmatpush2.msra.mxu0 %v603
    %3826 = vmatprep.subr.mxu0 0.0
    %3827 = vmatpush2.msra.mxu0 %v602
    %3828 = vmatprep.mubr.f32.mxu0 %v3602
    %3829 = vmatmul.mubr.f32.gmra.mxu0 %v3600
    %v3830 = vpop.f32.mrf.mxu0
    %v3831 = vadd.f32 %v3726, %v3830
    %v3832 = vpop.f32.mrf.mxu0
    %3833 = vmatprep.mubr.f32.mxu0 %v3610
    %3834 = vmatmul.mubr.f32.gmra.mxu0 %v3608
    %v3835 = vpop.f32.mrf.mxu0
    %v3836 = vadd.f32 %v3731, %v3835
    %v3837 = vpop.f32.mrf.mxu0
    %3838 = vmatprep.mubr.f32.mxu0 %v3618
    %3839 = vmatmul.mubr.f32.gmra.mxu0 %v3616
    %v3840 = vpop.f32.mrf.mxu0
    %v3841 = vadd.f32 %v3736, %v3840
    %v3842 = vpop.f32.mrf.mxu0
    %3843 = vmatprep.mubr.f32.mxu0 %v3626
    %3844 = vmatmul.mubr.f32.gmra.mxu0 %v3624
    %v3845 = vpop.f32.mrf.mxu0
    %v3846 = vadd.f32 %v3741, %v3845
    %v3847 = vpop.f32.mrf.mxu0
    %3848 = vmatprep.mubr.f32.mxu0 %v3634
    %3849 = vmatmul.mubr.f32.gmra.mxu0 %v3632
    %v3850 = vpop.f32.mrf.mxu0
    %v3851 = vadd.f32 %v3746, %v3850
    %v3852 = vpop.f32.mrf.mxu0
    %3853 = vmatprep.mubr.f32.mxu0 %v3642
    %3854 = vmatmul.mubr.f32.gmra.mxu0 %v3640
    %v3855 = vpop.f32.mrf.mxu0
    %v3856 = vadd.f32 %v3751, %v3855
    %v3857 = vpop.f32.mrf.mxu0
    %3858 = vmatprep.mubr.f32.mxu0 %v3650
    %3859 = vmatmul.mubr.f32.gmra.mxu0 %v3648
    %v3860 = vpop.f32.mrf.mxu0
    %v3861 = vadd.f32 %v3756, %v3860
    %v3862 = vpop.f32.mrf.mxu0
    %3863 = vmatprep.mubr.f32.mxu0 %v3658
    %3864 = vmatmul.mubr.f32.gmra.mxu0 %v3656
    %v3865 = vpop.f32.mrf.mxu0
    %v3866 = vadd.f32 %v3761, %v3865
    %v3867 = vpop.f32.mrf.mxu0
    %3868 = vdwg.mxu0
    %v3869 = vrcp.pop %v3831
    %v3870 = vrcp.pop %v3836
    %v3871 = vrcp.pop %v3841
    %v3872 = vrcp.pop %v3846
    %v3873 = vrcp.pop %v3851
    %v3874 = vrcp.pop %v3856
    %v3875 = vrcp.pop %v3861
    %v3876 = vrcp.pop %v3866
    %v3878 = vsel %vm1988, %v3869, 0
    %v3881 = vsel %vm1988, %v3870, 0
    %v3884 = vsel %vm1988, %v3871, 0
    %v3887 = vsel %vm1988, %v3872, 0
    %v3890 = vsel %vm1988, %v3873, 0
    %v3893 = vsel %vm1988, %v3874, 0
    %v3896 = vsel %vm1988, %v3875, 0
    %v3899 = vsel %vm1988, %v3876, 0
    %3901 = vmatprep.subr.mxu0 0.0
    %3902 = vmatpush1.msra.mxu0 0.0
    %3903 = vmatprep.subr.mxu0 0.0
    %3904 = vmatpush1.msra.mxu0 0.0
    %3905 = vmatprep.subr.mxu0 0.0
    %3906 = vmatpush1.msra.mxu0 0.0
    %3907 = vmatprep.subr.mxu0 0.0
    %3908 = vmatpush1.msra.mxu0 0.0
    %3909 = vmatprep.subr.mxu0 0.0
    %3910 = vmatpush1.msra.mxu0 0.0
    %3911 = vmatprep.subr.mxu0 0.0
    %3912 = vmatpush1.msra.mxu0 0.0
    %3913 = vmatprep.subr.mxu0 0.0
    %3914 = vmatpush1.msra.mxu0 0.0
    %3915 = vmatprep.subr.mxu0 0.0
    %3916 = vmatpush1.msra.mxu0 0.0
    %3917 = vmatprep.subr.mxu0 0.0
    %3918 = vmatpush1.msra.mxu0 0.0
    %3919 = vmatprep.subr.mxu0 0.0
    %3920 = vmatpush1.msra.mxu0 0.0
    %3921 = vmatprep.subr.mxu0 0.0
    %3922 = vmatpush1.msra.mxu0 0.0
    %3923 = vmatprep.subr.mxu0 0.0
    %3924 = vmatpush1.msra.mxu0 0.0
    %3925 = vmatprep.subr.mxu0 0.0
    %3926 = vmatpush1.msra.mxu0 0.0
    %3927 = vmatprep.subr.mxu0 0.0
    %3928 = vmatpush1.msra.mxu0 0.0
    %3929 = vmatprep.subr.mxu0 0.0
    %3930 = vmatpush1.msra.mxu0 0.0
    %3931 = vmatprep.subr.mxu0 %v619
    %3932 = vmatpush1.msra.mxu0 %v618
    %3933 = vmatprep.subr.mxu0 0.0
    %3934 = vmatpush2.msra.mxu0 0.0
    %3935 = vmatprep.subr.mxu0 0.0
    %3936 = vmatpush2.msra.mxu0 0.0
    %3937 = vmatprep.subr.mxu0 0.0
    %3938 = vmatpush2.msra.mxu0 0.0
    %3939 = vmatprep.subr.mxu0 0.0
    %3940 = vmatpush2.msra.mxu0 0.0
    %3941 = vmatprep.subr.mxu0 0.0
    %3942 = vmatpush2.msra.mxu0 0.0
    %3943 = vmatprep.subr.mxu0 0.0
    %3944 = vmatpush2.msra.mxu0 0.0
    %3945 = vmatprep.subr.mxu0 0.0
    %3946 = vmatpush2.msra.mxu0 0.0
    %3947 = vmatprep.subr.mxu0 0.0
    %3948 = vmatpush2.msra.mxu0 0.0
    %3949 = vmatprep.subr.mxu0 0.0
    %3950 = vmatpush2.msra.mxu0 0.0
    %3951 = vmatprep.subr.mxu0 0.0
    %3952 = vmatpush2.msra.mxu0 0.0
    %3953 = vmatprep.subr.mxu0 0.0
    %3954 = vmatpush2.msra.mxu0 0.0
    %3955 = vmatprep.subr.mxu0 0.0
    %3956 = vmatpush2.msra.mxu0 0.0
    %3957 = vmatprep.subr.mxu0 0.0
    %3958 = vmatpush2.msra.mxu0 0.0
    %3959 = vmatprep.subr.mxu0 0.0
    %3960 = vmatpush2.msra.mxu0 0.0
    %3961 = vmatprep.subr.mxu0 0.0
    %3962 = vmatpush2.msra.mxu0 0.0
    %3963 = vmatprep.subr.mxu0 0.0
    %3964 = vmatpush2.msra.mxu0 0.0
    %3965 = vmatprep.mubr.f32.mxu0 0.0
    %3966 = vmatmul.mubr.f32.gmra.mxu0 %v3878
    %v3967 = vpop.f32.mrf.mxu0
    %v3968 = vadd.f32 0.0, %v3967
    %v3969 = vpop.f32.mrf.mxu0
    %v3970 = vadd.f32 0.0, %v3969
    %3971 = vmatprep.mubr.f32.mxu0 0.0
    %3972 = vmatmul.mubr.f32.gmra.mxu0 %v3881
    %v3973 = vpop.f32.mrf.mxu0
    %v3974 = vadd.f32 0.0, %v3973
    %v3975 = vpop.f32.mrf.mxu0
    %v3976 = vadd.f32 0.0, %v3975
    %3977 = vmatprep.mubr.f32.mxu0 0.0
    %3978 = vmatmul.mubr.f32.gmra.mxu0 %v3884
    %v3979 = vpop.f32.mrf.mxu0
    %v3980 = vadd.f32 0.0, %v3979
    %v3981 = vpop.f32.mrf.mxu0
    %v3982 = vadd.f32 0.0, %v3981
    %3983 = vmatprep.mubr.f32.mxu0 0.0
    %3984 = vmatmul.mubr.f32.gmra.mxu0 %v3887
    %v3985 = vpop.f32.mrf.mxu0
    %v3986 = vadd.f32 0.0, %v3985
    %v3987 = vpop.f32.mrf.mxu0
    %v3988 = vadd.f32 0.0, %v3987
    %3989 = vmatprep.mubr.f32.mxu0 0.0
    %3990 = vmatmul.mubr.f32.gmra.mxu0 %v3890
    %v3991 = vpop.f32.mrf.mxu0
    %v3992 = vadd.f32 0.0, %v3991
    %v3993 = vpop.f32.mrf.mxu0
    %v3994 = vadd.f32 0.0, %v3993
    %3995 = vmatprep.mubr.f32.mxu0 0.0
    %3996 = vmatmul.mubr.f32.gmra.mxu0 %v3893
    %v3997 = vpop.f32.mrf.mxu0
    %v3998 = vadd.f32 0.0, %v3997
    %v3999 = vpop.f32.mrf.mxu0
    %v4000 = vadd.f32 0.0, %v3999
    %4001 = vmatprep.mubr.f32.mxu0 0.0
    %4002 = vmatmul.mubr.f32.gmra.mxu0 %v3896
    %v4003 = vpop.f32.mrf.mxu0
    %v4004 = vadd.f32 0.0, %v4003
    %v4005 = vpop.f32.mrf.mxu0
    %v4006 = vadd.f32 0.0, %v4005
    %4007 = vmatprep.mubr.f32.mxu0 0.0
    %4008 = vmatmul.mubr.f32.gmra.mxu0 %v3899
    %v4009 = vpop.f32.mrf.mxu0
    %v4010 = vadd.f32 0.0, %v4009
    %v4011 = vpop.f32.mrf.mxu0
    %v4012 = vadd.f32 0.0, %v4011
    %4013 = vdwg.mxu0
    %4014 = vmatprep.subr.mxu0 0.0
    %4015 = vmatpush1.msra.mxu0 0.0
    %4016 = vmatprep.subr.mxu0 0.0
    %4017 = vmatpush1.msra.mxu0 0.0
    %4018 = vmatprep.subr.mxu0 0.0
    %4019 = vmatpush1.msra.mxu0 0.0
    %4020 = vmatprep.subr.mxu0 0.0
    %4021 = vmatpush1.msra.mxu0 0.0
    %4022 = vmatprep.subr.mxu0 0.0
    %4023 = vmatpush1.msra.mxu0 0.0
    %4024 = vmatprep.subr.mxu0 0.0
    %4025 = vmatpush1.msra.mxu0 0.0
    %4026 = vmatprep.subr.mxu0 0.0
    %4027 = vmatpush1.msra.mxu0 0.0
    %4028 = vmatprep.subr.mxu0 0.0
    %4029 = vmatpush1.msra.mxu0 0.0
    %4030 = vmatprep.subr.mxu0 0.0
    %4031 = vmatpush1.msra.mxu0 0.0
    %4032 = vmatprep.subr.mxu0 0.0
    %4033 = vmatpush1.msra.mxu0 0.0
    %4034 = vmatprep.subr.mxu0 0.0
    %4035 = vmatpush1.msra.mxu0 0.0
    %4036 = vmatprep.subr.mxu0 0.0
    %4037 = vmatpush1.msra.mxu0 0.0
    %4038 = vmatprep.subr.mxu0 0.0
    %4039 = vmatpush1.msra.mxu0 0.0
    %4040 = vmatprep.subr.mxu0 0.0
    %4041 = vmatpush1.msra.mxu0 0.0
    %4042 = vmatprep.subr.mxu0 0.0
    %4043 = vmatpush1.msra.mxu0 0.0
    %4044 = vmatprep.subr.mxu0 %v621
    %4045 = vmatpush1.msra.mxu0 %v620
    %4046 = vmatprep.subr.mxu0 0.0
    %4047 = vmatpush2.msra.mxu0 0.0
    %4048 = vmatprep.subr.mxu0 0.0
    %4049 = vmatpush2.msra.mxu0 0.0
    %4050 = vmatprep.subr.mxu0 0.0
    %4051 = vmatpush2.msra.mxu0 0.0
    %4052 = vmatprep.subr.mxu0 0.0
    %4053 = vmatpush2.msra.mxu0 0.0
    %4054 = vmatprep.subr.mxu0 0.0
    %4055 = vmatpush2.msra.mxu0 0.0
    %4056 = vmatprep.subr.mxu0 0.0
    %4057 = vmatpush2.msra.mxu0 0.0
    %4058 = vmatprep.subr.mxu0 0.0
    %4059 = vmatpush2.msra.mxu0 0.0
    %4060 = vmatprep.subr.mxu0 0.0
    %4061 = vmatpush2.msra.mxu0 0.0
    %4062 = vmatprep.subr.mxu0 0.0
    %4063 = vmatpush2.msra.mxu0 0.0
    %4064 = vmatprep.subr.mxu0 0.0
    %4065 = vmatpush2.msra.mxu0 0.0
    %4066 = vmatprep.subr.mxu0 0.0
    %4067 = vmatpush2.msra.mxu0 0.0
    %4068 = vmatprep.subr.mxu0 0.0
    %4069 = vmatpush2.msra.mxu0 0.0
    %4070 = vmatprep.subr.mxu0 0.0
    %4071 = vmatpush2.msra.mxu0 0.0
    %4072 = vmatprep.subr.mxu0 0.0
    %4073 = vmatpush2.msra.mxu0 0.0
    %4074 = vmatprep.subr.mxu0 0.0
    %4075 = vmatpush2.msra.mxu0 0.0
    %4076 = vmatprep.subr.mxu0 0.0
    %4077 = vmatpush2.msra.mxu0 0.0
    %4078 = vmatprep.mubr.f32.mxu0 0.0
    %4079 = vmatmul.mubr.f32.gmra.mxu0 %v3878
    %v4080 = vpop.f32.mrf.mxu0
    %v4081 = vadd.f32 0.0, %v4080
    %v4082 = vpop.f32.mrf.mxu0
    %v4083 = vadd.f32 0.0, %v4082
    %4084 = vmatprep.mubr.f32.mxu0 0.0
    %4085 = vmatmul.mubr.f32.gmra.mxu0 %v3881
    %v4086 = vpop.f32.mrf.mxu0
    %v4087 = vadd.f32 0.0, %v4086
    %v4088 = vpop.f32.mrf.mxu0
    %v4089 = vadd.f32 0.0, %v4088
    %4090 = vmatprep.mubr.f32.mxu0 0.0
    %4091 = vmatmul.mubr.f32.gmra.mxu0 %v3884
    %v4092 = vpop.f32.mrf.mxu0
    %v4093 = vadd.f32 0.0, %v4092
    %v4094 = vpop.f32.mrf.mxu0
    %v4095 = vadd.f32 0.0, %v4094
    %4096 = vmatprep.mubr.f32.mxu0 0.0
    %4097 = vmatmul.mubr.f32.gmra.mxu0 %v3887
    %v4098 = vpop.f32.mrf.mxu0
    %v4099 = vadd.f32 0.0, %v4098
    %v4100 = vpop.f32.mrf.mxu0
    %v4101 = vadd.f32 0.0, %v4100
    %4102 = vmatprep.mubr.f32.mxu0 0.0
    %4103 = vmatmul.mubr.f32.gmra.mxu0 %v3890
    %v4104 = vpop.f32.mrf.mxu0
    %v4105 = vadd.f32 0.0, %v4104
    %v4106 = vpop.f32.mrf.mxu0
    %v4107 = vadd.f32 0.0, %v4106
    %4108 = vmatprep.mubr.f32.mxu0 0.0
    %4109 = vmatmul.mubr.f32.gmra.mxu0 %v3893
    %v4110 = vpop.f32.mrf.mxu0
    %v4111 = vadd.f32 0.0, %v4110
    %v4112 = vpop.f32.mrf.mxu0
    %v4113 = vadd.f32 0.0, %v4112
    %4114 = vmatprep.mubr.f32.mxu0 0.0
    %4115 = vmatmul.mubr.f32.gmra.mxu0 %v3896
    %v4116 = vpop.f32.mrf.mxu0
    %v4117 = vadd.f32 0.0, %v4116
    %v4118 = vpop.f32.mrf.mxu0
    %v4119 = vadd.f32 0.0, %v4118
    %4120 = vmatprep.mubr.f32.mxu0 0.0
    %4121 = vmatmul.mubr.f32.gmra.mxu0 %v3899
    %v4122 = vpop.f32.mrf.mxu0
    %v4123 = vadd.f32 0.0, %v4122
    %v4124 = vpop.f32.mrf.mxu0
    %v4125 = vadd.f32 0.0, %v4124
    %4126 = vdwg.mxu0
    %v4127 = vmul.f32 %v3596, %v3968
    %v4128 = vmul.f32 %v3598, %v3970
    %v4129 = vmul.f32 %v3600, %v4081
    %v4130 = vmul.f32 %v3602, %v4083
    %v4131 = vmul.f32 %v3604, %v3974
    %v4132 = vmul.f32 %v3606, %v3976
    %v4133 = vmul.f32 %v3608, %v4087
    %v4134 = vmul.f32 %v3610, %v4089
    %v4135 = vmul.f32 %v3612, %v3980
    %v4136 = vmul.f32 %v3614, %v3982
    %v4137 = vmul.f32 %v3616, %v4093
    %v4138 = vmul.f32 %v3618, %v4095
    %v4139 = vmul.f32 %v3620, %v3986
    %v4140 = vmul.f32 %v3622, %v3988
    %v4141 = vmul.f32 %v3624, %v4099
    %v4142 = vmul.f32 %v3626, %v4101
    %v4143 = vmul.f32 %v3628, %v3992
    %v4144 = vmul.f32 %v3630, %v3994
    %v4145 = vmul.f32 %v3632, %v4105
    %v4146 = vmul.f32 %v3634, %v4107
    %v4147 = vmul.f32 %v3636, %v3998
    %v4148 = vmul.f32 %v3638, %v4000
    %v4149 = vmul.f32 %v3640, %v4111
    %v4150 = vmul.f32 %v3642, %v4113
    %v4151 = vmul.f32 %v3644, %v4004
    %v4152 = vmul.f32 %v3646, %v4006
    %v4153 = vmul.f32 %v3648, %v4117
    %v4154 = vmul.f32 %v3650, %v4119
    %v4155 = vmul.f32 %v3652, %v4010
    %v4156 = vmul.f32 %v3654, %v4012
    %v4157 = vmul.f32 %v3656, %v4123
    %v4158 = vmul.f32 %v3658, %v4125
    %4159 = vst [vmem:[#allocation2 + $0x100] sm:$0xff] %v4127
    %4160 = vst [vmem:[#allocation2 + $0x108] sm:$0xff] %v4128
    %4161 = vst [vmem:[#allocation2 + $0x110] sm:$0xff] %v4129
    %4162 = vst [vmem:[#allocation2 + $0x118] sm:$0xff] %v4130
    %4163 = vst [vmem:[#allocation2 + $0x120] sm:$0xff] %v4131
    %4164 = vst [vmem:[#allocation2 + $0x128] sm:$0xff] %v4132
    %4165 = vst [vmem:[#allocation2 + $0x130] sm:$0xff] %v4133
    %4166 = vst [vmem:[#allocation2 + $0x138] sm:$0xff] %v4134
    %4167 = vst [vmem:[#allocation2 + $0x140] sm:$0xff] %v4135
    %4168 = vst [vmem:[#allocation2 + $0x148] sm:$0xff] %v4136
    %4169 = vst [vmem:[#allocation2 + $0x150] sm:$0xff] %v4137
    %4170 = vst [vmem:[#allocation2 + $0x158] sm:$0xff] %v4138
    %4171 = vst [vmem:[#allocation2 + $0x160] sm:$0xff] %v4139
    %4172 = vst [vmem:[#allocation2 + $0x168] sm:$0xff] %v4140
    %4173 = vst [vmem:[#allocation2 + $0x170] sm:$0xff] %v4141
    %4174 = vst [vmem:[#allocation2 + $0x178] sm:$0xff] %v4142
    %4175 = vst [vmem:[#allocation2 + $0x180] sm:$0xff] %v4143
    %4176 = vst [vmem:[#allocation2 + $0x188] sm:$0xff] %v4144
    %4177 = vst [vmem:[#allocation2 + $0x190] sm:$0xff] %v4145
    %4178 = vst [vmem:[#allocation2 + $0x198] sm:$0xff] %v4146
    %4179 = vst [vmem:[#allocation2 + $0x1a0] sm:$0xff] %v4147
    %4180 = vst [vmem:[#allocation2 + $0x1a8] sm:$0xff] %v4148
    %4181 = vst [vmem:[#allocation2 + $0x1b0] sm:$0xff] %v4149
    %4182 = vst [vmem:[#allocation2 + $0x1b8] sm:$0xff] %v4150
    %4183 = vst [vmem:[#allocation2 + $0x1c0] sm:$0xff] %v4151
    %4184 = vst [vmem:[#allocation2 + $0x1c8] sm:$0xff] %v4152
    %4185 = vst [vmem:[#allocation2 + $0x1d0] sm:$0xff] %v4153
    %4186 = vst [vmem:[#allocation2 + $0x1d8] sm:$0xff] %v4154
    %4187 = vst [vmem:[#allocation2 + $0x1e0] sm:$0xff] %v4155
    %4188 = vst [vmem:[#allocation2 + $0x1e8] sm:$0xff] %v4156
    %4189 = vst [vmem:[#allocation2 + $0x1f0] sm:$0xff] %v4157
    %4190 = vst [vmem:[#allocation2 + $0x1f8] sm:$0xff] %v4158
    %4255 = vrot.lane.b32.xlu0 %v2833, 96
    %v4256 = vpop.permute.xlu0 %4255
    %4257 = vrot.lane.b32.xlu0 %v2834, 96
    %v4258 = vpop.permute.xlu0 %4257
    %4259 = vrot.lane.b32.xlu0 %v2835, 96
    %v4260 = vpop.permute.xlu0 %4259
    %4261 = vrot.lane.b32.xlu0 %v2836, 96
    %v4262 = vpop.permute.xlu0 %4261
    %4263 = vrot.lane.b32.xlu0 %v2837, 96
    %v4264 = vpop.permute.xlu0 %4263
    %4265 = vrot.lane.b32.xlu0 %v2838, 96
    %v4266 = vpop.permute.xlu0 %4265
    %4267 = vrot.lane.b32.xlu0 %v2839, 96
    %v4268 = vpop.permute.xlu0 %4267
    %4269 = vrot.lane.b32.xlu0 %v2840, 96
    %v4270 = vpop.permute.xlu0 %4269
    %4271 = vrot.lane.b32.xlu0 %v2841, 96
    %v4272 = vpop.permute.xlu0 %4271
    %4273 = vrot.lane.b32.xlu0 %v2842, 96
    %v4274 = vpop.permute.xlu0 %4273
    %4275 = vrot.lane.b32.xlu0 %v2843, 96
    %v4276 = vpop.permute.xlu0 %4275
    %4277 = vrot.lane.b32.xlu0 %v2844, 96
    %v4278 = vpop.permute.xlu0 %4277
    %4279 = vrot.lane.b32.xlu0 %v2845, 96
    %v4280 = vpop.permute.xlu0 %4279
    %4281 = vrot.lane.b32.xlu0 %v2846, 96
    %v4282 = vpop.permute.xlu0 %4281
    %4283 = vrot.lane.b32.xlu0 %v2847, 96
    %v4284 = vpop.permute.xlu0 %4283
    %4285 = vrot.lane.b32.xlu0 %v2848, 96
    %v4286 = vpop.permute.xlu0 %4285
    %4287 = vrot.lane.b32.xlu0 %v2849, 96
    %v4288 = vpop.permute.xlu0 %4287
    %4289 = vrot.lane.b32.xlu0 %v2850, 96
    %v4290 = vpop.permute.xlu0 %4289
    %4291 = vrot.lane.b32.xlu0 %v2851, 96
    %v4292 = vpop.permute.xlu0 %4291
    %4293 = vrot.lane.b32.xlu0 %v2852, 96
    %v4294 = vpop.permute.xlu0 %4293
    %4295 = vrot.lane.b32.xlu0 %v2853, 96
    %v4296 = vpop.permute.xlu0 %4295
    %4297 = vrot.lane.b32.xlu0 %v2854, 96
    %v4298 = vpop.permute.xlu0 %4297
    %4299 = vrot.lane.b32.xlu0 %v2855, 96
    %v4300 = vpop.permute.xlu0 %4299
    %4301 = vrot.lane.b32.xlu0 %v2856, 96
    %v4302 = vpop.permute.xlu0 %4301
    %4303 = vrot.lane.b32.xlu0 %v2857, 96
    %v4304 = vpop.permute.xlu0 %4303
    %4305 = vrot.lane.b32.xlu0 %v2858, 96
    %v4306 = vpop.permute.xlu0 %4305
    %4307 = vrot.lane.b32.xlu0 %v2859, 96
    %v4308 = vpop.permute.xlu0 %4307
    %4309 = vrot.lane.b32.xlu0 %v2860, 96
    %v4310 = vpop.permute.xlu0 %4309
    %4311 = vrot.lane.b32.xlu0 %v2861, 96
    %v4312 = vpop.permute.xlu0 %4311
    %4313 = vrot.lane.b32.xlu0 %v2862, 96
    %v4314 = vpop.permute.xlu0 %4313
    %4315 = vrot.lane.b32.xlu0 %v2863, 96
    %v4316 = vpop.permute.xlu0 %4315
    %4317 = vrot.lane.b32.xlu0 %v2864, 96
    %v4318 = vpop.permute.xlu0 %4317
    %4319 = vrot.lane.b32.xlu0 %v2865, 96
    %v4320 = vpop.permute.xlu0 %4319
    %4321 = vrot.lane.b32.xlu0 %v2866, 96
    %v4322 = vpop.permute.xlu0 %4321
    %4323 = vrot.lane.b32.xlu0 %v2867, 96
    %v4324 = vpop.permute.xlu0 %4323
    %4325 = vrot.lane.b32.xlu0 %v2868, 96
    %v4326 = vpop.permute.xlu0 %4325
    %4327 = vrot.lane.b32.xlu0 %v2869, 96
    %v4328 = vpop.permute.xlu0 %4327
    %4329 = vrot.lane.b32.xlu0 %v2870, 96
    %v4330 = vpop.permute.xlu0 %4329
    %4331 = vrot.lane.b32.xlu0 %v2871, 96
    %v4332 = vpop.permute.xlu0 %4331
    %4333 = vrot.lane.b32.xlu0 %v2872, 96
    %v4334 = vpop.permute.xlu0 %4333
    %4335 = vrot.lane.b32.xlu0 %v2873, 96
    %v4336 = vpop.permute.xlu0 %4335
    %4337 = vrot.lane.b32.xlu0 %v2874, 96
    %v4338 = vpop.permute.xlu0 %4337
    %4339 = vrot.lane.b32.xlu0 %v2875, 96
    %v4340 = vpop.permute.xlu0 %4339
    %4341 = vrot.lane.b32.xlu0 %v2876, 96
    %v4342 = vpop.permute.xlu0 %4341
    %4343 = vrot.lane.b32.xlu0 %v2877, 96
    %v4344 = vpop.permute.xlu0 %4343
    %4345 = vrot.lane.b32.xlu0 %v2878, 96
    %v4346 = vpop.permute.xlu0 %4345
    %4347 = vrot.lane.b32.xlu0 %v2879, 96
    %v4348 = vpop.permute.xlu0 %4347
    %4349 = vrot.lane.b32.xlu0 %v2880, 96
    %v4350 = vpop.permute.xlu0 %4349
    %4351 = vrot.lane.b32.xlu0 %v2881, 96
    %v4352 = vpop.permute.xlu0 %4351
    %4353 = vrot.lane.b32.xlu0 %v2882, 96
    %v4354 = vpop.permute.xlu0 %4353
    %4355 = vrot.lane.b32.xlu0 %v2883, 96
    %v4356 = vpop.permute.xlu0 %4355
    %4357 = vrot.lane.b32.xlu0 %v2884, 96
    %v4358 = vpop.permute.xlu0 %4357
    %4359 = vrot.lane.b32.xlu0 %v2885, 96
    %v4360 = vpop.permute.xlu0 %4359
    %4361 = vrot.lane.b32.xlu0 %v2886, 96
    %v4362 = vpop.permute.xlu0 %4361
    %4363 = vrot.lane.b32.xlu0 %v2887, 96
    %v4364 = vpop.permute.xlu0 %4363
    %4365 = vrot.lane.b32.xlu0 %v2888, 96
    %v4366 = vpop.permute.xlu0 %4365
    %4367 = vrot.lane.b32.xlu0 %v2889, 96
    %v4368 = vpop.permute.xlu0 %4367
    %4369 = vrot.lane.b32.xlu0 %v2890, 96
    %v4370 = vpop.permute.xlu0 %4369
    %4371 = vrot.lane.b32.xlu0 %v2891, 96
    %v4372 = vpop.permute.xlu0 %4371
    %4373 = vrot.lane.b32.xlu0 %v2892, 96
    %v4374 = vpop.permute.xlu0 %4373
    %4375 = vrot.lane.b32.xlu0 %v2893, 96
    %v4376 = vpop.permute.xlu0 %4375
    %4377 = vrot.lane.b32.xlu0 %v2894, 96
    %v4378 = vpop.permute.xlu0 %4377
    %4379 = vrot.lane.b32.xlu0 %v2895, 96
    %v4380 = vpop.permute.xlu0 %4379
    %4381 = vrot.lane.b32.xlu0 %v2896, 96
    %v4382 = vpop.permute.xlu0 %4381
    %4447 = vmatprep.subr.mxu0 0.0
    %4448 = vmatpush1.msra.mxu0 %v4286
    %4449 = vmatprep.subr.mxu0 0.0
    %4450 = vmatpush1.msra.mxu0 %v4284
    %4451 = vmatprep.subr.mxu0 0.0
    %4452 = vmatpush1.msra.mxu0 %v4282
    %4453 = vmatprep.subr.mxu0 0.0
    %4454 = vmatpush1.msra.mxu0 %v4280
    %4455 = vmatprep.subr.mxu0 0.0
    %4456 = vmatpush1.msra.mxu0 %v4278
    %4457 = vmatprep.subr.mxu0 0.0
    %4458 = vmatpush1.msra.mxu0 %v4276
    %4459 = vmatprep.subr.mxu0 0.0
    %4460 = vmatpush1.msra.mxu0 %v4274
    %4461 = vmatprep.subr.mxu0 0.0
    %4462 = vmatpush1.msra.mxu0 %v4272
    %4463 = vmatprep.subr.mxu0 0.0
    %4464 = vmatpush1.msra.mxu0 %v4270
    %4465 = vmatprep.subr.mxu0 0.0
    %4466 = vmatpush1.msra.mxu0 %v4268
    %4467 = vmatprep.subr.mxu0 0.0
    %4468 = vmatpush1.msra.mxu0 %v4266
    %4469 = vmatprep.subr.mxu0 0.0
    %4470 = vmatpush1.msra.mxu0 %v4264
    %4471 = vmatprep.subr.mxu0 0.0
    %4472 = vmatpush1.msra.mxu0 %v4262
    %4473 = vmatprep.subr.mxu0 0.0
    %4474 = vmatpush1.msra.mxu0 %v4260
    %4475 = vmatprep.subr.mxu0 0.0
    %4476 = vmatpush1.msra.mxu0 %v4258
    %4477 = vmatprep.subr.mxu0 0.0
    %4478 = vmatpush1.msra.mxu0 %v4256
    %4479 = vmatprep.subr.mxu0 0.0
    %4480 = vmatpush2.msra.mxu0 %v4318
    %4481 = vmatprep.subr.mxu0 0.0
    %4482 = vmatpush2.msra.mxu0 %v4316
    %4483 = vmatprep.subr.mxu0 0.0
    %4484 = vmatpush2.msra.mxu0 %v4314
    %4485 = vmatprep.subr.mxu0 0.0
    %4486 = vmatpush2.msra.mxu0 %v4312
    %4487 = vmatprep.subr.mxu0 0.0
    %4488 = vmatpush2.msra.mxu0 %v4310
    %4489 = vmatprep.subr.mxu0 0.0
    %4490 = vmatpush2.msra.mxu0 %v4308
    %4491 = vmatprep.subr.mxu0 0.0
    %4492 = vmatpush2.msra.mxu0 %v4306
    %4493 = vmatprep.subr.mxu0 0.0
    %4494 = vmatpush2.msra.mxu0 %v4304
    %4495 = vmatprep.subr.mxu0 0.0
    %4496 = vmatpush2.msra.mxu0 %v4302
    %4497 = vmatprep.subr.mxu0 0.0
    %4498 = vmatpush2.msra.mxu0 %v4300
    %4499 = vmatprep.subr.mxu0 0.0
    %4500 = vmatpush2.msra.mxu0 %v4298
    %4501 = vmatprep.subr.mxu0 0.0
    %4502 = vmatpush2.msra.mxu0 %v4296
    %4503 = vmatprep.subr.mxu0 0.0
    %4504 = vmatpush2.msra.mxu0 %v4294
    %4505 = vmatprep.subr.mxu0 0.0
    %4506 = vmatpush2.msra.mxu0 %v4292
    %4507 = vmatprep.subr.mxu0 0.0
    %4508 = vmatpush2.msra.mxu0 %v4290
    %4509 = vmatprep.subr.mxu0 0.0
    %4510 = vmatpush2.msra.mxu0 %v4288
    %4511 = vmatprep.mubr.f32.mxu0 %v4128
    %4512 = vmatmul.mubr.f32.gmra.mxu0 %v4127
    %v4513 = vpop.f32.mrf.mxu0
    %v4514 = vadd.f32 0.0, %v4513
    %v4515 = vpop.f32.mrf.mxu0
    %4516 = vmatprep.mubr.f32.mxu0 %v4132
    %4517 = vmatmul.mubr.f32.gmra.mxu0 %v4131
    %v4518 = vpop.f32.mrf.mxu0
    %v4519 = vadd.f32 0.0, %v4518
    %v4520 = vpop.f32.mrf.mxu0
    %4521 = vmatprep.mubr.f32.mxu0 %v4136
    %4522 = vmatmul.mubr.f32.gmra.mxu0 %v4135
    %v4523 = vpop.f32.mrf.mxu0
    %v4524 = vadd.f32 0.0, %v4523
    %v4525 = vpop.f32.mrf.mxu0
    %4526 = vmatprep.mubr.f32.mxu0 %v4140
    %4527 = vmatmul.mubr.f32.gmra.mxu0 %v4139
    %v4528 = vpop.f32.mrf.mxu0
    %v4529 = vadd.f32 0.0, %v4528
    %v4530 = vpop.f32.mrf.mxu0
    %4531 = vmatprep.mubr.f32.mxu0 %v4144
    %4532 = vmatmul.mubr.f32.gmra.mxu0 %v4143
    %v4533 = vpop.f32.mrf.mxu0
    %v4534 = vadd.f32 0.0, %v4533
    %v4535 = vpop.f32.mrf.mxu0
    %4536 = vmatprep.mubr.f32.mxu0 %v4148
    %4537 = vmatmul.mubr.f32.gmra.mxu0 %v4147
    %v4538 = vpop.f32.mrf.mxu0
    %v4539 = vadd.f32 0.0, %v4538
    %v4540 = vpop.f32.mrf.mxu0
    %4541 = vmatprep.mubr.f32.mxu0 %v4152
    %4542 = vmatmul.mubr.f32.gmra.mxu0 %v4151
    %v4543 = vpop.f32.mrf.mxu0
    %v4544 = vadd.f32 0.0, %v4543
    %v4545 = vpop.f32.mrf.mxu0
    %4546 = vmatprep.mubr.f32.mxu0 %v4156
    %4547 = vmatmul.mubr.f32.gmra.mxu0 %v4155
    %v4548 = vpop.f32.mrf.mxu0
    %v4549 = vadd.f32 0.0, %v4548
    %v4550 = vpop.f32.mrf.mxu0
    %4551 = vdwg.mxu0
    %4552 = vmatprep.subr.mxu0 0.0
    %4553 = vmatpush1.msra.mxu0 %v4350
    %4554 = vmatprep.subr.mxu0 0.0
    %4555 = vmatpush1.msra.mxu0 %v4348
    %4556 = vmatprep.subr.mxu0 0.0
    %4557 = vmatpush1.msra.mxu0 %v4346
    %4558 = vmatprep.subr.mxu0 0.0
    %4559 = vmatpush1.msra.mxu0 %v4344
    %4560 = vmatprep.subr.mxu0 0.0
    %4561 = vmatpush1.msra.mxu0 %v4342
    %4562 = vmatprep.subr.mxu0 0.0
    %4563 = vmatpush1.msra.mxu0 %v4340
    %4564 = vmatprep.subr.mxu0 0.0
    %4565 = vmatpush1.msra.mxu0 %v4338
    %4566 = vmatprep.subr.mxu0 0.0
    %4567 = vmatpush1.msra.mxu0 %v4336
    %4568 = vmatprep.subr.mxu0 0.0
    %4569 = vmatpush1.msra.mxu0 %v4334
    %4570 = vmatprep.subr.mxu0 0.0
    %4571 = vmatpush1.msra.mxu0 %v4332
    %4572 = vmatprep.subr.mxu0 0.0
    %4573 = vmatpush1.msra.mxu0 %v4330
    %4574 = vmatprep.subr.mxu0 0.0
    %4575 = vmatpush1.msra.mxu0 %v4328
    %4576 = vmatprep.subr.mxu0 0.0
    %4577 = vmatpush1.msra.mxu0 %v4326
    %4578 = vmatprep.subr.mxu0 0.0
    %4579 = vmatpush1.msra.mxu0 %v4324
    %4580 = vmatprep.subr.mxu0 0.0
    %4581 = vmatpush1.msra.mxu0 %v4322
    %4582 = vmatprep.subr.mxu0 0.0
    %4583 = vmatpush1.msra.mxu0 %v4320
    %4584 = vmatprep.subr.mxu0 0.0
    %4585 = vmatpush2.msra.mxu0 %v4382
    %4586 = vmatprep.subr.mxu0 0.0
    %4587 = vmatpush2.msra.mxu0 %v4380
    %4588 = vmatprep.subr.mxu0 0.0
    %4589 = vmatpush2.msra.mxu0 %v4378
    %4590 = vmatprep.subr.mxu0 0.0
    %4591 = vmatpush2.msra.mxu0 %v4376
    %4592 = vmatprep.subr.mxu0 0.0
    %4593 = vmatpush2.msra.mxu0 %v4374
    %4594 = vmatprep.subr.mxu0 0.0
    %4595 = vmatpush2.msra.mxu0 %v4372
    %4596 = vmatprep.subr.mxu0 0.0
    %4597 = vmatpush2.msra.mxu0 %v4370
    %4598 = vmatprep.subr.mxu0 0.0
    %4599 = vmatpush2.msra.mxu0 %v4368
    %4600 = vmatprep.subr.mxu0 0.0
    %4601 = vmatpush2.msra.mxu0 %v4366
    %4602 = vmatprep.subr.mxu0 0.0
    %4603 = vmatpush2.msra.mxu0 %v4364
    %4604 = vmatprep.subr.mxu0 0.0
    %4605 = vmatpush2.msra.mxu0 %v4362
    %4606 = vmatprep.subr.mxu0 0.0
    %4607 = vmatpush2.msra.mxu0 %v4360
    %4608 = vmatprep.subr.mxu0 0.0
    %4609 = vmatpush2.msra.mxu0 %v4358
    %4610 = vmatprep.subr.mxu0 0.0
    %4611 = vmatpush2.msra.mxu0 %v4356
    %4612 = vmatprep.subr.mxu0 0.0
    %4613 = vmatpush2.msra.mxu0 %v4354
    %4614 = vmatprep.subr.mxu0 0.0
    %4615 = vmatpush2.msra.mxu0 %v4352
    %4616 = vmatprep.mubr.f32.mxu0 %v4130
    %4617 = vmatmul.mubr.f32.gmra.mxu0 %v4129
    %v4618 = vpop.f32.mrf.mxu0
    %v4619 = vadd.f32 %v4514, %v4618
    %v4620 = vpop.f32.mrf.mxu0
    %4621 = vmatprep.mubr.f32.mxu0 %v4134
    %4622 = vmatmul.mubr.f32.gmra.mxu0 %v4133
    %v4623 = vpop.f32.mrf.mxu0
    %v4624 = vadd.f32 %v4519, %v4623
    %v4625 = vpop.f32.mrf.mxu0
    %4626 = vmatprep.mubr.f32.mxu0 %v4138
    %4627 = vmatmul.mubr.f32.gmra.mxu0 %v4137
    %v4628 = vpop.f32.mrf.mxu0
    %v4629 = vadd.f32 %v4524, %v4628
    %v4630 = vpop.f32.mrf.mxu0
    %4631 = vmatprep.mubr.f32.mxu0 %v4142
    %4632 = vmatmul.mubr.f32.gmra.mxu0 %v4141
    %v4633 = vpop.f32.mrf.mxu0
    %v4634 = vadd.f32 %v4529, %v4633
    %v4635 = vpop.f32.mrf.mxu0
    %4636 = vmatprep.mubr.f32.mxu0 %v4146
    %4637 = vmatmul.mubr.f32.gmra.mxu0 %v4145
    %v4638 = vpop.f32.mrf.mxu0
    %v4639 = vadd.f32 %v4534, %v4638
    %v4640 = vpop.f32.mrf.mxu0
    %4641 = vmatprep.mubr.f32.mxu0 %v4150
    %4642 = vmatmul.mubr.f32.gmra.mxu0 %v4149
    %v4643 = vpop.f32.mrf.mxu0
    %v4644 = vadd.f32 %v4539, %v4643
    %v4645 = vpop.f32.mrf.mxu0
    %4646 = vmatprep.mubr.f32.mxu0 %v4154
    %4647 = vmatmul.mubr.f32.gmra.mxu0 %v4153
    %v4648 = vpop.f32.mrf.mxu0
    %v4649 = vadd.f32 %v4544, %v4648
    %v4650 = vpop.f32.mrf.mxu0
    %4651 = vmatprep.mubr.f32.mxu0 %v4158
    %4652 = vmatmul.mubr.f32.gmra.mxu0 %v4157
    %v4653 = vpop.f32.mrf.mxu0
    %v4654 = vadd.f32 %v4549, %v4653
    %v4655 = vpop.f32.mrf.mxu0
    %4656 = vdwg.mxu0
    %v4657 = vld [vmem:[%s9] sm:$0xff]
    %v4658 = vld [vmem:[%s9 + $0x8] sm:$0xff]
    %v4659 = vld [vmem:[%s9 + $0x10] sm:$0xff]
    %v4660 = vld [vmem:[%s9 + $0x18] sm:$0xff]
    %v4661 = vld [vmem:[%s10] sm:$0x1]
    %v4663 = vlaneseq
    %v4664 = vshrl.u32 %v4663, 7
    %v4665 = vsub.s32 0, %v4664
    %v4666 = vrot.slane %v4661, %v4665
    %v4669 = vsel %vm1006, %v2731, 0
    %v4672 = vsel %vm1006, %v2736, 0
    %v4675 = vsel %vm1006, %v2741, 0
    %v4678 = vsel %vm1006, %v2746, 0
    %v4681 = vsel %vm1006, %v2751, 0
    %v4684 = vsel %vm1006, %v2756, 0
    %v4687 = vsel %vm1006, %v2761, 0
    %v4690 = vsel %vm1006, %v2766, 0
    %v4693 = vsel %vm1006, %v4619, 0
    %v4696 = vsel %vm1006, %v4624, 0
    %v4699 = vsel %vm1006, %v4629, 0
    %v4702 = vsel %vm1006, %v4634, 0
    %v4705 = vsel %vm1006, %v4639, 0
    %v4708 = vsel %vm1006, %v4644, 0
    %v4711 = vsel %vm1006, %v4649, 0
    %v4714 = vsel %vm1006, %v4654, 0
    %4716 = vmatprep.subr.mxu0 0.0
    %4717 = vmatpush1.msra.mxu0 0.0
    %4718 = vmatprep.subr.mxu0 0.0
    %4719 = vmatpush1.msra.mxu0 0.0
    %4720 = vmatprep.subr.mxu0 0.0
    %4721 = vmatpush1.msra.mxu0 0.0
    %4722 = vmatprep.subr.mxu0 0.0
    %4723 = vmatpush1.msra.mxu0 0.0
    %4724 = vmatprep.subr.mxu0 0.0
    %4725 = vmatpush1.msra.mxu0 0.0
    %4726 = vmatprep.subr.mxu0 0.0
    %4727 = vmatpush1.msra.mxu0 0.0
    %4728 = vmatprep.subr.mxu0 0.0
    %4729 = vmatpush1.msra.mxu0 0.0
    %4730 = vmatprep.subr.mxu0 0.0
    %4731 = vmatpush1.msra.mxu0 0.0
    %4732 = vmatprep.subr.mxu0 0.0
    %4733 = vmatpush1.msra.mxu0 0.0
    %4734 = vmatprep.subr.mxu0 0.0
    %4735 = vmatpush1.msra.mxu0 0.0
    %4736 = vmatprep.subr.mxu0 0.0
    %4737 = vmatpush1.msra.mxu0 0.0
    %4738 = vmatprep.subr.mxu0 0.0
    %4739 = vmatpush1.msra.mxu0 0.0
    %4740 = vmatprep.subr.mxu0 0.0
    %4741 = vmatpush1.msra.mxu0 %v4660
    %4742 = vmatprep.subr.mxu0 0.0
    %4743 = vmatpush1.msra.mxu0 %v4659
    %4744 = vmatprep.subr.mxu0 0.0
    %4745 = vmatpush1.msra.mxu0 %v4658
    %4746 = vmatprep.subr.mxu0 0.0
    %4747 = vmatpush1.msra.mxu0 %v4657
    %4748 = vmatprep.subr.mxu0 0.0
    %4749 = vmatpush2.msra.mxu0 0.0
    %4750 = vmatprep.subr.mxu0 0.0
    %4751 = vmatpush2.msra.mxu0 0.0
    %4752 = vmatprep.subr.mxu0 0.0
    %4753 = vmatpush2.msra.mxu0 0.0
    %4754 = vmatprep.subr.mxu0 0.0
    %4755 = vmatpush2.msra.mxu0 0.0
    %4756 = vmatprep.subr.mxu0 0.0
    %4757 = vmatpush2.msra.mxu0 0.0
    %4758 = vmatprep.subr.mxu0 0.0
    %4759 = vmatpush2.msra.mxu0 0.0
    %4760 = vmatprep.subr.mxu0 0.0
    %4761 = vmatpush2.msra.mxu0 0.0
    %4762 = vmatprep.subr.mxu0 0.0
    %4763 = vmatpush2.msra.mxu0 0.0
    %4764 = vmatprep.subr.mxu0 0.0
    %4765 = vmatpush2.msra.mxu0 0.0
    %4766 = vmatprep.subr.mxu0 0.0
    %4767 = vmatpush2.msra.mxu0 0.0
    %4768 = vmatprep.subr.mxu0 0.0
    %4769 = vmatpush2.msra.mxu0 0.0
    %4770 = vmatprep.subr.mxu0 0.0
    %4771 = vmatpush2.msra.mxu0 0.0
    %4772 = vmatprep.subr.mxu0 0.0
    %4773 = vmatpush2.msra.mxu0 0.0
    %4774 = vmatprep.subr.mxu0 0.0
    %4775 = vmatpush2.msra.mxu0 0.0
    %4776 = vmatprep.subr.mxu0 0.0
    %4777 = vmatpush2.msra.mxu0 0.0
    %4778 = vmatprep.subr.mxu0 0.0
    %4779 = vmatpush2.msra.mxu0 0.0
    %4780 = vmatprep.mubr.f32.mxu0 0.0
    %4781 = vmatmul.mubr.f32.gmra.mxu0 %v4669
    %v4782 = vpop.f32.mrf.mxu0
    %v4783 = vadd.f32 %v4666, %v4782
    %v4784 = vpop.f32.mrf.mxu0
    %4785 = vmatprep.mubr.f32.mxu0 0.0
    %4786 = vmatmul.mubr.f32.gmra.mxu0 %v4672
    %v4787 = vpop.f32.mrf.mxu0
    %v4788 = vadd.f32 %v4666, %v4787
    %v4789 = vpop.f32.mrf.mxu0
    %4790 = vmatprep.mubr.f32.mxu0 0.0
    %4791 = vmatmul.mubr.f32.gmra.mxu0 %v4675
    %v4792 = vpop.f32.mrf.mxu0
    %v4793 = vadd.f32 %v4666, %v4792
    %v4794 = vpop.f32.mrf.mxu0
    %4795 = vmatprep.mubr.f32.mxu0 0.0
    %4796 = vmatmul.mubr.f32.gmra.mxu0 %v4678
    %v4797 = vpop.f32.mrf.mxu0
    %v4798 = vadd.f32 %v4666, %v4797
    %v4799 = vpop.f32.mrf.mxu0
    %4800 = vmatprep.mubr.f32.mxu0 0.0
    %4801 = vmatmul.mubr.f32.gmra.mxu0 %v4681
    %v4802 = vpop.f32.mrf.mxu0
    %v4803 = vadd.f32 %v4666, %v4802
    %v4804 = vpop.f32.mrf.mxu0
    %4805 = vmatprep.mubr.f32.mxu0 0.0
    %4806 = vmatmul.mubr.f32.gmra.mxu0 %v4684
    %v4807 = vpop.f32.mrf.mxu0
    %v4808 = vadd.f32 %v4666, %v4807
    %v4809 = vpop.f32.mrf.mxu0
    %4810 = vmatprep.mubr.f32.mxu0 0.0
    %4811 = vmatmul.mubr.f32.gmra.mxu0 %v4687
    %v4812 = vpop.f32.mrf.mxu0
    %v4813 = vadd.f32 %v4666, %v4812
    %v4814 = vpop.f32.mrf.mxu0
    %4815 = vmatprep.mubr.f32.mxu0 0.0
    %4816 = vmatmul.mubr.f32.gmra.mxu0 %v4690
    %v4817 = vpop.f32.mrf.mxu0
    %v4818 = vadd.f32 %v4666, %v4817
    %v4819 = vpop.f32.mrf.mxu0
    %4820 = vmatprep.mubr.f32.mxu0 0.0
    %4821 = vmatmul.mubr.f32.gmra.mxu0 %v4693
    %v4822 = vpop.f32.mrf.mxu0
    %v4823 = vadd.f32 %v4666, %v4822
    %v4824 = vpop.f32.mrf.mxu0
    %4825 = vmatprep.mubr.f32.mxu0 0.0
    %4826 = vmatmul.mubr.f32.gmra.mxu0 %v4696
    %v4827 = vpop.f32.mrf.mxu0
    %v4828 = vadd.f32 %v4666, %v4827
    %v4829 = vpop.f32.mrf.mxu0
    %4830 = vmatprep.mubr.f32.mxu0 0.0
    %4831 = vmatmul.mubr.f32.gmra.mxu0 %v4699
    %v4832 = vpop.f32.mrf.mxu0
    %v4833 = vadd.f32 %v4666, %v4832
    %v4834 = vpop.f32.mrf.mxu0
    %4835 = vmatprep.mubr.f32.mxu0 0.0
    %4836 = vmatmul.mubr.f32.gmra.mxu0 %v4702
    %v4837 = vpop.f32.mrf.mxu0
    %v4838 = vadd.f32 %v4666, %v4837
    %v4839 = vpop.f32.mrf.mxu0
    %4840 = vmatprep.mubr.f32.mxu0 0.0
    %4841 = vmatmul.mubr.f32.gmra.mxu0 %v4705
    %v4842 = vpop.f32.mrf.mxu0
    %v4843 = vadd.f32 %v4666, %v4842
    %v4844 = vpop.f32.mrf.mxu0
    %4845 = vmatprep.mubr.f32.mxu0 0.0
    %4846 = vmatmul.mubr.f32.gmra.mxu0 %v4708
    %v4847 = vpop.f32.mrf.mxu0
    %v4848 = vadd.f32 %v4666, %v4847
    %v4849 = vpop.f32.mrf.mxu0
    %4850 = vmatprep.mubr.f32.mxu0 0.0
    %4851 = vmatmul.mubr.f32.gmra.mxu0 %v4711
    %v4852 = vpop.f32.mrf.mxu0
    %v4853 = vadd.f32 %v4666, %v4852
    %v4854 = vpop.f32.mrf.mxu0
    %4855 = vmatprep.mubr.f32.mxu0 0.0
    %4856 = vmatmul.mubr.f32.gmra.mxu0 %v4714
    %v4857 = vpop.f32.mrf.mxu0
    %v4858 = vadd.f32 %v4666, %v4857
    %v4859 = vpop.f32.mrf.mxu0
    %4860 = vdwg.mxu0
    %4861 = vst.msk [vmem:[%s11] sm:$0xff] %vm88, %v4783
    %4862 = vst.msk [vmem:[%s11 + $0x8] sm:$0xff] %vm88, %v4788
    %4863 = vst.msk [vmem:[%s11 + $0x10] sm:$0xff] %vm88, %v4793
    %4864 = vst.msk [vmem:[%s11 + $0x18] sm:$0xff] %vm88, %v4798
    %4865 = vst.msk [vmem:[%s11 + $0x20] sm:$0xff] %vm88, %v4803
    %4866 = vst.msk [vmem:[%s11 + $0x28] sm:$0xff] %vm88, %v4808
    %4867 = vst.msk [vmem:[%s11 + $0x30] sm:$0xff] %vm88, %v4813
    %4868 = vst.msk [vmem:[%s11 + $0x38] sm:$0xff] %vm88, %v4818
    %4869 = vst.msk [vmem:[%s11 + $0x40] sm:$0xff] %vm88, %v4823
    %4870 = vst.msk [vmem:[%s11 + $0x48] sm:$0xff] %vm88, %v4828
    %4871 = vst.msk [vmem:[%s11 + $0x50] sm:$0xff] %vm88, %v4833
    %4872 = vst.msk [vmem:[%s11 + $0x58] sm:$0xff] %vm88, %v4838
    %4873 = vst.msk [vmem:[%s11 + $0x60] sm:$0xff] %vm88, %v4843
    %4874 = vst.msk [vmem:[%s11 + $0x68] sm:$0xff] %vm88, %v4848
    %4875 = vst.msk [vmem:[%s11 + $0x70] sm:$0xff] %vm88, %v4853
    %4876 = vst.msk [vmem:[%s11 + $0x78] sm:$0xff] %vm88, %v4858
    // Predicated region
    $region46: #{tpu_custom_call.1} parent=1 // pred_check
      _
    $region47: #{tpu_custom_call.1} parent=1 // pred_check_branch
      %4878 = sbr.rel (0) target = $region49
    $region48: #{tpu_custom_call.1} parent=1 // pred_region
      _
    $region49: #{tpu_custom_call.1} parent=1 // pred_fallthru
      _
    // Predicated region
    $region50: #{tpu_custom_call.1} parent=1 // pred_check
      _
    $region51: #{tpu_custom_call.1} parent=1 // pred_check_branch
      %4880 = sbr.rel (0) target = $region53
    $region52: #{tpu_custom_call.1} parent=1 // pred_region
      %s4882 = ssub.s32 8192, 8192
      %4883 = vsyncadd [#allocation3], %s4882
      %s4884 = sshll.u32 [#allocation2], 4
      %s4885 = int_to_ptr.vmem [resolvable:$true] %s4884
      %4890 = dma.vmem_to_hbm [thread:$0]  %s4885, 8192, %s12, [#allocation3], 512, 512, 32
    $region53: #{tpu_custom_call.1} parent=1 // pred_fallthru
      _
    // Predicated region
    $region54: #{tpu_custom_call.1} parent=1 // pred_check
      _
    $region55: #{tpu_custom_call.1} parent=1 // pred_check_branch
      %4892 = sbr.rel (0) target = $region57
    $region56: #{tpu_custom_call.1} parent=1 // pred_region
      _
    $region57: #{tpu_custom_call.1} parent=1 // pred_fallthru
      _
    // Predicated region
    $region58: #{tpu_custom_call.1} parent=1 // pred_check
      _
    $region59: #{tpu_custom_call.1} parent=1 // pred_check_branch
      %4894 = sbr.rel (0) target = $region61
    $region60: #{tpu_custom_call.1} parent=1 // pred_region
      %4895 = dma.done [#allocation3], 8192
    $region61: #{tpu_custom_call.1} parent=1 // pred_fallthru
      _
    %4896 = vsyncpa [#allocation3], 1

</llo_original>
